<compile_context>
chip_gen: v5e
topology: v5e:2x2
jax: 0.10.0
libtpu: 0.0.40
codegen_flags: <defaults>
</compile_context>

<pallas_src>
import functools

import jax
import jax.numpy as jnp
from jax import lax
from jax.experimental import pallas as pl
from jax.experimental.pallas import tpu as pltpu

EPS = 1e-5  # PyTorch LayerNorm default eps


def _layernorm(x, g, b):
    mu = jnp.mean(x, axis=-1, keepdims=True)
    var = jnp.mean((x - mu) ** 2, axis=-1, keepdims=True)
    return (x - mu) * lax.rsqrt(var + EPS) * g + b


def _const_spec(shape):
    nd = len(shape)
    return pl.BlockSpec(shape, lambda *idx, _nd=nd: (0,) * _nd)


def _choose_tile(n, target, align):
    """Largest divisor of n that is <= target and a multiple of align; fallback n."""
    best = None
    for c in range(align, min(n, target) + 1, align):
        if n % c == 0:
            best = c
    return best if best is not None else n


def _pick_fold_tile(n_fold, rows_per_fold, d, target_bytes=1 << 21, min_steps=8):
    """Fold groups per block: divides n_fold, keeps blocks 8-row aligned,
    ~<=target_bytes of f32 activations and >=min_steps grid steps when possible."""
    cands = [t for t in range(1, n_fold + 1)
             if n_fold % t == 0 and ((t * rows_per_fold) % 8 == 0 or t == n_fold)]
    fits = [t for t in cands if t * rows_per_fold * d * 4 <= target_bytes]
    deep = [t for t in fits if n_fold // t >= min_steps]
    if deep:
        return max(deep)
    if fits:
        return max(fits)
    return min(cands)


# ----------------------------- Pallas kernels --------------------------------

def _row_attn_kernel(seq, x_ref, g1_ref, b1_ref, wv_ref, wg_ref, bg_ref,
                     wo_ref, bo_ref, g2_ref, b2_ref, o_ref):
    """Tied (row) attention on a (tf*seq, D) block of fold-major rows.

    Tied softmax is uniform, so the attention output is mean_j v_j per fold
    group; computed with 2-D sublane reductions/broadcasts (no indicator-matrix
    matmuls) and a tiny f32 V matmul on the group means.
    """
    m, _ = x_ref.shape
    tf = m // seq

    x = x_ref[...].astype(jnp.float32)
    xn = _layernorm(x, g1_ref[...], b1_ref[...])          # AxialAttention.norm

    means = [jnp.mean(xn[g * seq:(g + 1) * seq, :], axis=0, keepdims=True)
             for g in range(tf)]
    xmean = jnp.concatenate(means, axis=0) if tf > 1 else means[0]      # (tf, D)
    vmean = jnp.dot(xmean, wv_ref[...],
                    preferred_element_type=jnp.float32)                 # (tf, inner)
    inner = vmean.shape[1]
    vparts = [jnp.broadcast_to(vmean[g:g + 1, :], (seq, inner)) for g in range(tf)]
    v_bc = jnp.concatenate(vparts, axis=0) if tf > 1 else vparts[0]     # (m, inner)

    gates = jnp.dot(xn.astype(jnp.bfloat16), wg_ref[...],
                    preferred_element_type=jnp.float32) + bg_ref[...]
    out = v_bc * jax.nn.sigmoid(gates)
    out = jnp.dot(out.astype(jnp.bfloat16), wo_ref[...],
                  preferred_element_type=jnp.float32) + bo_ref[...]
    out = xn + out                                        # residual on pre-normed x
    o_ref[...] = _layernorm(out, g2_ref[...], b2_ref[...]).astype(o_ref.dtype)


def _col_attn_kernel(rp, r_real, heads, dim_head,
                     x_ref, res_ref, g1_ref, b1_ref, wqkvg_ref, bg_ref,
                     wo_ref, bo_ref, g2_ref, b2_ref, ng_ref, nb_ref, o_ref):
    """Column attention on a (tb*rp, D) block of fold-major rows (rp rows per
    fold group).  Attention is batched over fold groups with a leading-batch
    einsum (no block-diagonal mask), and the CoreModel residual-add + LayerNorm
    epilogue is fused in.

    TODO(synk): heads are still sliced at 64-lane offsets (heads=2, dim_head=64);
    a head-batched dot_general / 128-padded head layout would remove the relayouts.
    """
    m, _ = x_ref.shape
    tb = m // rp
    inner = heads * dim_head

    x = x_ref[...].astype(jnp.float32)
    xn = _layernorm(x, g1_ref[...], b1_ref[...])          # AxialAttention.norm

    # Fused Q/K/V/gating projection (softmax scale folded into W_q).
    proj = jnp.dot(xn.astype(jnp.bfloat16), wqkvg_ref[...],
                   preferred_element_type=jnp.float32)    # (m, 4*inner)
    gate = proj[:, 3 * inner:4 * inner]

    outs = []
    for h in range(heads):
        lo = h * dim_head
        q3 = proj[:, lo:lo + dim_head].reshape(tb, rp, dim_head)
        k3 = proj[:, inner + lo:inner + lo + dim_head].reshape(tb, rp, dim_head)
        v3 = proj[:, 2 * inner + lo:2 * inner + lo + dim_head].reshape(tb, rp, dim_head)
        dots = jnp.einsum('bqd,bkd->bqk',
                          q3.astype(jnp.bfloat16), k3.astype(jnp.bfloat16),
                          preferred_element_type=jnp.float32)           # (tb, rp, rp)
        if rp != r_real:  # mask padded rows (only when rows % 8 != 0)
            jidx = lax.broadcasted_iota(jnp.int32, (tb, rp, rp), 2)
            dots = jnp.where(jidx < r_real, dots, jnp.float32(-1e30))
        dots = dots - jnp.max(dots, axis=-1, keepdims=True)
        e = jnp.exp(dots)
        attn = e * pl.reciprocal(jnp.sum(e, axis=-1, keepdims=True), approx=True)
        oh = jnp.einsum('bqk,bkd->bqd',
                        attn.astype(jnp.bfloat16), v3.astype(jnp.bfloat16),
                        preferred_element_type=jnp.float32)             # (tb, rp, dh)
        outs.append(oh.reshape(m, dim_head))
    out = jnp.concatenate(outs, axis=-1) if heads > 1 else outs[0]      # (m, inner)

    out = out * jax.nn.sigmoid(gate + bg_ref[...])
    out = jnp.dot(out.astype(jnp.bfloat16), wo_ref[...],
                  preferred_element_type=jnp.float32) + bo_ref[...]
    out = xn + out                                        # residual on pre-normed x
    out = _layernorm(out, g2_ref[...], b2_ref[...])       # Attention.norm

    y = out + res_ref[...].astype(jnp.float32)            # CoreModel residual
    o_ref[...] = _layernorm(y, ng_ref[...], nb_ref[...]).astype(o_ref.dtype)


def _fc_pos_res_kernel(x_ref, pos_ref, w_ref, b_ref, o_ref):
    """y = x + pos; out = fc(y) + y  (positional add fused with the fc matmul)."""
    y = x_ref[0].astype(jnp.float32) + pos_ref[...]
    out = jnp.dot(y.astype(jnp.bfloat16), w_ref[...],
                  preferred_element_type=jnp.float32) + b_ref[...] + y
    o_ref[0] = out.astype(o_ref.dtype)


def _gat_pre_kernel(x_ref, w_ref, asrc_ref, adst_ref, h_ref, as_ref, ad_ref):
    """Per-node GAT projection h = x W plus the att_src / att_dst scalars."""
    x = x_ref[...].astype(jnp.float32)
    h = jnp.dot(x.astype(jnp.bfloat16), w_ref[...],
                preferred_element_type=jnp.float32)
    h_ref[...] = h.astype(h_ref.dtype)
    as_ref[...] = jnp.sum(h * asrc_ref[...], axis=-1, keepdims=True)
    ad_ref[...] = jnp.sum(h * adst_ref[...], axis=-1, keepdims=True)


def _gat_attn_kernel(adst_ref, asrc_ref, adj_ref, h_ref, xin_ref,
                     bias_ref, g_ref, b_ref, o_ref, m_sc, l_sc, acc_sc):
    """Dense GATConv attention, row-tiled queries with an online softmax over
    int8 adjacency column blocks; residual + LayerNorm fused in the epilogue."""
    j = pl.program_id(1)

    @pl.when(j == 0)
    def _():
        m_sc[...] = jnp.full(m_sc.shape, -1e30, jnp.float32)
        l_sc[...] = jnp.zeros(l_sc.shape, jnp.float32)
        acc_sc[...] = jnp.zeros(acc_sc.shape, jnp.float32)

    e = adst_ref[...] + asrc_ref[...]                     # (TI,1)+(1,TJ) -> (TI,TJ)
    e = jnp.where(e > 0, e, 0.2 * e)                      # leaky_relu(0.2)
    mask = adj_ref[...] != 0
    e = jnp.where(mask, e, jnp.float32(-1e30))

    m_new = jnp.maximum(m_sc[...], jnp.max(e, axis=-1, keepdims=True))
    corr = jnp.exp(m_sc[...] - m_new)
    p = jnp.exp(e - m_new) * mask.astype(jnp.float32)     # masked entries exactly 0
    l_sc[...] = corr * l_sc[...] + jnp.sum(p, axis=-1, keepdims=True)
    acc_sc[...] = corr * acc_sc[...] + jnp.dot(
        p.astype(jnp.bfloat16), h_ref[...], preferred_element_type=jnp.float32)
    m_sc[...] = m_new

    @pl.when(j == pl.num_programs(1) - 1)
    def _():
        out = acc_sc[...] * pl.reciprocal(l_sc[...], approx=True) + bias_ref[...]
        y = out + xin_ref[...].astype(jnp.float32)        # gnn_out + embedding_flat
        o_ref[...] = _layernorm(y, g_ref[...], b_ref[...]).astype(o_ref.dtype)


# ------------------------------ pallas_call wrappers --------------------------

def row_attention(x4, p, *, seq):
    b, r, s, d = x4.shape
    nf = b * r
    x2 = x4.reshape(nf * s, d)                             # free view, no transpose
    tf = _pick_fold_tile(nf, s, d)
    m_blk = tf * s
    inner = p["wg"].shape[1]
    out = pl.pallas_call(
        functools.partial(_row_attn_kernel, s),
        out_shape=jax.ShapeDtypeStruct((nf * s, d), jnp.bfloat16),
        grid=(nf // tf,),
        in_specs=[pl.BlockSpec((m_blk, d), lambda i: (i, 0)),
                  _const_spec((1, d)), _const_spec((1, d)),
                  _const_spec((d, inner)), _const_spec((d, inner)),
                  _const_spec((1, inner)),
                  _const_spec((inner, d)), _const_spec((1, d)),
                  _const_spec((1, d)), _const_spec((1, d))],
        out_specs=pl.BlockSpec((m_blk, d), lambda i: (i, 0)),
        compiler_params=pltpu.CompilerParams(dimension_semantics=("parallel",)),
    )(x2, p["g1"], p["b1"], p["wv"], p["wg"], p["bg"],
      p["wo"], p["bo"], p["g2"], p["b2"])
    return out.reshape(b, r, s, d)


def col_attention_residual_ln(x4, res4, p, ng, nb, *, heads, dim_head):
    b, r, s, d = x4.shape
    inner = heads * dim_head
    rp = r if r % 8 == 0 else ((r + 7) // 8) * 8
    # TODO(synk): the column-major gather still goes through an XLA transpose
    # (bf16); writing a single row of the second-minor dim per grid step is not
    # expressible with legal (8,128)-aligned BlockSpecs.
    xt = jnp.transpose(x4, (0, 2, 1, 3))                   # (B, S, R, D)
    rt = jnp.transpose(res4, (0, 2, 1, 3))
    if rp != r:
        pad = ((0, 0), (0, 0), (0, rp - r), (0, 0))
        xt = jnp.pad(xt, pad)
        rt = jnp.pad(rt, pad)
    nf = b * s
    x2 = xt.reshape(nf * rp, d)
    r2 = rt.reshape(nf * rp, d)
    tb = _pick_fold_tile(nf, rp, d)
    m_blk = tb * rp
    out = pl.pallas_call(
        functools.partial(_col_attn_kernel, rp, r, heads, dim_head),
        out_shape=jax.ShapeDtypeStruct((nf * rp, d), jnp.bfloat16),
        grid=(nf // tb,),
        in_specs=[pl.BlockSpec((m_blk, d), lambda i: (i, 0)),
                  pl.BlockSpec((m_blk, d), lambda i: (i, 0)),
                  _const_spec((1, d)), _const_spec((1, d)),
                  _const_spec((d, 4 * inner)), _const_spec((1, inner)),
                  _const_spec((inner, d)), _const_spec((1, d)),
                  _const_spec((1, d)), _const_spec((1, d)),
                  _const_spec((1, d)), _const_spec((1, d))],
        out_specs=pl.BlockSpec((m_blk, d), lambda i: (i, 0)),
        compiler_params=pltpu.CompilerParams(dimension_semantics=("parallel",)),
    )(x2, r2, p["g1"], p["b1"], p["w_qkvg"], p["bg"],
      p["wo"], p["bo"], p["g2"], p["b2"], ng, nb)
    out4 = out.reshape(b, s, rp, d)[:, :, :r, :]
    return jnp.transpose(out4, (0, 2, 1, 3))


def fc_pos_residual(out0, pos, w, bfc):
    b, s, d = out0.shape
    ts = _choose_tile(s, 256, 8)
    out = pl.pallas_call(
        _fc_pos_res_kernel,
        out_shape=jax.ShapeDtypeStruct((b, s, d), jnp.bfloat16),
        grid=(b, s // ts),
        in_specs=[pl.BlockSpec((1, ts, d), lambda bi, si: (bi, si, 0)),
                  pl.BlockSpec((ts, d), lambda bi, si: (si, 0)),
                  _const_spec((d, d)), _const_spec((1, d))],
        out_specs=pl.BlockSpec((1, ts, d), lambda bi, si: (bi, si, 0)),
        compiler_params=pltpu.CompilerParams(
            dimension_semantics=("parallel", "parallel")),
    )(out0, pos, w, bfc)
    return out.reshape(b * s, d)


def gat_precompute(x, p):
    n, d = x.shape
    tm = _choose_tile(n, 512, 8)
    return pl.pallas_call(
        _gat_pre_kernel,
        out_shape=(jax.ShapeDtypeStruct((n, d), jnp.bfloat16),
                   jax.ShapeDtypeStruct((n, 1), jnp.float32),
                   jax.ShapeDtypeStruct((n, 1), jnp.float32)),
        grid=(n // tm,),
        in_specs=[pl.BlockSpec((tm, d), lambda i: (i, 0)),
                  _const_spec((d, d)), _const_spec((1, d)), _const_spec((1, d))],
        out_specs=(pl.BlockSpec((tm, d), lambda i: (i, 0)),
                   pl.BlockSpec((tm, 1), lambda i: (i, 0)),
                   pl.BlockSpec((tm, 1), lambda i: (i, 0))),
        compiler_params=pltpu.CompilerParams(dimension_semantics=("parallel",)),
    )(x, p["w"], p["att_src"], p["att_dst"])


def gat_layer(x, adj, p):
    n, d = x.shape
    h, a_src, a_dst = gat_precompute(x, p)
    a_src_row = a_src.reshape(1, n)                        # free metadata reshape
    ti = _choose_tile(n, 256, 32)                          # query-row tile
    tj = _choose_tile(n, 512, 128)                         # key/adjacency lane tile
    return pl.pallas_call(
        _gat_attn_kernel,
        out_shape=jax.ShapeDtypeStruct((n, d), jnp.bfloat16),
        grid=(n // ti, n // tj),
        in_specs=[pl.BlockSpec((ti, 1), lambda i, j: (i, 0)),
                  pl.BlockSpec((1, tj), lambda i, j: (0, j)),
                  pl.BlockSpec((ti, tj), lambda i, j: (i, j)),
                  pl.BlockSpec((tj, d), lambda i, j: (j, 0)),
                  pl.BlockSpec((ti, d), lambda i, j: (i, 0)),
                  _const_spec((1, d)), _const_spec((1, d)), _const_spec((1, d))],
        out_specs=pl.BlockSpec((ti, d), lambda i, j: (i, 0)),
        scratch_shapes=[pltpu.VMEM((ti, 1), jnp.float32),
                        pltpu.VMEM((ti, 1), jnp.float32),
                        pltpu.VMEM((ti, d), jnp.float32)],
        compiler_params=pltpu.CompilerParams(
            dimension_semantics=("parallel", "arbitrary")),
    )(a_dst, a_src_row, adj, h, x, p["bias"], p["ln_g"], p["ln_b"])


# ------------------------------ glue (plain JAX) ------------------------------

def build_adj(padded_edges, seq_len, n_nodes):
    """adj[target, source] = 1 for valid edges (+ self loops), stored as int8."""
    bsz = padded_edges.shape[0]
    src = padded_edges[:, 0, :]
    tgt = padded_edges[:, 1, :]
    valid = src != -1                                      # reference masks on src row
    offs = (jnp.arange(bsz, dtype=src.dtype) * seq_len)[:, None]
    srcg = jnp.where(valid, src + offs, 0).reshape(-1)
    tgtg = jnp.where(valid, tgt + offs, 0).reshape(-1)
    vals = valid.reshape(-1).astype(jnp.int32)
    adj = jnp.zeros((n_nodes, n_nodes), jnp.int32).at[tgtg, srcg].max(vals)
    adj = jnp.maximum(adj, jnp.eye(n_nodes, dtype=jnp.int32))
    return adj.astype(jnp.int8)


def init_params(key, vocab_size, seq_len, embed_dim, heads, dim_head,
                num_layers, num_gnn_layers):
    inner = heads * dim_head
    scale = dim_head ** -0.5
    keys = iter(jax.random.split(key, 1024))

    def nrm(shape, s=0.05, dtype=jnp.float32):
        return (jax.random.normal(next(keys), shape, jnp.float32) * s).astype(dtype)

    emb = jax.random.normal(next(keys), (vocab_size, embed_dim), jnp.float32)
    emb = emb.at[0].set(0.0)  # padding_idx=0

    def row_attn_params(dim):
        # Tied attention: q/k never influence the output -> never materialized.
        return dict(
            g1=jnp.ones((1, dim), jnp.float32), b1=jnp.zeros((1, dim), jnp.float32),
            wv=nrm((dim, inner)),                                   # f32 (group-mean path)
            wg=jnp.zeros((dim, inner), jnp.bfloat16),               # gating weight = 0
            bg=jnp.ones((1, inner), jnp.float32),                   # gating bias = 1
            wo=nrm((inner, dim), dtype=jnp.bfloat16),
            bo=jnp.zeros((1, dim), jnp.float32),
            g2=jnp.ones((1, dim), jnp.float32), b2=jnp.zeros((1, dim), jnp.float32))

    def col_attn_params(dim):
        wq = nrm((dim, inner)) * scale                              # fold scale into W_q
        wk = nrm((dim, inner))
        wv = nrm((dim, inner))
        wg = jnp.zeros((dim, inner), jnp.float32)                   # gating weight = 0
        return dict(
            g1=jnp.ones((1, dim), jnp.float32), b1=jnp.zeros((1, dim), jnp.float32),
            w_qkvg=jnp.concatenate([wq, wk, wv, wg], axis=1).astype(jnp.bfloat16),
            bg=jnp.ones((1, inner), jnp.float32),                   # gating bias = 1
            wo=nrm((inner, dim), dtype=jnp.bfloat16),
            bo=jnp.zeros((1, dim), jnp.float32),
            g2=jnp.ones((1, dim), jnp.float32), b2=jnp.zeros((1, dim), jnp.float32))

    layers = [dict(row=row_attn_params(embed_dim),
                   col=col_attn_params(embed_dim),
                   ng=jnp.ones((1, embed_dim), jnp.float32),
                   nb=jnp.zeros((1, embed_dim), jnp.float32))
              for _ in range(num_layers)]

    gnn = [dict(w=nrm((embed_dim, embed_dim), 0.2, jnp.bfloat16),
                att_src=nrm((1, embed_dim), 0.2),
                att_dst=nrm((1, embed_dim), 0.2),
                bias=jnp.zeros((1, embed_dim), jnp.float32),
                ln_g=jnp.ones((1, embed_dim), jnp.float32),
                ln_b=jnp.zeros((1, embed_dim), jnp.float32))
           for _ in range(num_gnn_layers)]

    return dict(embedding=emb, layers=layers,
                pos=nrm((seq_len, embed_dim), 0.1),
                fc_w=nrm((embed_dim, embed_dim), dtype=jnp.bfloat16),
                fc_b=jnp.zeros((1, embed_dim), jnp.float32),
                gnn=gnn)


@functools.partial(jax.jit, static_argnames=("heads", "dim_head"))
def cg_forward(params, sequences, padded_edges, *, heads, dim_head):
    bsz, rows, seq_len = sequences.shape
    d = params["embedding"].shape[1]

    # --- CoreModel --- (activations carried in bf16 between kernels)
    x = jnp.take(params["embedding"], sequences, axis=0).astype(jnp.bfloat16)
    for layer in params["layers"]:
        residual = x
        x = row_attention(x, layer["row"], seq=seq_len)               # tied row attn
        x = col_attention_residual_ln(x, residual, layer["col"],      # col attn + add+LN
                                      layer["ng"], layer["nb"],
                                      heads=heads, dim_head=dim_head)

    # --- CGModel head ---
    out0 = x[:, 0, :, :]                                              # (B, S, D) bf16
    emb_flat = fc_pos_residual(out0, params["pos"][:seq_len],
                               params["fc_w"], params["fc_b"])        # (B*S, D) bf16

    adj = build_adj(padded_edges, seq_len, bsz * seq_len)             # int8 (N, N)
    # TODO(synk): fuse the GAT layer chain so the adjacency / node features stay
    # VMEM-resident across layers instead of being re-DMAed per layer.
    for g in params["gnn"]:
        emb_flat = gat_layer(emb_flat, adj, g)

    return emb_flat.astype(jnp.float32).reshape(bsz, 1, seq_len, d)


# ------------------------------------ main ------------------------------------

if __name__ == "__main__":
    B, R, S = 2, 8, 16             # batch, MSA rows, sequence length
    VOCAB, D = 16, 32              # vocab size, embed_dim
    HEADS, DIM_HEAD = 2, 64        # Attention uses its default dim_head=64
    NUM_LAYERS, NUM_GNN = 2, 2
    MAX_E = 12

    key = jax.random.PRNGKey(0)
    kp, kseq, kedge = jax.random.split(key, 3)
    params = init_params(kp, VOCAB, S, D, HEADS, DIM_HEAD, NUM_LAYERS, NUM_GNN)

    sequences = jax.random.randint(kseq, (B, R, S), 1, VOCAB, dtype=jnp.int32)

    src = jax.random.randint(kedge, (B, MAX_E), 0, S, dtype=jnp.int32)
    tgt = jax.random.randint(jax.random.fold_in(kedge, 1), (B, MAX_E), 0, S,
                             dtype=jnp.int32)
    pad_mask = jnp.arange(MAX_E) < 8                     # 8 valid edges, rest -1 padded
    src = jnp.where(pad_mask[None, :], src, -1)
    tgt = jnp.where(pad_mask[None, :], tgt, -1)
    padded_edges = jnp.stack([src, tgt], axis=1)         # (B, 2, MAX_E)

    out = cg_forward(params, sequences, padded_edges, heads=HEADS, dim_head=DIM_HEAD)
    out = jax.block_until_ready(out)
    assert out.shape == (B, 1, S, D), out.shape
    assert bool(jnp.all(jnp.isfinite(out)))
    print("KERNEL_OK")
</pallas_src>

<mosaic_0001>
module attributes {stable_mosaic.version = 11 : i64} {
  func.func @_row_attn_kernel(%arg0: i32, %arg1: memref<32x32xbf16, #tpu.memory_space<vmem>>, %arg2: memref<1x32xf32, #tpu.memory_space<vmem>>, %arg3: memref<1x32xf32, #tpu.memory_space<vmem>>, %arg4: memref<32x128xf32, #tpu.memory_space<vmem>>, %arg5: memref<32x128xbf16, #tpu.memory_space<vmem>>, %arg6: memref<1x128xf32, #tpu.memory_space<vmem>>, %arg7: memref<128x32xbf16, #tpu.memory_space<vmem>>, %arg8: memref<1x32xf32, #tpu.memory_space<vmem>>, %arg9: memref<1x32xf32, #tpu.memory_space<vmem>>, %arg10: memref<1x32xf32, #tpu.memory_space<vmem>>, %arg11: memref<32x32xbf16, #tpu.memory_space<vmem>>) attributes {dimension_semantics = [#tpu.dimension_semantics<parallel>], iteration_bounds = array<i64: 8>, scalar_prefetch = 0 : i64, scratch_operands = 0 : i64, tpu.core_type = #tpu.core_type<tc>, window_params = [{transform_indices = @transform_0, window_bounds = array<i64: 32, 32>}, {pipeline_mode = #tpu.pipeline_mode<synchronous>, transform_indices = @transform_1, window_bounds = array<i64: 1, 32>}, {pipeline_mode = #tpu.pipeline_mode<synchronous>, transform_indices = @transform_2, window_bounds = array<i64: 1, 32>}, {pipeline_mode = #tpu.pipeline_mode<synchronous>, transform_indices = @transform_3, window_bounds = array<i64: 32, 128>}, {pipeline_mode = #tpu.pipeline_mode<synchronous>, transform_indices = @transform_4, window_bounds = array<i64: 32, 128>}, {pipeline_mode = #tpu.pipeline_mode<synchronous>, transform_indices = @transform_5, window_bounds = array<i64: 1, 128>}, {pipeline_mode = #tpu.pipeline_mode<synchronous>, transform_indices = @transform_6, window_bounds = array<i64: 128, 32>}, {pipeline_mode = #tpu.pipeline_mode<synchronous>, transform_indices = @transform_7, window_bounds = array<i64: 1, 32>}, {pipeline_mode = #tpu.pipeline_mode<synchronous>, transform_indices = @transform_8, window_bounds = array<i64: 1, 32>}, {pipeline_mode = #tpu.pipeline_mode<synchronous>, transform_indices = @transform_9, window_bounds = array<i64: 1, 32>}, {transform_indices = @transform_10, window_bounds = array<i64: 32, 32>}]} {
    %c0 = arith.constant 0 : index
    %c0_0 = arith.constant 0 : index
    %0 = vector.load %arg1[%c0, %c0_0] : memref<32x32xbf16, #tpu.memory_space<vmem>>, vector<32x32xbf16>
    %1 = arith.extf %0 : vector<32x32xbf16> to vector<32x32xf32>
    %c0_1 = arith.constant 0 : index
    %c0_2 = arith.constant 0 : index
    %2 = vector.load %arg2[%c0_1, %c0_2] : memref<1x32xf32, #tpu.memory_space<vmem>>, vector<1x32xf32>
    %c0_3 = arith.constant 0 : index
    %c0_4 = arith.constant 0 : index
    %3 = vector.load %arg3[%c0_3, %c0_4] : memref<1x32xf32, #tpu.memory_space<vmem>>, vector<1x32xf32>
    %cst = arith.constant dense<0.000000e+00> : vector<32xf32>
    %4 = vector.multi_reduction <add>, %1, %cst [1] : vector<32x32xf32> to vector<32xf32>
    %5 = vector.shape_cast %4 : vector<32xf32> to vector<32x1xf32>
    %cst_5 = arith.constant 3.200000e+01 : f32
    %6 = vector.broadcast %cst_5 : f32 to vector<32x1xf32>
    %7 = arith.divf %5, %6 : vector<32x1xf32>
    %8 = vector.broadcast %7 : vector<32x1xf32> to vector<32x32xf32>
    %9 = arith.subf %1, %8 : vector<32x32xf32>
    %10 = arith.mulf %9, %9 : vector<32x32xf32>
    %cst_6 = arith.constant dense<0.000000e+00> : vector<32xf32>
    %11 = vector.multi_reduction <add>, %10, %cst_6 [1] : vector<32x32xf32> to vector<32xf32>
    %12 = vector.shape_cast %11 : vector<32xf32> to vector<32x1xf32>
    %cst_7 = arith.constant 3.200000e+01 : f32
    %13 = vector.broadcast %cst_7 : f32 to vector<32x1xf32>
    %14 = arith.divf %12, %13 : vector<32x1xf32>
    %15 = vector.broadcast %7 : vector<32x1xf32> to vector<32x32xf32>
    %16 = arith.subf %1, %15 : vector<32x32xf32>
    %cst_8 = arith.constant 9.99999974E-6 : f32
    %17 = vector.broadcast %cst_8 : f32 to vector<32x1xf32>
    %18 = arith.addf %14, %17 : vector<32x1xf32>
    %19 = math.rsqrt %18 : vector<32x1xf32>
    %20 = vector.broadcast %19 : vector<32x1xf32> to vector<32x32xf32>
    %21 = arith.mulf %16, %20 : vector<32x32xf32>
    %22 = vector.broadcast %2 : vector<1x32xf32> to vector<32x32xf32>
    %23 = arith.mulf %21, %22 : vector<32x32xf32>
    %24 = vector.broadcast %3 : vector<1x32xf32> to vector<32x32xf32>
    %25 = arith.addf %23, %24 : vector<32x32xf32>
    %26 = vector.extract_strided_slice %25 {offsets = [0, 0], sizes = [16, 32], strides = [1, 1]} : vector<32x32xf32> to vector<16x32xf32>
    %cst_9 = arith.constant dense<0.000000e+00> : vector<32xf32>
    %27 = vector.multi_reduction <add>, %26, %cst_9 [0] : vector<16x32xf32> to vector<32xf32>
    %28 = vector.shape_cast %27 : vector<32xf32> to vector<1x32xf32>
    %cst_10 = arith.constant 1.600000e+01 : f32
    %29 = vector.broadcast %cst_10 : f32 to vector<1x32xf32>
    %30 = arith.divf %28, %29 : vector<1x32xf32>
    %31 = vector.extract_strided_slice %25 {offsets = [16, 0], sizes = [16, 32], strides = [1, 1]} : vector<32x32xf32> to vector<16x32xf32>
    %cst_11 = arith.constant dense<0.000000e+00> : vector<32xf32>
    %32 = vector.multi_reduction <add>, %31, %cst_11 [0] : vector<16x32xf32> to vector<32xf32>
    %33 = vector.shape_cast %32 : vector<32xf32> to vector<1x32xf32>
    %cst_12 = arith.constant 1.600000e+01 : f32
    %34 = vector.broadcast %cst_12 : f32 to vector<1x32xf32>
    %35 = arith.divf %33, %34 : vector<1x32xf32>
    %36 = tpu.concatenate %30, %35 in 0 : vector<1x32xf32>, vector<1x32xf32> -> vector<2x32xf32>
    %c0_13 = arith.constant 0 : index
    %c0_14 = arith.constant 0 : index
    %37 = vector.load %arg4[%c0_13, %c0_14] : memref<32x128xf32, #tpu.memory_space<vmem>>, vector<32x128xf32>
    %cst_15 = arith.constant dense<0.000000e+00> : vector<2x128xf32>
    %38 = tpu.matmul %36, %37, %cst_15 {dimension_numbers = #tpu.dot_dimension_numbers<[1], [0], [0], [1], [0, 0, 1, 1], [], []>} : vector<2x32xf32>, vector<32x128xf32>, vector<2x128xf32> -> vector<2x128xf32>
    %39 = vector.extract_strided_slice %38 {offsets = [0, 0], sizes = [1, 128], strides = [1, 1]} : vector<2x128xf32> to vector<1x128xf32>
    %40 = vector.shape_cast %39 : vector<1x128xf32> to vector<1x128xf32>
    %41 = vector.broadcast %40 : vector<1x128xf32> to vector<16x128xf32>
    %42 = vector.extract_strided_slice %38 {offsets = [1, 0], sizes = [1, 128], strides = [1, 1]} : vector<2x128xf32> to vector<1x128xf32>
    %43 = vector.shape_cast %42 : vector<1x128xf32> to vector<1x128xf32>
    %44 = vector.broadcast %43 : vector<1x128xf32> to vector<16x128xf32>
    %45 = tpu.concatenate %41, %44 in 0 : vector<16x128xf32>, vector<16x128xf32> -> vector<32x128xf32>
    %46 = arith.truncf %25 : vector<32x32xf32> to vector<32x32xbf16>
    %c0_16 = arith.constant 0 : index
    %c0_17 = arith.constant 0 : index
    %47 = vector.load %arg5[%c0_16, %c0_17] : memref<32x128xbf16, #tpu.memory_space<vmem>>, vector<32x128xbf16>
    %cst_18 = arith.constant dense<0.000000e+00> : vector<32x128xf32>
    %48 = tpu.matmul %46, %47, %cst_18 {dimension_numbers = #tpu.dot_dimension_numbers<[1], [0], [0], [1], [0, 0, 1, 1], [], []>} : vector<32x32xbf16>, vector<32x128xbf16>, vector<32x128xf32> -> vector<32x128xf32>
    %c0_19 = arith.constant 0 : index
    %c0_20 = arith.constant 0 : index
    %49 = vector.load %arg6[%c0_19, %c0_20] : memref<1x128xf32, #tpu.memory_space<vmem>>, vector<1x128xf32>
    %50 = vector.broadcast %49 : vector<1x128xf32> to vector<32x128xf32>
    %51 = arith.addf %48, %50 : vector<32x128xf32>
    %52 = arith.negf %51 : vector<32x128xf32>
    %53 = math.exp %52 : vector<32x128xf32>
    %cst_21 = arith.constant 1.000000e+00 : f32
    %54 = vector.broadcast %cst_21 : f32 to vector<32x128xf32>
    %55 = arith.addf %54, %53 : vector<32x128xf32>
    %56 = arith.divf %54, %55 : vector<32x128xf32>
    %57 = arith.mulf %45, %56 : vector<32x128xf32>
    %58 = arith.truncf %57 : vector<32x128xf32> to vector<32x128xbf16>
    %c0_22 = arith.constant 0 : index
    %c0_23 = arith.constant 0 : index
    %59 = vector.load %arg7[%c0_22, %c0_23] : memref<128x32xbf16, #tpu.memory_space<vmem>>, vector<128x32xbf16>
    %cst_24 = arith.constant dense<0.000000e+00> : vector<32x32xf32>
    %60 = tpu.matmul %58, %59, %cst_24 {dimension_numbers = #tpu.dot_dimension_numbers<[1], [0], [0], [1], [0, 0, 1, 1], [], []>} : vector<32x128xbf16>, vector<128x32xbf16>, vector<32x32xf32> -> vector<32x32xf32>
    %c0_25 = arith.constant 0 : index
    %c0_26 = arith.constant 0 : index
    %61 = vector.load %arg8[%c0_25, %c0_26] : memref<1x32xf32, #tpu.memory_space<vmem>>, vector<1x32xf32>
    %62 = vector.broadcast %61 : vector<1x32xf32> to vector<32x32xf32>
    %63 = arith.addf %60, %62 : vector<32x32xf32>
    %64 = arith.addf %25, %63 : vector<32x32xf32>
    %c0_27 = arith.constant 0 : index
    %c0_28 = arith.constant 0 : index
    %65 = vector.load %arg9[%c0_27, %c0_28] : memref<1x32xf32, #tpu.memory_space<vmem>>, vector<1x32xf32>
    %c0_29 = arith.constant 0 : index
    %c0_30 = arith.constant 0 : index
    %66 = vector.load %arg10[%c0_29, %c0_30] : memref<1x32xf32, #tpu.memory_space<vmem>>, vector<1x32xf32>
    %cst_31 = arith.constant dense<0.000000e+00> : vector<32xf32>
    %67 = vector.multi_reduction <add>, %64, %cst_31 [1] : vector<32x32xf32> to vector<32xf32>
    %68 = vector.shape_cast %67 : vector<32xf32> to vector<32x1xf32>
    %cst_32 = arith.constant 3.200000e+01 : f32
    %69 = vector.broadcast %cst_32 : f32 to vector<32x1xf32>
    %70 = arith.divf %68, %69 : vector<32x1xf32>
    %71 = vector.broadcast %70 : vector<32x1xf32> to vector<32x32xf32>
    %72 = arith.subf %64, %71 : vector<32x32xf32>
    %73 = arith.mulf %72, %72 : vector<32x32xf32>
    %cst_33 = arith.constant dense<0.000000e+00> : vector<32xf32>
    %74 = vector.multi_reduction <add>, %73, %cst_33 [1] : vector<32x32xf32> to vector<32xf32>
    %75 = vector.shape_cast %74 : vector<32xf32> to vector<32x1xf32>
    %cst_34 = arith.constant 3.200000e+01 : f32
    %76 = vector.broadcast %cst_34 : f32 to vector<32x1xf32>
    %77 = arith.divf %75, %76 : vector<32x1xf32>
    %78 = vector.broadcast %70 : vector<32x1xf32> to vector<32x32xf32>
    %79 = arith.subf %64, %78 : vector<32x32xf32>
    %cst_35 = arith.constant 9.99999974E-6 : f32
    %80 = vector.broadcast %cst_35 : f32 to vector<32x1xf32>
    %81 = arith.addf %77, %80 : vector<32x1xf32>
    %82 = math.rsqrt %81 : vector<32x1xf32>
    %83 = vector.broadcast %82 : vector<32x1xf32> to vector<32x32xf32>
    %84 = arith.mulf %79, %83 : vector<32x32xf32>
    %85 = vector.broadcast %65 : vector<1x32xf32> to vector<32x32xf32>
    %86 = arith.mulf %84, %85 : vector<32x32xf32>
    %87 = vector.broadcast %66 : vector<1x32xf32> to vector<32x32xf32>
    %88 = arith.addf %86, %87 : vector<32x32xf32>
    %89 = arith.truncf %88 : vector<32x32xf32> to vector<32x32xbf16>
    %c0_36 = arith.constant 0 : index
    %c0_37 = arith.constant 0 : index
    %90 = vector.load %arg11[%c0_36, %c0_37] : memref<32x32xbf16, #tpu.memory_space<vmem>>, vector<32x32xbf16>
    tpu.vector_store %arg11[%c0_36, %c0_37], %89 {strides = array<i32>} : memref<32x32xbf16, #tpu.memory_space<vmem>>, vector<32x32xbf16>,
    return
  }
  func.func @transform_0(%arg0: i32) -> (i32, i32) {
    %c0_i32 = arith.constant 0 : i32
    %c0_i32_0 = arith.constant 0 : i32
    return %arg0, %c0_i32 : i32, i32
  }
  func.func @transform_1(%arg0: i32) -> (i32, i32) {
    %c0_i32 = arith.constant 0 : i32
    %c0_i32_0 = arith.constant 0 : i32
    %c0_i32_1 = arith.constant 0 : i32
    return %c0_i32, %c0_i32_0 : i32, i32
  }
  func.func @transform_2(%arg0: i32) -> (i32, i32) {
    %c0_i32 = arith.constant 0 : i32
    %c0_i32_0 = arith.constant 0 : i32
    %c0_i32_1 = arith.constant 0 : i32
    return %c0_i32, %c0_i32_0 : i32, i32
  }
  func.func @transform_3(%arg0: i32) -> (i32, i32) {
    %c0_i32 = arith.constant 0 : i32
    %c0_i32_0 = arith.constant 0 : i32
    %c0_i32_1 = arith.constant 0 : i32
    return %c0_i32, %c0_i32_0 : i32, i32
  }
  func.func @transform_4(%arg0: i32) -> (i32, i32) {
    %c0_i32 = arith.constant 0 : i32
    %c0_i32_0 = arith.constant 0 : i32
    %c0_i32_1 = arith.constant 0 : i32
    return %c0_i32, %c0_i32_0 : i32, i32
  }
  func.func @transform_5(%arg0: i32) -> (i32, i32) {
    %c0_i32 = arith.constant 0 : i32
    %c0_i32_0 = arith.constant 0 : i32
    %c0_i32_1 = arith.constant 0 : i32
    return %c0_i32, %c0_i32_0 : i32, i32
  }
  func.func @transform_6(%arg0: i32) -> (i32, i32) {
    %c0_i32 = arith.constant 0 : i32
    %c0_i32_0 = arith.constant 0 : i32
    %c0_i32_1 = arith.constant 0 : i32
    return %c0_i32, %c0_i32_0 : i32, i32
  }
  func.func @transform_7(%arg0: i32) -> (i32, i32) {
    %c0_i32 = arith.constant 0 : i32
    %c0_i32_0 = arith.constant 0 : i32
    %c0_i32_1 = arith.constant 0 : i32
    return %c0_i32, %c0_i32_0 : i32, i32
  }
  func.func @transform_8(%arg0: i32) -> (i32, i32) {
    %c0_i32 = arith.constant 0 : i32
    %c0_i32_0 = arith.constant 0 : i32
    %c0_i32_1 = arith.constant 0 : i32
    return %c0_i32, %c0_i32_0 : i32, i32
  }
  func.func @transform_9(%arg0: i32) -> (i32, i32) {
    %c0_i32 = arith.constant 0 : i32
    %c0_i32_0 = arith.constant 0 : i32
    %c0_i32_1 = arith.constant 0 : i32
    return %c0_i32, %c0_i32_0 : i32, i32
  }
  func.func @transform_10(%arg0: i32) -> (i32, i32) {
    %c0_i32 = arith.constant 0 : i32
    %c0_i32_0 = arith.constant 0 : i32
    return %arg0, %c0_i32 : i32, i32
  }
}

module attributes {stable_mosaic.version = 11 : i64} {
  func.func @_col_attn_kernel(%arg0: i32, %arg1: memref<32x32xbf16, #tpu.memory_space<vmem>>, %arg2: memref<32x32xbf16, #tpu.memory_space<vmem>>, %arg3: memref<1x32xf32, #tpu.memory_space<vmem>>, %arg4: memref<1x32xf32, #tpu.memory_space<vmem>>, %arg5: memref<32x512xbf16, #tpu.memory_space<vmem>>, %arg6: memref<1x128xf32, #tpu.memory_space<vmem>>, %arg7: memref<128x32xbf16, #tpu.memory_space<vmem>>, %arg8: memref<1x32xf32, #tpu.memory_space<vmem>>, %arg9: memref<1x32xf32, #tpu.memory_space<vmem>>, %arg10: memref<1x32xf32, #tpu.memory_space<vmem>>, %arg11: memref<1x32xf32, #tpu.memory_space<vmem>>, %arg12: memref<1x32xf32, #tpu.memory_space<vmem>>, %arg13: memref<32x32xbf16, #tpu.memory_space<vmem>>) attributes {dimension_semantics = [#tpu.dimension_semantics<parallel>], iteration_bounds = array<i64: 8>, scalar_prefetch = 0 : i64, scratch_operands = 0 : i64, tpu.core_type = #tpu.core_type<tc>, window_params = [{transform_indices = @transform_0, window_bounds = array<i64: 32, 32>}, {transform_indices = @transform_1, window_bounds = array<i64: 32, 32>}, {pipeline_mode = #tpu.pipeline_mode<synchronous>, transform_indices = @transform_2, window_bounds = array<i64: 1, 32>}, {pipeline_mode = #tpu.pipeline_mode<synchronous>, transform_indices = @transform_3, window_bounds = array<i64: 1, 32>}, {pipeline_mode = #tpu.pipeline_mode<synchronous>, transform_indices = @transform_4, window_bounds = array<i64: 32, 512>}, {pipeline_mode = #tpu.pipeline_mode<synchronous>, transform_indices = @transform_5, window_bounds = array<i64: 1, 128>}, {pipeline_mode = #tpu.pipeline_mode<synchronous>, transform_indices = @transform_6, window_bounds = array<i64: 128, 32>}, {pipeline_mode = #tpu.pipeline_mode<synchronous>, transform_indices = @transform_7, window_bounds = array<i64: 1, 32>}, {pipeline_mode = #tpu.pipeline_mode<synchronous>, transform_indices = @transform_8, window_bounds = array<i64: 1, 32>}, {pipeline_mode = #tpu.pipeline_mode<synchronous>, transform_indices = @transform_9, window_bounds = array<i64: 1, 32>}, {pipeline_mode = #tpu.pipeline_mode<synchronous>, transform_indices = @transform_10, window_bounds = array<i64: 1, 32>}, {pipeline_mode = #tpu.pipeline_mode<synchronous>, transform_indices = @transform_11, window_bounds = array<i64: 1, 32>}, {transform_indices = @transform_12, window_bounds = array<i64: 32, 32>}]} {
    %c0 = arith.constant 0 : index
    %c0_0 = arith.constant 0 : index
    %0 = vector.load %arg1[%c0, %c0_0] : memref<32x32xbf16, #tpu.memory_space<vmem>>, vector<32x32xbf16>
    %1 = arith.extf %0 : vector<32x32xbf16> to vector<32x32xf32>
    %c0_1 = arith.constant 0 : index
    %c0_2 = arith.constant 0 : index
    %2 = vector.load %arg3[%c0_1, %c0_2] : memref<1x32xf32, #tpu.memory_space<vmem>>, vector<1x32xf32>
    %c0_3 = arith.constant 0 : index
    %c0_4 = arith.constant 0 : index
    %3 = vector.load %arg4[%c0_3, %c0_4] : memref<1x32xf32, #tpu.memory_space<vmem>>, vector<1x32xf32>
    %cst = arith.constant dense<0.000000e+00> : vector<32xf32>
    %4 = vector.multi_reduction <add>, %1, %cst [1] : vector<32x32xf32> to vector<32xf32>
    %5 = vector.shape_cast %4 : vector<32xf32> to vector<32x1xf32>
    %cst_5 = arith.constant 3.200000e+01 : f32
    %6 = vector.broadcast %cst_5 : f32 to vector<32x1xf32>
    %7 = arith.divf %5, %6 : vector<32x1xf32>
    %8 = vector.broadcast %7 : vector<32x1xf32> to vector<32x32xf32>
    %9 = arith.subf %1, %8 : vector<32x32xf32>
    %10 = arith.mulf %9, %9 : vector<32x32xf32>
    %cst_6 = arith.constant dense<0.000000e+00> : vector<32xf32>
    %11 = vector.multi_reduction <add>, %10, %cst_6 [1] : vector<32x32xf32> to vector<32xf32>
    %12 = vector.shape_cast %11 : vector<32xf32> to vector<32x1xf32>
    %cst_7 = arith.constant 3.200000e+01 : f32
    %13 = vector.broadcast %cst_7 : f32 to vector<32x1xf32>
    %14 = arith.divf %12, %13 : vector<32x1xf32>
    %15 = vector.broadcast %7 : vector<32x1xf32> to vector<32x32xf32>
    %16 = arith.subf %1, %15 : vector<32x32xf32>
    %cst_8 = arith.constant 9.99999974E-6 : f32
    %17 = vector.broadcast %cst_8 : f32 to vector<32x1xf32>
    %18 = arith.addf %14, %17 : vector<32x1xf32>
    %19 = math.rsqrt %18 : vector<32x1xf32>
    %20 = vector.broadcast %19 : vector<32x1xf32> to vector<32x32xf32>
    %21 = arith.mulf %16, %20 : vector<32x32xf32>
    %22 = vector.broadcast %2 : vector<1x32xf32> to vector<32x32xf32>
    %23 = arith.mulf %21, %22 : vector<32x32xf32>
    %24 = vector.broadcast %3 : vector<1x32xf32> to vector<32x32xf32>
    %25 = arith.addf %23, %24 : vector<32x32xf32>
    %26 = arith.truncf %25 : vector<32x32xf32> to vector<32x32xbf16>
    %c0_9 = arith.constant 0 : index
    %c0_10 = arith.constant 0 : index
    %27 = vector.load %arg5[%c0_9, %c0_10] : memref<32x512xbf16, #tpu.memory_space<vmem>>, vector<32x512xbf16>
    %cst_11 = arith.constant dense<0.000000e+00> : vector<32x512xf32>
    %28 = tpu.matmul %26, %27, %cst_11 {dimension_numbers = #tpu.dot_dimension_numbers<[1], [0], [0], [1], [0, 0, 1, 1], [], []>} : vector<32x32xbf16>, vector<32x512xbf16>, vector<32x512xf32> -> vector<32x512xf32>
    %29 = vector.extract_strided_slice %28 {offsets = [0, 384], sizes = [32, 128], strides = [1, 1]} : vector<32x512xf32> to vector<32x128xf32>
    %30 = vector.extract_strided_slice %28 {offsets = [0, 0], sizes = [32, 64], strides = [1, 1]} : vector<32x512xf32> to vector<32x64xf32>
    %31 = vector.shape_cast %30 : vector<32x64xf32> to vector<4x8x64xf32>
    %32 = vector.extract_strided_slice %28 {offsets = [0, 128], sizes = [32, 64], strides = [1, 1]} : vector<32x512xf32> to vector<32x64xf32>
    %33 = vector.shape_cast %32 : vector<32x64xf32> to vector<4x8x64xf32>
    %34 = vector.extract_strided_slice %28 {offsets = [0, 256], sizes = [32, 64], strides = [1, 1]} : vector<32x512xf32> to vector<32x64xf32>
    %35 = vector.shape_cast %34 : vector<32x64xf32> to vector<4x8x64xf32>
    %36 = arith.truncf %31 : vector<4x8x64xf32> to vector<4x8x64xbf16>
    %37 = arith.truncf %33 : vector<4x8x64xf32> to vector<4x8x64xbf16>
    "tpu.trace_start"() <{level = 10 : i32, message = "bqd,bkd->bqk"}> : () -> ()
    %cst_12 = arith.constant dense<0.000000e+00> : vector<4x8x8xf32>
    %38 = tpu.matmul %36, %37, %cst_12 {dimension_numbers = #tpu.dot_dimension_numbers<[2], [2], [1], [1], [0, 0, 0, 1, 1, 1], [0], [0]>} : vector<4x8x64xbf16>, vector<4x8x64xbf16>, vector<4x8x8xf32> -> vector<4x8x8xf32>
    "tpu.trace_stop"() : () -> ()
    %cst_13 = arith.constant dense<0xFF800000> : vector<4x8xf32>
    %39 = vector.multi_reduction <maximumf>, %38, %cst_13 [2] : vector<4x8x8xf32> to vector<4x8xf32>
    %40 = vector.shape_cast %39 : vector<4x8xf32> to vector<4x8x1xf32>
    %41 = vector.broadcast %40 : vector<4x8x1xf32> to vector<4x8x8xf32>
    %42 = arith.subf %38, %41 : vector<4x8x8xf32>
    %43 = math.exp %42 : vector<4x8x8xf32>
    %cst_14 = arith.constant dense<0.000000e+00> : vector<4x8xf32>
    %44 = vector.multi_reduction <add>, %43, %cst_14 [2] : vector<4x8x8xf32> to vector<4x8xf32>
    %45 = vector.shape_cast %44 : vector<4x8xf32> to vector<4x8x1xf32>
    %46 = tpu.reciprocal %45 {approx = true} : vector<4x8x1xf32> -> vector<4x8x1xf32>
    %47 = vector.broadcast %46 : vector<4x8x1xf32> to vector<4x8x8xf32>
    %48 = arith.mulf %43, %47 : vector<4x8x8xf32>
    %49 = arith.truncf %48 : vector<4x8x8xf32> to vector<4x8x8xbf16>
    %50 = arith.truncf %35 : vector<4x8x64xf32> to vector<4x8x64xbf16>
    "tpu.trace_start"() <{level = 10 : i32, message = "bqk,bkd->bqd"}> : () -> ()
    %cst_15 = arith.constant dense<0.000000e+00> : vector<4x8x64xf32>
    %51 = tpu.matmul %49, %50, %cst_15 {dimension_numbers = #tpu.dot_dimension_numbers<[2], [1], [1], [2], [0, 0, 0, 1, 1, 2], [0], [0]>} : vector<4x8x8xbf16>, vector<4x8x64xbf16>, vector<4x8x64xf32> -> vector<4x8x64xf32>
    "tpu.trace_stop"() : () -> ()
    %52 = vector.shape_cast %51 : vector<4x8x64xf32> to vector<32x64xf32>
    %53 = vector.extract_strided_slice %28 {offsets = [0, 64], sizes = [32, 64], strides = [1, 1]} : vector<32x512xf32> to vector<32x64xf32>
    %54 = vector.shape_cast %53 : vector<32x64xf32> to vector<4x8x64xf32>
    %55 = vector.extract_strided_slice %28 {offsets = [0, 192], sizes = [32, 64], strides = [1, 1]} : vector<32x512xf32> to vector<32x64xf32>
    %56 = vector.shape_cast %55 : vector<32x64xf32> to vector<4x8x64xf32>
    %57 = vector.extract_strided_slice %28 {offsets = [0, 320], sizes = [32, 64], strides = [1, 1]} : vector<32x512xf32> to vector<32x64xf32>
    %58 = vector.shape_cast %57 : vector<32x64xf32> to vector<4x8x64xf32>
    %59 = arith.truncf %54 : vector<4x8x64xf32> to vector<4x8x64xbf16>
    %60 = arith.truncf %56 : vector<4x8x64xf32> to vector<4x8x64xbf16>
    "tpu.trace_start"() <{level = 10 : i32, message = "bqd,bkd->bqk"}> : () -> ()
    %cst_16 = arith.constant dense<0.000000e+00> : vector<4x8x8xf32>
    %61 = tpu.matmul %59, %60, %cst_16 {dimension_numbers = #tpu.dot_dimension_numbers<[2], [2], [1], [1], [0, 0, 0, 1, 1, 1], [0], [0]>} : vector<4x8x64xbf16>, vector<4x8x64xbf16>, vector<4x8x8xf32> -> vector<4x8x8xf32>
    "tpu.trace_stop"() : () -> ()
    %cst_17 = arith.constant dense<0xFF800000> : vector<4x8xf32>
    %62 = vector.multi_reduction <maximumf>, %61, %cst_17 [2] : vector<4x8x8xf32> to vector<4x8xf32>
    %63 = vector.shape_cast %62 : vector<4x8xf32> to vector<4x8x1xf32>
    %64 = vector.broadcast %63 : vector<4x8x1xf32> to vector<4x8x8xf32>
    %65 = arith.subf %61, %64 : vector<4x8x8xf32>
    %66 = math.exp %65 : vector<4x8x8xf32>
    %cst_18 = arith.constant dense<0.000000e+00> : vector<4x8xf32>
    %67 = vector.multi_reduction <add>, %66, %cst_18 [2] : vector<4x8x8xf32> to vector<4x8xf32>
    %68 = vector.shape_cast %67 : vector<4x8xf32> to vector<4x8x1xf32>
    %69 = tpu.reciprocal %68 {approx = true} : vector<4x8x1xf32> -> vector<4x8x1xf32>
    %70 = vector.broadcast %69 : vector<4x8x1xf32> to vector<4x8x8xf32>
    %71 = arith.mulf %66, %70 : vector<4x8x8xf32>
    %72 = arith.truncf %71 : vector<4x8x8xf32> to vector<4x8x8xbf16>
    %73 = arith.truncf %58 : vector<4x8x64xf32> to vector<4x8x64xbf16>
    "tpu.trace_start"() <{level = 10 : i32, message = "bqk,bkd->bqd"}> : () -> ()
    %cst_19 = arith.constant dense<0.000000e+00> : vector<4x8x64xf32>
    %74 = tpu.matmul %72, %73, %cst_19 {dimension_numbers = #tpu.dot_dimension_numbers<[2], [1], [1], [2], [0, 0, 0, 1, 1, 2], [0], [0]>} : vector<4x8x8xbf16>, vector<4x8x64xbf16>, vector<4x8x64xf32> -> vector<4x8x64xf32>
    "tpu.trace_stop"() : () -> ()
    %75 = vector.shape_cast %74 : vector<4x8x64xf32> to vector<32x64xf32>
    %76 = tpu.concatenate %52, %75 in 1 : vector<32x64xf32>, vector<32x64xf32> -> vector<32x128xf32>
    %c0_20 = arith.constant 0 : index
    %c0_21 = arith.constant 0 : index
    %77 = vector.load %arg6[%c0_20, %c0_21] : memref<1x128xf32, #tpu.memory_space<vmem>>, vector<1x128xf32>
    %78 = vector.broadcast %77 : vector<1x128xf32> to vector<32x128xf32>
    %79 = arith.addf %29, %78 : vector<32x128xf32>
    %80 = arith.negf %79 : vector<32x128xf32>
    %81 = math.exp %80 : vector<32x128xf32>
    %cst_22 = arith.constant 1.000000e+00 : f32
    %82 = vector.broadcast %cst_22 : f32 to vector<32x128xf32>
    %83 = arith.addf %82, %81 : vector<32x128xf32>
    %84 = arith.divf %82, %83 : vector<32x128xf32>
    %85 = arith.mulf %76, %84 : vector<32x128xf32>
    %86 = arith.truncf %85 : vector<32x128xf32> to vector<32x128xbf16>
    %c0_23 = arith.constant 0 : index
    %c0_24 = arith.constant 0 : index
    %87 = vector.load %arg7[%c0_23, %c0_24] : memref<128x32xbf16, #tpu.memory_space<vmem>>, vector<128x32xbf16>
    %cst_25 = arith.constant dense<0.000000e+00> : vector<32x32xf32>
    %88 = tpu.matmul %86, %87, %cst_25 {dimension_numbers = #tpu.dot_dimension_numbers<[1], [0], [0], [1], [0, 0, 1, 1], [], []>} : vector<32x128xbf16>, vector<128x32xbf16>, vector<32x32xf32> -> vector<32x32xf32>
    %c0_26 = arith.constant 0 : index
    %c0_27 = arith.constant 0 : index
    %89 = vector.load %arg8[%c0_26, %c0_27] : memref<1x32xf32, #tpu.memory_space<vmem>>, vector<1x32xf32>
    %90 = vector.broadcast %89 : vector<1x32xf32> to vector<32x32xf32>
    %91 = arith.addf %88, %90 : vector<32x32xf32>
    %92 = arith.addf %25, %91 : vector<32x32xf32>
    %c0_28 = arith.constant 0 : index
    %c0_29 = arith.constant 0 : index
    %93 = vector.load %arg9[%c0_28, %c0_29] : memref<1x32xf32, #tpu.memory_space<vmem>>, vector<1x32xf32>
    %c0_30 = arith.constant 0 : index
    %c0_31 = arith.constant 0 : index
    %94 = vector.load %arg10[%c0_30, %c0_31] : memref<1x32xf32, #tpu.memory_space<vmem>>, vector<1x32xf32>
    %cst_32 = arith.constant dense<0.000000e+00> : vector<32xf32>
    %95 = vector.multi_reduction <add>, %92, %cst_32 [1] : vector<32x32xf32> to vector<32xf32>
    %96 = vector.shape_cast %95 : vector<32xf32> to vector<32x1xf32>
    %cst_33 = arith.constant 3.200000e+01 : f32
    %97 = vector.broadcast %cst_33 : f32 to vector<32x1xf32>
    %98 = arith.divf %96, %97 : vector<32x1xf32>
    %99 = vector.broadcast %98 : vector<32x1xf32> to vector<32x32xf32>
    %100 = arith.subf %92, %99 : vector<32x32xf32>
    %101 = arith.mulf %100, %100 : vector<32x32xf32>
    %cst_34 = arith.constant dense<0.000000e+00> : vector<32xf32>
    %102 = vector.multi_reduction <add>, %101, %cst_34 [1] : vector<32x32xf32> to vector<32xf32>
    %103 = vector.shape_cast %102 : vector<32xf32> to vector<32x1xf32>
    %cst_35 = arith.constant 3.200000e+01 : f32
    %104 = vector.broadcast %cst_35 : f32 to vector<32x1xf32>
    %105 = arith.divf %103, %104 : vector<32x1xf32>
    %106 = vector.broadcast %98 : vector<32x1xf32> to vector<32x32xf32>
    %107 = arith.subf %92, %106 : vector<32x32xf32>
    %cst_36 = arith.constant 9.99999974E-6 : f32
    %108 = vector.broadcast %cst_36 : f32 to vector<32x1xf32>
    %109 = arith.addf %105, %108 : vector<32x1xf32>
    %110 = math.rsqrt %109 : vector<32x1xf32>
    %111 = vector.broadcast %110 : vector<32x1xf32> to vector<32x32xf32>
    %112 = arith.mulf %107, %111 : vector<32x32xf32>
    %113 = vector.broadcast %93 : vector<1x32xf32> to vector<32x32xf32>
    %114 = arith.mulf %112, %113 : vector<32x32xf32>
    %115 = vector.broadcast %94 : vector<1x32xf32> to vector<32x32xf32>
    %116 = arith.addf %114, %115 : vector<32x32xf32>
    %c0_37 = arith.constant 0 : index
    %c0_38 = arith.constant 0 : index
    %117 = vector.load %arg2[%c0_37, %c0_38] : memref<32x32xbf16, #tpu.memory_space<vmem>>, vector<32x32xbf16>
    %118 = arith.extf %117 : vector<32x32xbf16> to vector<32x32xf32>
    %119 = arith.addf %116, %118 : vector<32x32xf32>
    %c0_39 = arith.constant 0 : index
    %c0_40 = arith.constant 0 : index
    %120 = vector.load %arg11[%c0_39, %c0_40] : memref<1x32xf32, #tpu.memory_space<vmem>>, vector<1x32xf32>
    %c0_41 = arith.constant 0 : index
    %c0_42 = arith.constant 0 : index
    %121 = vector.load %arg12[%c0_41, %c0_42] : memref<1x32xf32, #tpu.memory_space<vmem>>, vector<1x32xf32>
    %cst_43 = arith.constant dense<0.000000e+00> : vector<32xf32>
    %122 = vector.multi_reduction <add>, %119, %cst_43 [1] : vector<32x32xf32> to vector<32xf32>
    %123 = vector.shape_cast %122 : vector<32xf32> to vector<32x1xf32>
    %cst_44 = arith.constant 3.200000e+01 : f32
    %124 = vector.broadcast %cst_44 : f32 to vector<32x1xf32>
    %125 = arith.divf %123, %124 : vector<32x1xf32>
    %126 = vector.broadcast %125 : vector<32x1xf32> to vector<32x32xf32>
    %127 = arith.subf %119, %126 : vector<32x32xf32>
    %128 = arith.mulf %127, %127 : vector<32x32xf32>
    %cst_45 = arith.constant dense<0.000000e+00> : vector<32xf32>
    %129 = vector.multi_reduction <add>, %128, %cst_45 [1] : vector<32x32xf32> to vector<32xf32>
    %130 = vector.shape_cast %129 : vector<32xf32> to vector<32x1xf32>
    %cst_46 = arith.constant 3.200000e+01 : f32
    %131 = vector.broadcast %cst_46 : f32 to vector<32x1xf32>
    %132 = arith.divf %130, %131 : vector<32x1xf32>
    %133 = vector.broadcast %125 : vector<32x1xf32> to vector<32x32xf32>
    %134 = arith.subf %119, %133 : vector<32x32xf32>
    %cst_47 = arith.constant 9.99999974E-6 : f32
    %135 = vector.broadcast %cst_47 : f32 to vector<32x1xf32>
    %136 = arith.addf %132, %135 : vector<32x1xf32>
    %137 = math.rsqrt %136 : vector<32x1xf32>
    %138 = vector.broadcast %137 : vector<32x1xf32> to vector<32x32xf32>
    %139 = arith.mulf %134, %138 : vector<32x32xf32>
    %140 = vector.broadcast %120 : vector<1x32xf32> to vector<32x32xf32>
    %141 = arith.mulf %139, %140 : vector<32x32xf32>
    %142 = vector.broadcast %121 : vector<1x32xf32> to vector<32x32xf32>
    %143 = arith.addf %141, %142 : vector<32x32xf32>
    %144 = arith.truncf %143 : vector<32x32xf32> to vector<32x32xbf16>
    %c0_48 = arith.constant 0 : index
    %c0_49 = arith.constant 0 : index
    %145 = vector.load %arg13[%c0_48, %c0_49] : memref<32x32xbf16, #tpu.memory_space<vmem>>, vector<32x32xbf16>
    tpu.vector_store %arg13[%c0_48, %c0_49], %144 {strides = array<i32>} : memref<32x32xbf16, #tpu.memory_space<vmem>>, vector<32x32xbf16>,
    return
  }
  func.func @transform_0(%arg0: i32) -> (i32, i32) {
    %c0_i32 = arith.constant 0 : i32
    %c0_i32_0 = arith.constant 0 : i32
    return %arg0, %c0_i32 : i32, i32
  }
  func.func @transform_1(%arg0: i32) -> (i32, i32) {
    %c0_i32 = arith.constant 0 : i32
    %c0_i32_0 = arith.constant 0 : i32
    return %arg0, %c0_i32 : i32, i32
  }
  func.func @transform_2(%arg0: i32) -> (i32, i32) {
    %c0_i32 = arith.constant 0 : i32
    %c0_i32_0 = arith.constant 0 : i32
    %c0_i32_1 = arith.constant 0 : i32
    return %c0_i32, %c0_i32_0 : i32, i32
  }
  func.func @transform_3(%arg0: i32) -> (i32, i32) {
    %c0_i32 = arith.constant 0 : i32
    %c0_i32_0 = arith.constant 0 : i32
    %c0_i32_1 = arith.constant 0 : i32
    return %c0_i32, %c0_i32_0 : i32, i32
  }
  func.func @transform_4(%arg0: i32) -> (i32, i32) {
    %c0_i32 = arith.constant 0 : i32
    %c0_i32_0 = arith.constant 0 : i32
    %c0_i32_1 = arith.constant 0 : i32
    return %c0_i32, %c0_i32_0 : i32, i32
  }
  func.func @transform_5(%arg0: i32) -> (i32, i32) {
    %c0_i32 = arith.constant 0 : i32
    %c0_i32_0 = arith.constant 0 : i32
    %c0_i32_1 = arith.constant 0 : i32
    return %c0_i32, %c0_i32_0 : i32, i32
  }
  func.func @transform_6(%arg0: i32) -> (i32, i32) {
    %c0_i32 = arith.constant 0 : i32
    %c0_i32_0 = arith.constant 0 : i32
    %c0_i32_1 = arith.constant 0 : i32
    return %c0_i32, %c0_i32_0 : i32, i32
  }
  func.func @transform_7(%arg0: i32) -> (i32, i32) {
    %c0_i32 = arith.constant 0 : i32
    %c0_i32_0 = arith.constant 0 : i32
    %c0_i32_1 = arith.constant 0 : i32
    return %c0_i32, %c0_i32_0 : i32, i32
  }
  func.func @transform_8(%arg0: i32) -> (i32, i32) {
    %c0_i32 = arith.constant 0 : i32
    %c0_i32_0 = arith.constant 0 : i32
    %c0_i32_1 = arith.constant 0 : i32
    return %c0_i32, %c0_i32_0 : i32, i32
  }
  func.func @transform_9(%arg0: i32) -> (i32, i32) {
    %c0_i32 = arith.constant 0 : i32
    %c0_i32_0 = arith.constant 0 : i32
    %c0_i32_1 = arith.constant 0 : i32
    return %c0_i32, %c0_i32_0 : i32, i32
  }
  func.func @transform_10(%arg0: i32) -> (i32, i32) {
    %c0_i32 = arith.constant 0 : i32
    %c0_i32_0 = arith.constant 0 : i32
    %c0_i32_1 = arith.constant 0 : i32
    return %c0_i32, %c0_i32_0 : i32, i32
  }
  func.func @transform_11(%arg0: i32) -> (i32, i32) {
    %c0_i32 = arith.constant 0 : i32
    %c0_i32_0 = arith.constant 0 : i32
    %c0_i32_1 = arith.constant 0 : i32
    return %c0_i32, %c0_i32_0 : i32, i32
  }
  func.func @transform_12(%arg0: i32) -> (i32, i32) {
    %c0_i32 = arith.constant 0 : i32
    %c0_i32_0 = arith.constant 0 : i32
    return %arg0, %c0_i32 : i32, i32
  }
}

module attributes {stable_mosaic.version = 11 : i64} {
  func.func @_fc_pos_res_kernel(%arg0: i32, %arg1: i32, %arg2: memref<1x16x32xbf16, #tpu.memory_space<vmem>>, %arg3: memref<16x32xf32, #tpu.memory_space<vmem>>, %arg4: memref<32x32xbf16, #tpu.memory_space<vmem>>, %arg5: memref<1x32xf32, #tpu.memory_space<vmem>>, %arg6: memref<1x16x32xbf16, #tpu.memory_space<vmem>>) attributes {dimension_semantics = [#tpu.dimension_semantics<parallel>, #tpu.dimension_semantics<parallel>], iteration_bounds = array<i64: 2, 1>, scalar_prefetch = 0 : i64, scratch_operands = 0 : i64, tpu.core_type = #tpu.core_type<tc>, window_params = [{transform_indices = @transform_0, window_bounds = array<i64: 1, 16, 32>}, {transform_indices = @transform_1, window_bounds = array<i64: 16, 32>}, {pipeline_mode = #tpu.pipeline_mode<synchronous>, transform_indices = @transform_2, window_bounds = array<i64: 32, 32>}, {pipeline_mode = #tpu.pipeline_mode<synchronous>, transform_indices = @transform_3, window_bounds = array<i64: 1, 32>}, {transform_indices = @transform_4, window_bounds = array<i64: 1, 16, 32>}]} {
    %c0 = arith.constant 0 : index
    %c0_0 = arith.constant 0 : index
    %c0_1 = arith.constant 0 : index
    %0 = vector.load %arg2[%c0, %c0_0, %c0_1] : memref<1x16x32xbf16, #tpu.memory_space<vmem>>, vector<1x16x32xbf16>
    %1 = vector.shape_cast %0 : vector<1x16x32xbf16> to vector<16x32xbf16>
    %2 = arith.extf %1 : vector<16x32xbf16> to vector<16x32xf32>
    %c0_2 = arith.constant 0 : index
    %c0_3 = arith.constant 0 : index
    %3 = vector.load %arg3[%c0_2, %c0_3] : memref<16x32xf32, #tpu.memory_space<vmem>>, vector<16x32xf32>
    %4 = arith.addf %2, %3 : vector<16x32xf32>
    %5 = arith.truncf %4 : vector<16x32xf32> to vector<16x32xbf16>
    %c0_4 = arith.constant 0 : index
    %c0_5 = arith.constant 0 : index
    %6 = vector.load %arg4[%c0_4, %c0_5] : memref<32x32xbf16, #tpu.memory_space<vmem>>, vector<32x32xbf16>
    %cst = arith.constant dense<0.000000e+00> : vector<16x32xf32>
    %7 = tpu.matmul %5, %6, %cst {dimension_numbers = #tpu.dot_dimension_numbers<[1], [0], [0], [1], [0, 0, 1, 1], [], []>} : vector<16x32xbf16>, vector<32x32xbf16>, vector<16x32xf32> -> vector<16x32xf32>
    %c0_6 = arith.constant 0 : index
    %c0_7 = arith.constant 0 : index
    %8 = vector.load %arg5[%c0_6, %c0_7] : memref<1x32xf32, #tpu.memory_space<vmem>>, vector<1x32xf32>
    %9 = vector.broadcast %8 : vector<1x32xf32> to vector<16x32xf32>
    %10 = arith.addf %7, %9 : vector<16x32xf32>
    %11 = arith.addf %10, %4 : vector<16x32xf32>
    %12 = arith.truncf %11 : vector<16x32xf32> to vector<16x32xbf16>
    %c0_8 = arith.constant 0 : index
    %c0_9 = arith.constant 0 : index
    %c0_10 = arith.constant 0 : index
    %13 = vector.load %arg6[%c0_8, %c0_9, %c0_10] : memref<1x16x32xbf16, #tpu.memory_space<vmem>>, vector<1x16x32xbf16>
    %14 = vector.shape_cast %13 : vector<1x16x32xbf16> to vector<16x32xbf16>
    %15 = vector.shape_cast %12 : vector<16x32xbf16> to vector<1x16x32xbf16>
    tpu.vector_store %arg6[%c0_8, %c0_9, %c0_10], %15 {strides = array<i32>} : memref<1x16x32xbf16, #tpu.memory_space<vmem>>, vector<1x16x32xbf16>,
    return
  }
  func.func @transform_0(%arg0: i32, %arg1: i32) -> (i32, i32, i32) {
    %c0_i32 = arith.constant 0 : i32
    %c0_i32_0 = arith.constant 0 : i32
    return %arg0, %arg1, %c0_i32 : i32, i32, i32
  }
  func.func @transform_1(%arg0: i32, %arg1: i32) -> (i32, i32) {
    %c0_i32 = arith.constant 0 : i32
    %c0_i32_0 = arith.constant 0 : i32
    return %arg1, %c0_i32 : i32, i32
  }
  func.func @transform_2(%arg0: i32, %arg1: i32) -> (i32, i32) {
    %c0_i32 = arith.constant 0 : i32
    %c0_i32_0 = arith.constant 0 : i32
    %c0_i32_1 = arith.constant 0 : i32
    return %c0_i32, %c0_i32_0 : i32, i32
  }
  func.func @transform_3(%arg0: i32, %arg1: i32) -> (i32, i32) {
    %c0_i32 = arith.constant 0 : i32
    %c0_i32_0 = arith.constant 0 : i32
    %c0_i32_1 = arith.constant 0 : i32
    return %c0_i32, %c0_i32_0 : i32, i32
  }
  func.func @transform_4(%arg0: i32, %arg1: i32) -> (i32, i32, i32) {
    %c0_i32 = arith.constant 0 : i32
    %c0_i32_0 = arith.constant 0 : i32
    return %arg0, %arg1, %c0_i32 : i32, i32, i32
  }
}

module attributes {stable_mosaic.version = 11 : i64} {
  func.func @_gat_pre_kernel(%arg0: i32, %arg1: memref<32x32xbf16, #tpu.memory_space<vmem>>, %arg2: memref<32x32xbf16, #tpu.memory_space<vmem>>, %arg3: memref<1x32xf32, #tpu.memory_space<vmem>>, %arg4: memref<1x32xf32, #tpu.memory_space<vmem>>, %arg5: memref<32x32xbf16, #tpu.memory_space<vmem>>, %arg6: memref<32x1xf32, #tpu.memory_space<vmem>>, %arg7: memref<32x1xf32, #tpu.memory_space<vmem>>) attributes {dimension_semantics = [#tpu.dimension_semantics<parallel>], iteration_bounds = array<i64: 1>, scalar_prefetch = 0 : i64, scratch_operands = 0 : i64, tpu.core_type = #tpu.core_type<tc>, window_params = [{transform_indices = @transform_0, window_bounds = array<i64: 32, 32>}, {pipeline_mode = #tpu.pipeline_mode<synchronous>, transform_indices = @transform_1, window_bounds = array<i64: 32, 32>}, {pipeline_mode = #tpu.pipeline_mode<synchronous>, transform_indices = @transform_2, window_bounds = array<i64: 1, 32>}, {pipeline_mode = #tpu.pipeline_mode<synchronous>, transform_indices = @transform_3, window_bounds = array<i64: 1, 32>}, {transform_indices = @transform_4, window_bounds = array<i64: 32, 32>}, {transform_indices = @transform_5, window_bounds = array<i64: 32, 1>}, {transform_indices = @transform_6, window_bounds = array<i64: 32, 1>}]} {
    %c0 = arith.constant 0 : index
    %c0_0 = arith.constant 0 : index
    %0 = vector.load %arg1[%c0, %c0_0] : memref<32x32xbf16, #tpu.memory_space<vmem>>, vector<32x32xbf16>
    %1 = arith.extf %0 : vector<32x32xbf16> to vector<32x32xf32>
    %2 = arith.truncf %1 : vector<32x32xf32> to vector<32x32xbf16>
    %c0_1 = arith.constant 0 : index
    %c0_2 = arith.constant 0 : index
    %3 = vector.load %arg2[%c0_1, %c0_2] : memref<32x32xbf16, #tpu.memory_space<vmem>>, vector<32x32xbf16>
    %cst = arith.constant dense<0.000000e+00> : vector<32x32xf32>
    %4 = tpu.matmul %2, %3, %cst {dimension_numbers = #tpu.dot_dimension_numbers<[1], [0], [0], [1], [0, 0, 1, 1], [], []>} : vector<32x32xbf16>, vector<32x32xbf16>, vector<32x32xf32> -> vector<32x32xf32>
    %5 = arith.truncf %4 : vector<32x32xf32> to vector<32x32xbf16>
    %c0_3 = arith.constant 0 : index
    %c0_4 = arith.constant 0 : index
    %6 = vector.load %arg5[%c0_3, %c0_4] : memref<32x32xbf16, #tpu.memory_space<vmem>>, vector<32x32xbf16>
    tpu.vector_store %arg5[%c0_3, %c0_4], %5 {strides = array<i32>} : memref<32x32xbf16, #tpu.memory_space<vmem>>, vector<32x32xbf16>,
    %c0_5 = arith.constant 0 : index
    %c0_6 = arith.constant 0 : index
    %7 = vector.load %arg3[%c0_5, %c0_6] : memref<1x32xf32, #tpu.memory_space<vmem>>, vector<1x32xf32>
    %8 = vector.broadcast %7 : vector<1x32xf32> to vector<32x32xf32>
    %9 = arith.mulf %4, %8 : vector<32x32xf32>
    %cst_7 = arith.constant dense<0.000000e+00> : vector<32xf32>
    %10 = vector.multi_reduction <add>, %9, %cst_7 [1] : vector<32x32xf32> to vector<32xf32>
    %11 = vector.shape_cast %10 : vector<32xf32> to vector<32x1xf32>
    %c0_8 = arith.constant 0 : index
    %c0_9 = arith.constant 0 : index
    %12 = vector.load %arg6[%c0_8, %c0_9] : memref<32x1xf32, #tpu.memory_space<vmem>>, vector<32x1xf32>
    tpu.vector_store %arg6[%c0_8, %c0_9], %11 {strides = array<i32>} : memref<32x1xf32, #tpu.memory_space<vmem>>, vector<32x1xf32>,
    %c0_10 = arith.constant 0 : index
    %c0_11 = arith.constant 0 : index
    %13 = vector.load %arg4[%c0_10, %c0_11] : memref<1x32xf32, #tpu.memory_space<vmem>>, vector<1x32xf32>
    %14 = vector.broadcast %13 : vector<1x32xf32> to vector<32x32xf32>
    %15 = arith.mulf %4, %14 : vector<32x32xf32>
    %cst_12 = arith.constant dense<0.000000e+00> : vector<32xf32>
    %16 = vector.multi_reduction <add>, %15, %cst_12 [1] : vector<32x32xf32> to vector<32xf32>
    %17 = vector.shape_cast %16 : vector<32xf32> to vector<32x1xf32>
    %c0_13 = arith.constant 0 : index
    %c0_14 = arith.constant 0 : index
    %18 = vector.load %arg7[%c0_13, %c0_14] : memref<32x1xf32, #tpu.memory_space<vmem>>, vector<32x1xf32>
    tpu.vector_store %arg7[%c0_13, %c0_14], %17 {strides = array<i32>} : memref<32x1xf32, #tpu.memory_space<vmem>>, vector<32x1xf32>,
    return
  }
  func.func @transform_0(%arg0: i32) -> (i32, i32) {
    %c0_i32 = arith.constant 0 : i32
    %c0_i32_0 = arith.constant 0 : i32
    return %arg0, %c0_i32 : i32, i32
  }
  func.func @transform_1(%arg0: i32) -> (i32, i32) {
    %c0_i32 = arith.constant 0 : i32
    %c0_i32_0 = arith.constant 0 : i32
    %c0_i32_1 = arith.constant 0 : i32
    return %c0_i32, %c0_i32_0 : i32, i32
  }
  func.func @transform_2(%arg0: i32) -> (i32, i32) {
    %c0_i32 = arith.constant 0 : i32
    %c0_i32_0 = arith.constant 0 : i32
    %c0_i32_1 = arith.constant 0 : i32
    return %c0_i32, %c0_i32_0 : i32, i32
  }
  func.func @transform_3(%arg0: i32) -> (i32, i32) {
    %c0_i32 = arith.constant 0 : i32
    %c0_i32_0 = arith.constant 0 : i32
    %c0_i32_1 = arith.constant 0 : i32
    return %c0_i32, %c0_i32_0 : i32, i32
  }
  func.func @transform_4(%arg0: i32) -> (i32, i32) {
    %c0_i32 = arith.constant 0 : i32
    %c0_i32_0 = arith.constant 0 : i32
    return %arg0, %c0_i32 : i32, i32
  }
  func.func @transform_5(%arg0: i32) -> (i32, i32) {
    %c0_i32 = arith.constant 0 : i32
    %c0_i32_0 = arith.constant 0 : i32
    return %arg0, %c0_i32 : i32, i32
  }
  func.func @transform_6(%arg0: i32) -> (i32, i32) {
    %c0_i32 = arith.constant 0 : i32
    %c0_i32_0 = arith.constant 0 : i32
    return %arg0, %c0_i32 : i32, i32
  }
}

module attributes {stable_mosaic.version = 11 : i64} {
  func.func @_gat_attn_kernel(%arg0: i32, %arg1: i32, %arg2: memref<32x1xf32, #tpu.memory_space<vmem>>, %arg3: memref<1x32xf32, #tpu.memory_space<vmem>>, %arg4: memref<32x32xi8, #tpu.memory_space<vmem>>, %arg5: memref<32x32xbf16, #tpu.memory_space<vmem>>, %arg6: memref<32x32xbf16, #tpu.memory_space<vmem>>, %arg7: memref<1x32xf32, #tpu.memory_space<vmem>>, %arg8: memref<1x32xf32, #tpu.memory_space<vmem>>, %arg9: memref<1x32xf32, #tpu.memory_space<vmem>>, %arg10: memref<32x32xbf16, #tpu.memory_space<vmem>>, %arg11: memref<32x1xf32, #tpu.memory_space<vmem>>, %arg12: memref<32x1xf32, #tpu.memory_space<vmem>>, %arg13: memref<32x32xf32, #tpu.memory_space<vmem>>) attributes {dimension_semantics = [#tpu.dimension_semantics<parallel>, #tpu.dimension_semantics<arbitrary>], iteration_bounds = array<i64: 1, 1>, scalar_prefetch = 0 : i64, scratch_operands = 3 : i64, tpu.core_type = #tpu.core_type<tc>, window_params = [{transform_indices = @transform_0, window_bounds = array<i64: 32, 1>}, {transform_indices = @transform_1, window_bounds = array<i64: 1, 32>}, {transform_indices = @transform_2, window_bounds = array<i64: 32, 32>}, {transform_indices = @transform_3, window_bounds = array<i64: 32, 32>}, {transform_indices = @transform_4, window_bounds = array<i64: 32, 32>}, {pipeline_mode = #tpu.pipeline_mode<synchronous>, transform_indices = @transform_5, window_bounds = array<i64: 1, 32>}, {pipeline_mode = #tpu.pipeline_mode<synchronous>, transform_indices = @transform_6, window_bounds = array<i64: 1, 32>}, {pipeline_mode = #tpu.pipeline_mode<synchronous>, transform_indices = @transform_7, window_bounds = array<i64: 1, 32>}, {transform_indices = @transform_8, window_bounds = array<i64: 32, 32>}]} {
    %c0_i32 = arith.constant 0 : i32
    %0 = arith.cmpi eq, %arg1, %c0_i32 : i32
    %1 = arith.extui %0 : i1 to i32
    %c0_i32_0 = arith.constant 0 : i32
    %2 = arith.cmpi ne, %1, %c0_i32_0 : i32
    scf.if %2 {
      %cst_29 = arith.constant -1.000000e+30 : f32
      %49 = vector.broadcast %cst_29 : f32 to vector<32x1xf32>
      %c0_30 = arith.constant 0 : index
      %c0_31 = arith.constant 0 : index
      %50 = vector.load %arg11[%c0_30, %c0_31] : memref<32x1xf32, #tpu.memory_space<vmem>>, vector<32x1xf32>
      tpu.vector_store %arg11[%c0_30, %c0_31], %49 {strides = array<i32>} : memref<32x1xf32, #tpu.memory_space<vmem>>, vector<32x1xf32>,
      %cst_32 = arith.constant 0.000000e+00 : f32
      %51 = vector.broadcast %cst_32 : f32 to vector<32x1xf32>
      %c0_33 = arith.constant 0 : index
      %c0_34 = arith.constant 0 : index
      %52 = vector.load %arg12[%c0_33, %c0_34] : memref<32x1xf32, #tpu.memory_space<vmem>>, vector<32x1xf32>
      tpu.vector_store %arg12[%c0_33, %c0_34], %51 {strides = array<i32>} : memref<32x1xf32, #tpu.memory_space<vmem>>, vector<32x1xf32>,
      %cst_35 = arith.constant 0.000000e+00 : f32
      %53 = vector.broadcast %cst_35 : f32 to vector<32x32xf32>
      %c0_36 = arith.constant 0 : index
      %c0_37 = arith.constant 0 : index
      %54 = vector.load %arg13[%c0_36, %c0_37] : memref<32x32xf32, #tpu.memory_space<vmem>>, vector<32x32xf32>
      tpu.vector_store %arg13[%c0_36, %c0_37], %53 {strides = array<i32>} : memref<32x32xf32, #tpu.memory_space<vmem>>, vector<32x32xf32>,
    } else {
    }
    %c0 = arith.constant 0 : index
    %c0_1 = arith.constant 0 : index
    %3 = vector.load %arg2[%c0, %c0_1] : memref<32x1xf32, #tpu.memory_space<vmem>>, vector<32x1xf32>
    %c0_2 = arith.constant 0 : index
    %c0_3 = arith.constant 0 : index
    %4 = vector.load %arg3[%c0_2, %c0_3] : memref<1x32xf32, #tpu.memory_space<vmem>>, vector<1x32xf32>
    %5 = vector.broadcast %3 : vector<32x1xf32> to vector<32x32xf32>
    %6 = vector.broadcast %4 : vector<1x32xf32> to vector<32x32xf32>
    %7 = arith.addf %5, %6 : vector<32x32xf32>
    %cst = arith.constant 0.000000e+00 : f32
    %8 = vector.broadcast %cst : f32 to vector<32x32xf32>
    %9 = arith.cmpf ogt, %7, %8 : vector<32x32xf32>
    %cst_4 = arith.constant 2.000000e-01 : f32
    %10 = vector.broadcast %cst_4 : f32 to vector<32x32xf32>
    %11 = arith.mulf %10, %7 : vector<32x32xf32>
    %12 = arith.select %9, %7, %11 : vector<32x32xi1>, vector<32x32xf32>
    %c0_5 = arith.constant 0 : index
    %c0_6 = arith.constant 0 : index
    %13 = vector.load %arg4[%c0_5, %c0_6] : memref<32x32xi8, #tpu.memory_space<vmem>>, vector<32x32xi8>
    %c0_i8 = arith.constant 0 : i8
    %14 = vector.broadcast %c0_i8 : i8 to vector<32x32xi8>
    %15 = arith.cmpi ne, %13, %14 : vector<32x32xi8>
    %cst_7 = arith.constant -1.000000e+30 : f32
    %16 = vector.broadcast %cst_7 : f32 to vector<32x32xf32>
    %17 = arith.select %15, %12, %16 : vector<32x32xi1>, vector<32x32xf32>
    %c0_8 = arith.constant 0 : index
    %c0_9 = arith.constant 0 : index
    %18 = vector.load %arg11[%c0_8, %c0_9] : memref<32x1xf32, #tpu.memory_space<vmem>>, vector<32x1xf32>
    %cst_10 = arith.constant dense<0xFF800000> : vector<32xf32>
    %19 = vector.multi_reduction <maximumf>, %17, %cst_10 [1] : vector<32x32xf32> to vector<32xf32>
    %20 = vector.shape_cast %19 : vector<32xf32> to vector<32x1xf32>
    %21 = arith.maximumf %18, %20 : vector<32x1xf32>
    %c0_11 = arith.constant 0 : index
    %c0_12 = arith.constant 0 : index
    %22 = vector.load %arg11[%c0_11, %c0_12] : memref<32x1xf32, #tpu.memory_space<vmem>>, vector<32x1xf32>
    %23 = arith.subf %22, %21 : vector<32x1xf32>
    %24 = math.exp %23 : vector<32x1xf32>
    %25 = vector.broadcast %21 : vector<32x1xf32> to vector<32x32xf32>
    %26 = arith.subf %17, %25 : vector<32x32xf32>
    %27 = math.exp %26 : vector<32x32xf32>
    %28 = arith.extui %15 : vector<32x32xi1> to vector<32x32xi32>
    %29 = arith.sitofp %28 : vector<32x32xi32> to vector<32x32xf32>
    %30 = arith.mulf %27, %29 : vector<32x32xf32>
    %c0_13 = arith.constant 0 : index
    %c0_14 = arith.constant 0 : index
    %31 = vector.load %arg12[%c0_13, %c0_14] : memref<32x1xf32, #tpu.memory_space<vmem>>, vector<32x1xf32>
    %32 = arith.mulf %24, %31 : vector<32x1xf32>
    %cst_15 = arith.constant dense<0.000000e+00> : vector<32xf32>
    %33 = vector.multi_reduction <add>, %30, %cst_15 [1] : vector<32x32xf32> to vector<32xf32>
    %34 = vector.shape_cast %33 : vector<32xf32> to vector<32x1xf32>
    %35 = arith.addf %32, %34 : vector<32x1xf32>
    %c0_16 = arith.constant 0 : index
    %c0_17 = arith.constant 0 : index
    %36 = vector.load %arg12[%c0_16, %c0_17] : memref<32x1xf32, #tpu.memory_space<vmem>>, vector<32x1xf32>
    tpu.vector_store %arg12[%c0_16, %c0_17], %35 {strides = array<i32>} : memref<32x1xf32, #tpu.memory_space<vmem>>, vector<32x1xf32>,
    %c0_18 = arith.constant 0 : index
    %c0_19 = arith.constant 0 : index
    %37 = vector.load %arg13[%c0_18, %c0_19] : memref<32x32xf32, #tpu.memory_space<vmem>>, vector<32x32xf32>
    %38 = vector.broadcast %24 : vector<32x1xf32> to vector<32x32xf32>
    %39 = arith.mulf %38, %37 : vector<32x32xf32>
    %40 = arith.truncf %30 : vector<32x32xf32> to vector<32x32xbf16>
    %c0_20 = arith.constant 0 : index
    %c0_21 = arith.constant 0 : index
    %41 = vector.load %arg5[%c0_20, %c0_21] : memref<32x32xbf16, #tpu.memory_space<vmem>>, vector<32x32xbf16>
    %cst_22 = arith.constant dense<0.000000e+00> : vector<32x32xf32>
    %42 = tpu.matmul %40, %41, %cst_22 {dimension_numbers = #tpu.dot_dimension_numbers<[1], [0], [0], [1], [0, 0, 1, 1], [], []>} : vector<32x32xbf16>, vector<32x32xbf16>, vector<32x32xf32> -> vector<32x32xf32>
    %43 = arith.addf %39, %42 : vector<32x32xf32>
    %c0_23 = arith.constant 0 : index
    %c0_24 = arith.constant 0 : index
    %44 = vector.load %arg13[%c0_23, %c0_24] : memref<32x32xf32, #tpu.memory_space<vmem>>, vector<32x32xf32>
    tpu.vector_store %arg13[%c0_23, %c0_24], %43 {strides = array<i32>} : memref<32x32xf32, #tpu.memory_space<vmem>>, vector<32x32xf32>,
    %c0_25 = arith.constant 0 : index
    %c0_26 = arith.constant 0 : index
    %45 = vector.load %arg11[%c0_25, %c0_26] : memref<32x1xf32, #tpu.memory_space<vmem>>, vector<32x1xf32>
    tpu.vector_store %arg11[%c0_25, %c0_26], %21 {strides = array<i32>} : memref<32x1xf32, #tpu.memory_space<vmem>>, vector<32x1xf32>,
    %c0_i32_27 = arith.constant 0 : i32
    %46 = arith.cmpi eq, %arg1, %c0_i32_27 : i32
    %47 = arith.extui %46 : i1 to i32
    %c0_i32_28 = arith.constant 0 : i32
    %48 = arith.cmpi ne, %47, %c0_i32_28 : i32
    scf.if %48 {
      %c0_29 = arith.constant 0 : index
      %c0_30 = arith.constant 0 : index
      %49 = vector.load %arg13[%c0_29, %c0_30] : memref<32x32xf32, #tpu.memory_space<vmem>>, vector<32x32xf32>
      %c0_31 = arith.constant 0 : index
      %c0_32 = arith.constant 0 : index
      %50 = vector.load %arg12[%c0_31, %c0_32] : memref<32x1xf32, #tpu.memory_space<vmem>>, vector<32x1xf32>
      %51 = tpu.reciprocal %50 {approx = true} : vector<32x1xf32> -> vector<32x1xf32>
      %52 = vector.broadcast %51 : vector<32x1xf32> to vector<32x32xf32>
      %53 = arith.mulf %49, %52 : vector<32x32xf32>
      %c0_33 = arith.constant 0 : index
      %c0_34 = arith.constant 0 : index
      %54 = vector.load %arg7[%c0_33, %c0_34] : memref<1x32xf32, #tpu.memory_space<vmem>>, vector<1x32xf32>
      %55 = vector.broadcast %54 : vector<1x32xf32> to vector<32x32xf32>
      %56 = arith.addf %53, %55 : vector<32x32xf32>
      %c0_35 = arith.constant 0 : index
      %c0_36 = arith.constant 0 : index
      %57 = vector.load %arg6[%c0_35, %c0_36] : memref<32x32xbf16, #tpu.memory_space<vmem>>, vector<32x32xbf16>
      %58 = arith.extf %57 : vector<32x32xbf16> to vector<32x32xf32>
      %59 = arith.addf %56, %58 : vector<32x32xf32>
      %c0_37 = arith.constant 0 : index
      %c0_38 = arith.constant 0 : index
      %60 = vector.load %arg8[%c0_37, %c0_38] : memref<1x32xf32, #tpu.memory_space<vmem>>, vector<1x32xf32>
      %c0_39 = arith.constant 0 : index
      %c0_40 = arith.constant 0 : index
      %61 = vector.load %arg9[%c0_39, %c0_40] : memref<1x32xf32, #tpu.memory_space<vmem>>, vector<1x32xf32>
      %cst_41 = arith.constant dense<0.000000e+00> : vector<32xf32>
      %62 = vector.multi_reduction <add>, %59, %cst_41 [1] : vector<32x32xf32> to vector<32xf32>
      %63 = vector.shape_cast %62 : vector<32xf32> to vector<32x1xf32>
      %cst_42 = arith.constant 3.200000e+01 : f32
      %64 = vector.broadcast %cst_42 : f32 to vector<32x1xf32>
      %65 = arith.divf %63, %64 : vector<32x1xf32>
      %66 = vector.broadcast %65 : vector<32x1xf32> to vector<32x32xf32>
      %67 = arith.subf %59, %66 : vector<32x32xf32>
      %68 = arith.mulf %67, %67 : vector<32x32xf32>
      %cst_43 = arith.constant dense<0.000000e+00> : vector<32xf32>
      %69 = vector.multi_reduction <add>, %68, %cst_43 [1] : vector<32x32xf32> to vector<32xf32>
      %70 = vector.shape_cast %69 : vector<32xf32> to vector<32x1xf32>
      %cst_44 = arith.constant 3.200000e+01 : f32
      %71 = vector.broadcast %cst_44 : f32 to vector<32x1xf32>
      %72 = arith.divf %70, %71 : vector<32x1xf32>
      %73 = vector.broadcast %65 : vector<32x1xf32> to vector<32x32xf32>
      %74 = arith.subf %59, %73 : vector<32x32xf32>
      %cst_45 = arith.constant 9.99999974E-6 : f32
      %75 = vector.broadcast %cst_45 : f32 to vector<32x1xf32>
      %76 = arith.addf %72, %75 : vector<32x1xf32>
      %77 = math.rsqrt %76 : vector<32x1xf32>
      %78 = vector.broadcast %77 : vector<32x1xf32> to vector<32x32xf32>
      %79 = arith.mulf %74, %78 : vector<32x32xf32>
      %80 = vector.broadcast %60 : vector<1x32xf32> to vector<32x32xf32>
      %81 = arith.mulf %79, %80 : vector<32x32xf32>
      %82 = vector.broadcast %61 : vector<1x32xf32> to vector<32x32xf32>
      %83 = arith.addf %81, %82 : vector<32x32xf32>
      %84 = arith.truncf %83 : vector<32x32xf32> to vector<32x32xbf16>
      %c0_46 = arith.constant 0 : index
      %c0_47 = arith.constant 0 : index
      %85 = vector.load %arg10[%c0_46, %c0_47] : memref<32x32xbf16, #tpu.memory_space<vmem>>, vector<32x32xbf16>
      tpu.vector_store %arg10[%c0_46, %c0_47], %84 {strides = array<i32>} : memref<32x32xbf16, #tpu.memory_space<vmem>>, vector<32x32xbf16>,
    } else {
    }
    return
  }
  func.func @transform_0(%arg0: i32, %arg1: i32) -> (i32, i32) {
    %c0_i32 = arith.constant 0 : i32
    %c0_i32_0 = arith.constant 0 : i32
    return %arg0, %c0_i32 : i32, i32
  }
  func.func @transform_1(%arg0: i32, %arg1: i32) -> (i32, i32) {
    %c0_i32 = arith.constant 0 : i32
    %c0_i32_0 = arith.constant 0 : i32
    return %c0_i32, %arg1 : i32, i32
  }
  func.func @transform_2(%arg0: i32, %arg1: i32) -> (i32, i32) {
    %c0_i32 = arith.constant 0 : i32
    return %arg0, %arg1 : i32, i32
  }
  func.func @transform_3(%arg0: i32, %arg1: i32) -> (i32, i32) {
    %c0_i32 = arith.constant 0 : i32
    %c0_i32_0 = arith.constant 0 : i32
    return %arg1, %c0_i32 : i32, i32
  }
  func.func @transform_4(%arg0: i32, %arg1: i32) -> (i32, i32) {
    %c0_i32 = arith.constant 0 : i32
    %c0_i32_0 = arith.constant 0 : i32
    return %arg0, %c0_i32 : i32, i32
  }
  func.func @transform_5(%arg0: i32, %arg1: i32) -> (i32, i32) {
    %c0_i32 = arith.constant 0 : i32
    %c0_i32_0 = arith.constant 0 : i32
    %c0_i32_1 = arith.constant 0 : i32
    return %c0_i32, %c0_i32_0 : i32, i32
  }
  func.func @transform_6(%arg0: i32, %arg1: i32) -> (i32, i32) {
    %c0_i32 = arith.constant 0 : i32
    %c0_i32_0 = arith.constant 0 : i32
    %c0_i32_1 = arith.constant 0 : i32
    return %c0_i32, %c0_i32_0 : i32, i32
  }
  func.func @transform_7(%arg0: i32, %arg1: i32) -> (i32, i32) {
    %c0_i32 = arith.constant 0 : i32
    %c0_i32_0 = arith.constant 0 : i32
    %c0_i32_1 = arith.constant 0 : i32
    return %c0_i32, %c0_i32_0 : i32, i32
  }
  func.func @transform_8(%arg0: i32, %arg1: i32) -> (i32, i32) {
    %c0_i32 = arith.constant 0 : i32
    %c0_i32_0 = arith.constant 0 : i32
    return %arg0, %c0_i32 : i32, i32
  }
}

</mosaic_0001>

<llo_original>
// kernel: cg_forward.13
$region0: #{cg_forward.13}
  #allocation0 [shape = 'u32[]', space=smem, size = 0x4, offset = 0x4, fixed_abs, tag = 'smem constant byte address 0x4 - core index']
  #allocation1 [shape = 'u32[72,128]{1,0:T(1,128)}', space=vmem, size = 0x9000, scoped, tag = 'internal scratch']
  %s0 = inlined_call_operand.vmem [shape: bf16[2,16,32], index: 0, kind: input, shape index: {}]
  %s1 = inlined_call_operand.vmem [shape: f32[16,32], index: 1, kind: input, shape index: {}]
  %s2 = inlined_call_operand.vmem [shape: bf16[32,32], index: 2, kind: input, shape index: {}]
  %s3 = inlined_call_operand.vmem [shape: f32[1,32], index: 3, kind: input, shape index: {}]
  %s4 = inlined_call_operand.vmem [shape: bf16[2,16,32], index: 4, kind: output, shape index: {}]
  %s5 = sld [smem:[#allocation0]]
  $region49: #{cg_forward.13} parent=0
    _
  %s7 = ssub.s32 1, %s5
  %s8 = scalar_select 0, %s7, %s5
  loop: start=0, step=1, limit=4
  $region2: #{cg_forward.13} parent=0 // loop_pre_header
    _
  $region3: #{cg_forward.13} parent=0 // loop_header
    %s10 = sphi 0, %s14
    %p11 = scmp.ge.s32.totalorder %s10, 4
    %s17 = sphi 0, %s29
    %s18 = sphi 0, %s25
    %s19 = sphi 0, %s17
    %s20 = sphi 0, %s18
    %s21 = sphi 0, %s19
    %s22 = sphi 0, %s20
    %s34 = sphi 0, %s36
    %s37 = sphi 0, %s34
    %s38 = sphi 0, %s37
    %s54 = sphi 0, %s38
    %s60 = sphi 0, %s62
    %s63 = sphi 0, %s60
    %s64 = sphi 0, %s63
    %s80 = sphi 0, %s64
    %s84 = sphi 0, %s84
    %s86 = sphi 0, %s84
    %s87 = sphi 0, %s86
    %s101 = sphi 0, %s87
    %s105 = sphi 0, %s105
    %s107 = sphi 0, %s105
    %s108 = sphi 0, %s107
    %s122 = sphi 0, %s108
    %s130 = sphi 0, %s132
    %s133 = sphi 0, %s130
    %s134 = sphi 0, %s133
    %s150 = sphi 0, %s134
  $region4: #{cg_forward.13} parent=0 // loop_header_branch
    %13 = sbr.rel (%p11) target = $region8
  $region5: #{cg_forward.13} parent=0 // loop_body
    %s15 = ssub.s32 %s10, 1
    %s16 = ssub.s32 %s10, 2
    %s23 = sadd.s32 1, %s18
    %p24 = scmp.ge.s32.totalorder %s23, 1
    %s25 = scalar_select %p24, 0, %s23
    %s26 = sadd.s32 1, %s17
    %s27 = scalar_select %p24, %s26, %s17
    %p28 = scmp.ge.s32.totalorder %s27, 2
    %s29 = scalar_select %p28, 0, %s27
    %s30 = ssub.s32 %s17, %s29
    %s31 = ssub.s32 %s18, %s25
    %s32 = sor.u32 %s30, %s31
    %p33 = scmp.eq.s32.totalorder %s32, 0
    %s35 = sadd.s32 %s34, 1
    %s36 = scalar_select %p33, %s34, %s35
    %p39 = pneg %p33
    %p40 = scmp.eq.s32.totalorder %s10, 1
    %p41 = por %p39, %p40
    %p42 = scmp.ne.s32.totalorder %s34, %s37
    %p43 = scmp.eq.s32.totalorder %s10, 0
    %p44 = por %p42, %p43
    %p45 = scmp.ne.s32.totalorder %s34, %s37
    %p46 = scmp.eq.s32.totalorder %s15, 1
    %p47 = por %p45, %p46
    %p48 = scmp.ne.s32.totalorder %s37, %s38
    %p49 = scmp.eq.s32.totalorder %s15, 0
    %p50 = por %p48, %p49
    %p51 = scmp.ne.s32.totalorder %s37, %s38
    %p52 = scmp.eq.s32.totalorder %s16, 1
    %p53 = por %p51, %p52
    %p55 = scmp.ne.s32.totalorder %s38, %s54
    %p56 = scmp.eq.s32.totalorder %s16, 0
    %p57 = por %p55, %p56
    %s58 = ssub.s32 %s18, %s25
    %p59 = scmp.eq.s32.totalorder %s58, 0
    %s61 = sadd.s32 %s60, 1
    %s62 = scalar_select %p59, %s60, %s61
    %p65 = pneg %p59
    %p66 = scmp.eq.s32.totalorder %s10, 1
    %p67 = por %p65, %p66
    %p68 = scmp.ne.s32.totalorder %s60, %s63
    %p69 = scmp.eq.s32.totalorder %s10, 0
    %p70 = por %p68, %p69
    %p71 = scmp.ne.s32.totalorder %s60, %s63
    %p72 = scmp.eq.s32.totalorder %s15, 1
    %p73 = por %p71, %p72
    %p74 = scmp.ne.s32.totalorder %s63, %s64
    %p75 = scmp.eq.s32.totalorder %s15, 0
    %p76 = por %p74, %p75
    %p77 = scmp.ne.s32.totalorder %s63, %s64
    %p78 = scmp.eq.s32.totalorder %s16, 1
    %p79 = por %p77, %p78
    %p81 = scmp.ne.s32.totalorder %s64, %s80
    %p82 = scmp.eq.s32.totalorder %s16, 0
    %p83 = por %p81, %p82
    %s85 = sadd.s32 %s84, 1
    %p88 = scmp.eq.s32.totalorder %s10, 1
    %p89 = scmp.ne.s32.totalorder %s84, %s86
    %p90 = scmp.eq.s32.totalorder %s10, 0
    %p91 = por %p89, %p90
    %p92 = scmp.ne.s32.totalorder %s84, %s86
    %p93 = scmp.eq.s32.totalorder %s15, 1
    %p94 = por %p92, %p93
    %p95 = scmp.ne.s32.totalorder %s86, %s87
    %p96 = scmp.eq.s32.totalorder %s15, 0
    %p97 = por %p95, %p96
    %p98 = scmp.ne.s32.totalorder %s86, %s87
    %p99 = scmp.eq.s32.totalorder %s16, 1
    %p100 = por %p98, %p99
    %p102 = scmp.ne.s32.totalorder %s87, %s101
    %p103 = scmp.eq.s32.totalorder %s16, 0
    %p104 = por %p102, %p103
    %s106 = sadd.s32 %s105, 1
    %p109 = scmp.eq.s32.totalorder %s10, 1
    %p110 = scmp.ne.s32.totalorder %s105, %s107
    %p111 = scmp.eq.s32.totalorder %s10, 0
    %p112 = por %p110, %p111
    %p113 = scmp.ne.s32.totalorder %s105, %s107
    %p114 = scmp.eq.s32.totalorder %s15, 1
    %p115 = por %p113, %p114
    %p116 = scmp.ne.s32.totalorder %s107, %s108
    %p117 = scmp.eq.s32.totalorder %s15, 0
    %p118 = por %p116, %p117
    %p119 = scmp.ne.s32.totalorder %s107, %s108
    %p120 = scmp.eq.s32.totalorder %s16, 1
    %p121 = por %p119, %p120
    %p123 = scmp.ne.s32.totalorder %s108, %s122
    %p124 = scmp.eq.s32.totalorder %s16, 0
    %p125 = por %p123, %p124
    %s126 = ssub.s32 %s17, %s29
    %s127 = ssub.s32 %s18, %s25
    %s128 = sor.u32 %s126, %s127
    %p129 = scmp.eq.s32.totalorder %s128, 0
    %s131 = sadd.s32 %s130, 1
    %s132 = scalar_select %p129, %s130, %s131
    %p135 = pneg %p129
    %p136 = scmp.eq.s32.totalorder %s10, 1
    %p137 = por %p135, %p136
    %p138 = scmp.ne.s32.totalorder %s130, %s133
    %p139 = scmp.eq.s32.totalorder %s10, 0
    %p140 = por %p138, %p139
    %p141 = scmp.ne.s32.totalorder %s130, %s133
    %p142 = scmp.eq.s32.totalorder %s15, 1
    %p143 = por %p141, %p142
    %p144 = scmp.ne.s32.totalorder %s133, %s134
    %p145 = scmp.eq.s32.totalorder %s15, 0
    %p146 = por %p144, %p145
    %p147 = scmp.ne.s32.totalorder %s133, %s134
    %p148 = scmp.eq.s32.totalorder %s16, 1
    %p149 = por %p147, %p148
    %p151 = scmp.ne.s32.totalorder %s134, %s150
    %p152 = scmp.eq.s32.totalorder %s16, 0
    %p153 = por %p151, %p152
    %p154 = scmp.le.s32.totalorder 1, %s10
    %p155 = scmp.lt.s32.totalorder %s10, 3
    %p156 = pnand %p154, %p155
    %p157 = pneg %p156
    // Predicated region
    $region9: #{cg_forward.13} parent=5 // pred_check
      _
    $region10: #{cg_forward.13} parent=5 // pred_check_branch
      %159 = sbr.rel (%p156) target = $region12
    $region11: #{cg_forward.13} parent=5 // pred_region
      %s160 = ssub.s32 %s10, 1
      // Predicated region
      $region13: #{cg_forward.13} parent=11 // pred_check
        %p161 = pneg %p76
      $region14: #{cg_forward.13} parent=11 // pred_check_branch
        %163 = sbr.rel (%p161) target = $region16
      $region15: #{cg_forward.13} parent=11 // pred_region
        %s164 = smul.u32 2, %s20
        %p165 = scmp.lt.s32.totalorder %s164, 1
        %s166 = scalar_select %p165, %s164, 1
        %s167 = smul.addr %s166, 8
        %s168 = scalar_lea.vmem %s1, %s167
        %s169 = smul.u32 2, %s20
      $region16: #{cg_forward.13} parent=11 // pred_fallthru
        _
      // Predicated region
      $region17: #{cg_forward.13} parent=11 // pred_check
        %p170 = pneg %p97
      $region18: #{cg_forward.13} parent=11 // pred_check_branch
        %172 = sbr.rel (%p170) target = $region20
      $region19: #{cg_forward.13} parent=11 // pred_region
        _
      $region20: #{cg_forward.13} parent=11 // pred_fallthru
        _
      // Predicated region
      $region21: #{cg_forward.13} parent=11 // pred_check
        %p173 = pneg %p118
      $region22: #{cg_forward.13} parent=11 // pred_check_branch
        %175 = sbr.rel (%p173) target = $region24
      $region23: #{cg_forward.13} parent=11 // pred_region
        _
      $region24: #{cg_forward.13} parent=11 // pred_fallthru
        _
    $region12: #{cg_forward.13} parent=5 // pred_fallthru
      _
    %p176 = scmp.lt.s32.totalorder %s10, 2
    // Predicated region
    $region25: #{cg_forward.13} parent=5 // pred_check
      %p177 = pneg %p176
    $region26: #{cg_forward.13} parent=5 // pred_check_branch
      %179 = sbr.rel (%p177) target = $region28
    $region27: #{cg_forward.13} parent=5 // pred_region
      // Predicated region
      $region29: #{cg_forward.13} parent=27 // pred_check
        %p180 = pneg %p44
      $region30: #{cg_forward.13} parent=27 // pred_check_branch
        %182 = sbr.rel (%p180) target = $region32
      $region31: #{cg_forward.13} parent=27 // pred_region
        %s183 = smul.u32 2, %s18
        %p184 = scmp.lt.s32.totalorder %s17, 1
        %s185 = scalar_select %p184, %s17, 1
        %p186 = scmp.lt.s32.totalorder %s183, 1
        %s187 = scalar_select %p186, %s183, 1
        %s188 = smul.addr %s185, 2
        %s189 = sadd.s32 %s187, %s188
        %s190 = smul.addr %s189, 4
        %s191 = scalar_lea.vmem %s0, %s190
        %s192 = smul.u32 2, %s18
      $region32: #{cg_forward.13} parent=27 // pred_fallthru
        _
    $region28: #{cg_forward.13} parent=5 // pred_fallthru
      _
    %p193 = scmp.le.s32.totalorder 1, %s10
    %p194 = scmp.lt.s32.totalorder %s10, 3
    %p195 = pnand %p193, %p194
    %p196 = pneg %p195
    // Predicated region
    $region33: #{cg_forward.13} parent=5 // pred_check
      _
    $region34: #{cg_forward.13} parent=5 // pred_check_branch
      %198 = sbr.rel (%p195) target = $region36
    $region35: #{cg_forward.13} parent=5 // pred_region
      %s199 = ssub.s32 %s10, 1
      %s200 = smul.u32 2, %s20
      %p201 = scmp.lt.s32.totalorder %s19, 1
      %s202 = scalar_select %p201, %s19, 1
      %p203 = scmp.lt.s32.totalorder %s200, 1
      %s204 = scalar_select %p203, %s200, 1
      %s205 = smul.addr %s202, 2
      %s206 = sadd.s32 %s204, %s205
      %s207 = smul.addr %s206, 4
      %s208 = scalar_lea.vmem %s0, %s207
      %p209 = pneg %p50
      %p210 = pneg %p47
      %s211 = smul.u32 2, %s20
      %p212 = scmp.lt.s32.totalorder %s211, 1
      %s213 = scalar_select %p212, %s211, 1
      %s214 = smul.addr %s213, 8
      %s215 = scalar_lea.vmem %s1, %s214
      %p216 = pneg %p76
      %p217 = pneg %p73
      %p218 = pneg %p97
      %p219 = pneg %p94
      %p220 = pneg %p118
      %p221 = pneg %p115
      %p222 = pneg %p146
      %p223 = pneg %p143
      %s224 = smul.u32 2, %s20
      %p225 = scmp.lt.s32.totalorder %s19, 1
      %s226 = scalar_select %p225, %s19, 1
      %p227 = scmp.lt.s32.totalorder %s224, 1
      %s228 = scalar_select %p227, %s224, 1
      %s229 = smul.addr %s226, 2
      %s230 = sadd.s32 %s228, %s229
      %s231 = smul.addr %s230, 4
      %s232 = scalar_lea.vmem %s4, %s231
      %s233 = smul.u32 2, %s20
      %p234 = scmp.lt.s32.totalorder %s19, 1
      %s235 = scalar_select %p234, %s19, 1
      %p236 = scmp.lt.s32.totalorder %s233, 1
      %s237 = scalar_select %p236, %s233, 1
      %s238 = smul.addr %s235, 2
      %s239 = sadd.s32 %s237, %s238
      %s240 = smul.addr %s239, 4
      %s241 = scalar_lea.vmem %s0, %s240
      %s242 = smul.u32 2, %s20
      %s243 = smul.u32 2, %s20
      %p244 = scmp.lt.s32.totalorder %s243, 1
      %s245 = scalar_select %p244, %s243, 1
      %s246 = smul.addr %s245, 8
      %s247 = scalar_lea.vmem %s1, %s246
      %s248 = smul.u32 2, %s20
      %s249 = smul.u32 2, %s20
      %p250 = scmp.lt.s32.totalorder %s19, 1
      %s251 = scalar_select %p250, %s19, 1
      %p252 = scmp.lt.s32.totalorder %s249, 1
      %s253 = scalar_select %p252, %s249, 1
      %s254 = smul.addr %s251, 2
      %s255 = sadd.s32 %s253, %s254
      %s256 = smul.addr %s255, 4
      %s257 = scalar_lea.vmem %s4, %s256
      %s258 = smul.u32 2, %s20
      %v260 = vld [vmem:[%s241] sm:$0xf]
      %v261 = vld [vmem:[%s241 + $0x4] sm:$0xf]
      %v262 = vunpack.c.l.bf16 %v260
      %v263 = vunpack.c.l.bf16 %v261
      %v264 = vld [vmem:[%s247] sm:$0xff]
      %v265 = vld [vmem:[%s247 + $0x8] sm:$0xff]
      %v266 = vadd.f32 %v262, %v264
      %v267 = vadd.f32 %v263, %v265
      %v268 = vpack.c.bf16 %v267, %v266
      %v269 = vld [vmem:[%s2] sm:$0xf]
      %v270 = vld [vmem:[%s2 + $0x4] sm:$0xf]
      %v271 = vld [vmem:[%s2 + $0x8] sm:$0xf]
      %v272 = vld [vmem:[%s2 + $0xc] sm:$0xf]
      %v273 = vld [vmem:[%s3] sm:$0x1]
      %v275 = vperm.slane %v273, 0
      %v281 = vunpack.c.l.b16 %v269
      %v282 = vunpack.c.l.b16 %v270
      %v283 = vunpack.c.l.b16 %v271
      %v284 = vunpack.c.l.b16 %v272
      %v285 = vpack.c.b16 %v282, %v281
      %v286 = vpack.c.b16 %v284, %v283
      %vm289 = vcmask 261120
      %v291 = vsel %vm289, %v268, 0
      %293 = vmatpush.bf16.msra.mxu0 0
      %294 = vmatpush.bf16.msra.mxu0 0
      %295 = vmatpush.bf16.msra.mxu0 0
      %296 = vmatpush.bf16.msra.mxu0 0
      %297 = vmatpush.bf16.msra.mxu0 0
      %298 = vmatpush.bf16.msra.mxu0 0
      %299 = vmatpush.bf16.msra.mxu0 %v286
      %300 = vmatpush.bf16.msra.mxu0 %v285
      %301 = vmatmul.bf16.gmra.mxu0 %v291
      %v302 = vpop.f32.mrf.mxu0
      %v303 = vadd.f32 %v275, %v302
      %v304 = vpop.f32.mrf.mxu0
      %v305 = vadd.f32 %v275, %v304
      %306 = vdwg.mxu0
      %v307 = vadd.f32 %v303, %v266
      %v308 = vadd.f32 %v305, %v267
      %v309 = vpack.c.bf16 %v307, %v307
      %v310 = vpack.c.bf16 %v308, %v308
      %vm311 = vcmask 257024
      %312 = vst.msk [vmem:[%s257] sm:$0xf] %vm311, %v309
      %313 = vst.msk [vmem:[%s257 + $0x4] sm:$0xf] %vm311, %v310
      %s314 = smul.u32 2, %s20
      %p315 = scmp.lt.s32.totalorder %s19, 1
      %s316 = scalar_select %p315, %s19, 1
      %p317 = scmp.lt.s32.totalorder %s314, 1
      %s318 = scalar_select %p317, %s314, 1
      %s319 = smul.addr %s316, 2
      %s320 = sadd.s32 %s318, %s319
      %s321 = smul.addr %s320, 4
      %s322 = scalar_lea.vmem %s4, %s321
      // Predicated region
      $region37: #{cg_forward.13} parent=35 // pred_check
        %p323 = pneg %p143
      $region38: #{cg_forward.13} parent=35 // pred_check_branch
        %325 = sbr.rel (%p323) target = $region40
      $region39: #{cg_forward.13} parent=35 // pred_region
        %s326 = smul.u32 2, %s20
      $region40: #{cg_forward.13} parent=35 // pred_fallthru
        _
    $region36: #{cg_forward.13} parent=5 // pred_fallthru
      _
    %p327 = scmp.le.s32.totalorder 2, %s10
    // Predicated region
    $region41: #{cg_forward.13} parent=5 // pred_check
      %p328 = pneg %p327
    $region42: #{cg_forward.13} parent=5 // pred_check_branch
      %330 = sbr.rel (%p328) target = $region44
    $region43: #{cg_forward.13} parent=5 // pred_region
      %s331 = ssub.s32 %s10, 2
      // Predicated region
      $region45: #{cg_forward.13} parent=43 // pred_check
        %p332 = pneg %p149
      $region46: #{cg_forward.13} parent=43 // pred_check_branch
        %334 = sbr.rel (%p332) target = $region48
      $region47: #{cg_forward.13} parent=43 // pred_region
        %s335 = smul.u32 2, %s22
        %p336 = scmp.lt.s32.totalorder %s21, 1
        %s337 = scalar_select %p336, %s21, 1
        %p338 = scmp.lt.s32.totalorder %s335, 1
        %s339 = scalar_select %p338, %s335, 1
        %s340 = smul.addr %s337, 2
        %s341 = sadd.s32 %s339, %s340
        %s342 = smul.addr %s341, 4
        %s343 = scalar_lea.vmem %s4, %s342
      $region48: #{cg_forward.13} parent=43 // pred_fallthru
        _
    $region44: #{cg_forward.13} parent=5 // pred_fallthru
      _
  $region6: #{cg_forward.13} parent=0 // loop_footer
    %s14 = sadd.s32 1, %s10
  $region7: #{cg_forward.13} parent=0 // loop_footer_branch
    %9 = sbr.rel target = $region3
  $region8: #{cg_forward.13} parent=0 // loop_exit
    _

// kernel: cg_forward.14
$region0: #{cg_forward.14}
  #allocation0 [shape = 'u32[]', space=smem, size = 0x4, offset = 0x4, fixed_abs, tag = 'smem constant byte address 0x4 - core index']
  #allocation1 [shape = 'u32[72,128]{1,0:T(1,128)}', space=vmem, size = 0x9000, scoped, tag = 'internal scratch']
  %s0 = inlined_call_operand.vmem [shape: bf16[32,32], index: 0, kind: input, shape index: {}]
  %s1 = inlined_call_operand.vmem [shape: bf16[32,32], index: 1, kind: input, shape index: {}]
  %s2 = inlined_call_operand.vmem [shape: f32[1,32], index: 2, kind: input, shape index: {}]
  %s3 = inlined_call_operand.vmem [shape: f32[1,32], index: 3, kind: input, shape index: {}]
  %s4 = inlined_call_operand.vmem [shape: bf16[32,32], index: 4, kind: output, shape index: {0}]
  %s5 = inlined_call_operand.vmem [shape: f32[32,1], index: 5, kind: output, shape index: {1}]
  %s6 = inlined_call_operand.vmem [shape: f32[32,1], index: 6, kind: output, shape index: {2}]
  %7 = xla_tuple %s4, %s5, %s6
  %s8 = sld [smem:[#allocation0]]
  $region42: #{cg_forward.14} parent=0
    _
  %s10 = ssub.s32 1, %s8
  %s11 = scalar_select 0, %s10, %s8
  // Predicated region
  $region2: #{cg_forward.14} parent=0 // pred_check
    _
  $region3: #{cg_forward.14} parent=0 // pred_check_branch
    %13 = sbr.rel (0) target = $region5
  $region4: #{cg_forward.14} parent=0 // pred_region
    _
  $region5: #{cg_forward.14} parent=0 // pred_fallthru
    _
  // Predicated region
  $region6: #{cg_forward.14} parent=0 // pred_check
    _
  $region7: #{cg_forward.14} parent=0 // pred_check_branch
    %15 = sbr.rel (0) target = $region9
  $region8: #{cg_forward.14} parent=0 // pred_region
    _
  $region9: #{cg_forward.14} parent=0 // pred_fallthru
    _
  // Predicated region
  $region10: #{cg_forward.14} parent=0 // pred_check
    _
  $region11: #{cg_forward.14} parent=0 // pred_check_branch
    %17 = sbr.rel (0) target = $region13
  $region12: #{cg_forward.14} parent=0 // pred_region
    _
  $region13: #{cg_forward.14} parent=0 // pred_fallthru
    _
  // Predicated region
  $region14: #{cg_forward.14} parent=0 // pred_check
    _
  $region15: #{cg_forward.14} parent=0 // pred_check_branch
    %19 = sbr.rel (0) target = $region17
  $region16: #{cg_forward.14} parent=0 // pred_region
    _
  $region17: #{cg_forward.14} parent=0 // pred_fallthru
    _
  %v21 = vld [vmem:[%s0] sm:$0xf]
  %v22 = vld [vmem:[%s0 + $0x4] sm:$0xf]
  %v23 = vld [vmem:[%s0 + $0x8] sm:$0xf]
  %v24 = vld [vmem:[%s0 + $0xc] sm:$0xf]
  %v25 = vld [vmem:[%s1] sm:$0xf]
  %v26 = vld [vmem:[%s1 + $0x4] sm:$0xf]
  %v27 = vld [vmem:[%s1 + $0x8] sm:$0xf]
  %v28 = vld [vmem:[%s1 + $0xc] sm:$0xf]
  %v33 = vunpack.c.l.b16 %v21
  %v34 = vunpack.c.l.b16 %v22
  %v35 = vunpack.c.l.b16 %v23
  %v36 = vunpack.c.l.b16 %v24
  %v37 = vpack.c.b16 %v34, %v33
  %v38 = vpack.c.b16 %v36, %v35
  %v43 = vunpack.c.l.b16 %v25
  %v44 = vunpack.c.l.b16 %v26
  %v45 = vunpack.c.l.b16 %v27
  %v46 = vunpack.c.l.b16 %v28
  %v47 = vpack.c.b16 %v44, %v43
  %v48 = vpack.c.b16 %v46, %v45
  %vm51 = vcmask 261120
  %v53 = vsel %vm51, %v37, 0
  %v56 = vsel %vm51, %v38, 0
  %58 = vmatpush.bf16.msra.mxu0 0
  %59 = vmatpush.bf16.msra.mxu0 0
  %60 = vmatpush.bf16.msra.mxu0 0
  %61 = vmatpush.bf16.msra.mxu0 0
  %62 = vmatpush.bf16.msra.mxu0 0
  %63 = vmatpush.bf16.msra.mxu0 0
  %64 = vmatpush.bf16.msra.mxu0 %v48
  %65 = vmatpush.bf16.msra.mxu0 %v47
  %66 = vmatmul.bf16.gmra.mxu0 %v53
  %v67 = vpop.f32.mrf.mxu0
  %v68 = vadd.f32 0.0, %v67
  %v69 = vpop.f32.mrf.mxu0
  %v70 = vadd.f32 0.0, %v69
  %71 = vmatmul.bf16.gmra.mxu0 %v56
  %v72 = vpop.f32.mrf.mxu0
  %v73 = vadd.f32 0.0, %v72
  %v74 = vpop.f32.mrf.mxu0
  %v75 = vadd.f32 0.0, %v74
  %76 = vdwg.mxu0
  %v77 = vpack.c.bf16 %v68, %v68
  %v78 = vpack.c.bf16 %v70, %v70
  %v79 = vpack.c.bf16 %v73, %v73
  %v80 = vpack.c.bf16 %v75, %v75
  %vm81 = vcmask 257024
  %82 = vst.msk [vmem:[%s4] sm:$0xf] %vm81, %v77
  %83 = vst.msk [vmem:[%s4 + $0x4] sm:$0xf] %vm81, %v78
  %84 = vst.msk [vmem:[%s4 + $0x8] sm:$0xf] %vm81, %v79
  %85 = vst.msk [vmem:[%s4 + $0xc] sm:$0xf] %vm81, %v80
  %v86 = vld [vmem:[%s2] sm:$0x1]
  %v88 = vperm.slane %v86, 0
  %v90 = vmul.f32 %v68, %v88
  %v91 = vmul.f32 %v70, %v88
  %v92 = vmul.f32 %v73, %v88
  %v93 = vmul.f32 %v75, %v88
  %v94 = vsel %vm51, %v90, 0.0
  %95 = vadd.xlane.f32.xlu0 %v94
  %v96 = vpop.xlane.xlu0 %95
  %v97 = vsel %vm51, %v91, 0.0
  %98 = vadd.xlane.f32.xlu0 %v97
  %v99 = vpop.xlane.xlu0 %98
  %v100 = vsel %vm51, %v92, 0.0
  %101 = vadd.xlane.f32.xlu0 %v100
  %v102 = vpop.xlane.xlu0 %101
  %v103 = vsel %vm51, %v93, 0.0
  %104 = vadd.xlane.f32.xlu0 %v103
  %v105 = vpop.xlane.xlu0 %104
  %vm106 = vcmask 7168
  %107 = vst.msk [vmem:[%s5] sm:$0xff] %vm106, %v96
  %108 = vst.msk [vmem:[%s5 + $0x8] sm:$0xff] %vm106, %v99
  %109 = vst.msk [vmem:[%s5 + $0x10] sm:$0xff] %vm106, %v102
  %110 = vst.msk [vmem:[%s5 + $0x18] sm:$0xff] %vm106, %v105
  %v111 = vld [vmem:[%s3] sm:$0x1]
  %v113 = vperm.slane %v111, 0
  %v115 = vmul.f32 %v68, %v113
  %v116 = vmul.f32 %v70, %v113
  %v117 = vmul.f32 %v73, %v113
  %v118 = vmul.f32 %v75, %v113
  %v119 = vsel %vm51, %v115, 0.0
  %120 = vadd.xlane.f32.xlu0 %v119
  %v121 = vpop.xlane.xlu0 %120
  %v122 = vsel %vm51, %v116, 0.0
  %123 = vadd.xlane.f32.xlu0 %v122
  %v124 = vpop.xlane.xlu0 %123
  %v125 = vsel %vm51, %v117, 0.0
  %126 = vadd.xlane.f32.xlu0 %v125
  %v127 = vpop.xlane.xlu0 %126
  %v128 = vsel %vm51, %v118, 0.0
  %129 = vadd.xlane.f32.xlu0 %v128
  %v130 = vpop.xlane.xlu0 %129
  %131 = vst.msk [vmem:[%s6] sm:$0xff] %vm106, %v121
  %132 = vst.msk [vmem:[%s6 + $0x8] sm:$0xff] %vm106, %v124
  %133 = vst.msk [vmem:[%s6 + $0x10] sm:$0xff] %vm106, %v127
  %134 = vst.msk [vmem:[%s6 + $0x18] sm:$0xff] %vm106, %v130
  // Predicated region
  $region18: #{cg_forward.14} parent=0 // pred_check
    _
  $region19: #{cg_forward.14} parent=0 // pred_check_branch
    %136 = sbr.rel (0) target = $region21
  $region20: #{cg_forward.14} parent=0 // pred_region
    _
  $region21: #{cg_forward.14} parent=0 // pred_fallthru
    _
  // Predicated region
  $region22: #{cg_forward.14} parent=0 // pred_check
    _
  $region23: #{cg_forward.14} parent=0 // pred_check_branch
    %138 = sbr.rel (0) target = $region25
  $region24: #{cg_forward.14} parent=0 // pred_region
    _
  $region25: #{cg_forward.14} parent=0 // pred_fallthru
    _
  // Predicated region
  $region26: #{cg_forward.14} parent=0 // pred_check
    _
  $region27: #{cg_forward.14} parent=0 // pred_check_branch
    %140 = sbr.rel (0) target = $region29
  $region28: #{cg_forward.14} parent=0 // pred_region
    _
  $region29: #{cg_forward.14} parent=0 // pred_fallthru
    _
  // Predicated region
  $region30: #{cg_forward.14} parent=0 // pred_check
    _
  $region31: #{cg_forward.14} parent=0 // pred_check_branch
    %142 = sbr.rel (0) target = $region33
  $region32: #{cg_forward.14} parent=0 // pred_region
    _
  $region33: #{cg_forward.14} parent=0 // pred_fallthru
    _
  // Predicated region
  $region34: #{cg_forward.14} parent=0 // pred_check
    _
  $region35: #{cg_forward.14} parent=0 // pred_check_branch
    %144 = sbr.rel (0) target = $region37
  $region36: #{cg_forward.14} parent=0 // pred_region
    _
  $region37: #{cg_forward.14} parent=0 // pred_fallthru
    _
  // Predicated region
  $region38: #{cg_forward.14} parent=0 // pred_check
    _
  $region39: #{cg_forward.14} parent=0 // pred_check_branch
    %146 = sbr.rel (0) target = $region41
  $region40: #{cg_forward.14} parent=0 // pred_region
    _
  $region41: #{cg_forward.14} parent=0 // pred_fallthru
    _

// kernel: cg_forward.10
$region0: #{cg_forward.10}
  #allocation0 [shape = 'u32[]', space=smem, size = 0x4, offset = 0x4, fixed_abs, tag = 'smem constant byte address 0x4 - core index']
  #allocation1 [shape = 'u32[72,128]{1,0:T(1,128)}', space=vmem, size = 0x9000, scoped, tag = 'internal scratch']
  %s0 = inlined_call_operand.vmem [shape: bf16[256,32], index: 0, kind: input, shape index: {}]
  %s1 = inlined_call_operand.vmem [shape: bf16[256,32], index: 1, kind: input, shape index: {}]
  %s2 = inlined_call_operand.vmem [shape: f32[1,32], index: 2, kind: input, shape index: {}]
  %s3 = inlined_call_operand.vmem [shape: f32[1,32], index: 3, kind: input, shape index: {}]
  %s4 = inlined_call_operand.vmem [shape: bf16[32,512], index: 4, kind: input, shape index: {}]
  %s5 = inlined_call_operand.vmem [shape: f32[1,128], index: 5, kind: input, shape index: {}]
  %s6 = inlined_call_operand.vmem [shape: bf16[128,32], index: 6, kind: input, shape index: {}]
  %s7 = inlined_call_operand.vmem [shape: f32[1,32], index: 7, kind: input, shape index: {}]
  %s8 = inlined_call_operand.vmem [shape: f32[1,32], index: 8, kind: input, shape index: {}]
  %s9 = inlined_call_operand.vmem [shape: f32[1,32], index: 9, kind: input, shape index: {}]
  %s10 = inlined_call_operand.vmem [shape: f32[1,32], index: 10, kind: input, shape index: {}]
  %s11 = inlined_call_operand.vmem [shape: f32[1,32], index: 11, kind: input, shape index: {}]
  %s12 = inlined_call_operand.vmem [shape: bf16[256,32], index: 12, kind: output, shape index: {}]
  %s13 = sld [smem:[#allocation0]]
  $region81: #{cg_forward.10} parent=0
    _
  %s15 = ssub.s32 1, %s13
  %s16 = scalar_select 0, %s15, %s13
  loop: start=0, step=1, limit=10
  $region2: #{cg_forward.10} parent=0 // loop_pre_header
    _
  $region3: #{cg_forward.10} parent=0 // loop_header
    %s18 = sphi 0, %s22
    %p19 = scmp.ge.s32.totalorder %s18, 10
    %s28 = sphi 0, %s30
    %s31 = sphi 0, %s28
    %s32 = sphi 0, %s31
    %s48 = sphi 0, %s32
    %s54 = sphi 0, %s56
    %s57 = sphi 0, %s54
    %s58 = sphi 0, %s57
    %s74 = sphi 0, %s58
    %s78 = sphi 0, %s78
    %s80 = sphi 0, %s78
    %s81 = sphi 0, %s80
    %s95 = sphi 0, %s81
    %s99 = sphi 0, %s99
    %s101 = sphi 0, %s99
    %s102 = sphi 0, %s101
    %s116 = sphi 0, %s102
    %s120 = sphi 0, %s120
    %s122 = sphi 0, %s120
    %s123 = sphi 0, %s122
    %s137 = sphi 0, %s123
    %s141 = sphi 0, %s141
    %s143 = sphi 0, %s141
    %s144 = sphi 0, %s143
    %s158 = sphi 0, %s144
    %s162 = sphi 0, %s162
    %s164 = sphi 0, %s162
    %s165 = sphi 0, %s164
    %s179 = sphi 0, %s165
    %s183 = sphi 0, %s183
    %s185 = sphi 0, %s183
    %s186 = sphi 0, %s185
    %s200 = sphi 0, %s186
    %s204 = sphi 0, %s204
    %s206 = sphi 0, %s204
    %s207 = sphi 0, %s206
    %s221 = sphi 0, %s207
    %s225 = sphi 0, %s225
    %s227 = sphi 0, %s225
    %s228 = sphi 0, %s227
    %s242 = sphi 0, %s228
    %s246 = sphi 0, %s246
    %s248 = sphi 0, %s246
    %s249 = sphi 0, %s248
    %s263 = sphi 0, %s249
    %s267 = sphi 0, %s267
    %s269 = sphi 0, %s267
    %s270 = sphi 0, %s269
    %s284 = sphi 0, %s270
    %s290 = sphi 0, %s292
    %s293 = sphi 0, %s290
    %s294 = sphi 0, %s293
    %s310 = sphi 0, %s294
  $region4: #{cg_forward.10} parent=0 // loop_header_branch
    %21 = sbr.rel (%p19) target = $region8
  $region5: #{cg_forward.10} parent=0 // loop_body
    %s23 = ssub.s32 %s18, 1
    %s24 = ssub.s32 %s18, 2
    %s25 = sadd.s32 %s18, 1
    %s26 = ssub.s32 %s18, %s25
    %p27 = scmp.eq.s32.totalorder %s26, 0
    %s29 = sadd.s32 %s28, 1
    %s30 = scalar_select %p27, %s28, %s29
    %p33 = pneg %p27
    %p34 = scmp.eq.s32.totalorder %s18, 7
    %p35 = por %p33, %p34
    %p36 = scmp.ne.s32.totalorder %s28, %s31
    %p37 = scmp.eq.s32.totalorder %s18, 0
    %p38 = por %p36, %p37
    %p39 = scmp.ne.s32.totalorder %s28, %s31
    %p40 = scmp.eq.s32.totalorder %s23, 7
    %p41 = por %p39, %p40
    %p42 = scmp.ne.s32.totalorder %s31, %s32
    %p43 = scmp.eq.s32.totalorder %s23, 0
    %p44 = por %p42, %p43
    %p45 = scmp.ne.s32.totalorder %s31, %s32
    %p46 = scmp.eq.s32.totalorder %s24, 7
    %p47 = por %p45, %p46
    %p49 = scmp.ne.s32.totalorder %s32, %s48
    %p50 = scmp.eq.s32.totalorder %s24, 0
    %p51 = por %p49, %p50
    %s52 = ssub.s32 %s18, %s25
    %p53 = scmp.eq.s32.totalorder %s52, 0
    %s55 = sadd.s32 %s54, 1
    %s56 = scalar_select %p53, %s54, %s55
    %p59 = pneg %p53
    %p60 = scmp.eq.s32.totalorder %s18, 7
    %p61 = por %p59, %p60
    %p62 = scmp.ne.s32.totalorder %s54, %s57
    %p63 = scmp.eq.s32.totalorder %s18, 0
    %p64 = por %p62, %p63
    %p65 = scmp.ne.s32.totalorder %s54, %s57
    %p66 = scmp.eq.s32.totalorder %s23, 7
    %p67 = por %p65, %p66
    %p68 = scmp.ne.s32.totalorder %s57, %s58
    %p69 = scmp.eq.s32.totalorder %s23, 0
    %p70 = por %p68, %p69
    %p71 = scmp.ne.s32.totalorder %s57, %s58
    %p72 = scmp.eq.s32.totalorder %s24, 7
    %p73 = por %p71, %p72
    %p75 = scmp.ne.s32.totalorder %s58, %s74
    %p76 = scmp.eq.s32.totalorder %s24, 0
    %p77 = por %p75, %p76
    %s79 = sadd.s32 %s78, 1
    %p82 = scmp.eq.s32.totalorder %s18, 7
    %p83 = scmp.ne.s32.totalorder %s78, %s80
    %p84 = scmp.eq.s32.totalorder %s18, 0
    %p85 = por %p83, %p84
    %p86 = scmp.ne.s32.totalorder %s78, %s80
    %p87 = scmp.eq.s32.totalorder %s23, 7
    %p88 = por %p86, %p87
    %p89 = scmp.ne.s32.totalorder %s80, %s81
    %p90 = scmp.eq.s32.totalorder %s23, 0
    %p91 = por %p89, %p90
    %p92 = scmp.ne.s32.totalorder %s80, %s81
    %p93 = scmp.eq.s32.totalorder %s24, 7
    %p94 = por %p92, %p93
    %p96 = scmp.ne.s32.totalorder %s81, %s95
    %p97 = scmp.eq.s32.totalorder %s24, 0
    %p98 = por %p96, %p97
    %s100 = sadd.s32 %s99, 1
    %p103 = scmp.eq.s32.totalorder %s18, 7
    %p104 = scmp.ne.s32.totalorder %s99, %s101
    %p105 = scmp.eq.s32.totalorder %s18, 0
    %p106 = por %p104, %p105
    %p107 = scmp.ne.s32.totalorder %s99, %s101
    %p108 = scmp.eq.s32.totalorder %s23, 7
    %p109 = por %p107, %p108
    %p110 = scmp.ne.s32.totalorder %s101, %s102
    %p111 = scmp.eq.s32.totalorder %s23, 0
    %p112 = por %p110, %p111
    %p113 = scmp.ne.s32.totalorder %s101, %s102
    %p114 = scmp.eq.s32.totalorder %s24, 7
    %p115 = por %p113, %p114
    %p117 = scmp.ne.s32.totalorder %s102, %s116
    %p118 = scmp.eq.s32.totalorder %s24, 0
    %p119 = por %p117, %p118
    %s121 = sadd.s32 %s120, 1
    %p124 = scmp.eq.s32.totalorder %s18, 7
    %p125 = scmp.ne.s32.totalorder %s120, %s122
    %p126 = scmp.eq.s32.totalorder %s18, 0
    %p127 = por %p125, %p126
    %p128 = scmp.ne.s32.totalorder %s120, %s122
    %p129 = scmp.eq.s32.totalorder %s23, 7
    %p130 = por %p128, %p129
    %p131 = scmp.ne.s32.totalorder %s122, %s123
    %p132 = scmp.eq.s32.totalorder %s23, 0
    %p133 = por %p131, %p132
    %p134 = scmp.ne.s32.totalorder %s122, %s123
    %p135 = scmp.eq.s32.totalorder %s24, 7
    %p136 = por %p134, %p135
    %p138 = scmp.ne.s32.totalorder %s123, %s137
    %p139 = scmp.eq.s32.totalorder %s24, 0
    %p140 = por %p138, %p139
    %s142 = sadd.s32 %s141, 1
    %p145 = scmp.eq.s32.totalorder %s18, 7
    %p146 = scmp.ne.s32.totalorder %s141, %s143
    %p147 = scmp.eq.s32.totalorder %s18, 0
    %p148 = por %p146, %p147
    %p149 = scmp.ne.s32.totalorder %s141, %s143
    %p150 = scmp.eq.s32.totalorder %s23, 7
    %p151 = por %p149, %p150
    %p152 = scmp.ne.s32.totalorder %s143, %s144
    %p153 = scmp.eq.s32.totalorder %s23, 0
    %p154 = por %p152, %p153
    %p155 = scmp.ne.s32.totalorder %s143, %s144
    %p156 = scmp.eq.s32.totalorder %s24, 7
    %p157 = por %p155, %p156
    %p159 = scmp.ne.s32.totalorder %s144, %s158
    %p160 = scmp.eq.s32.totalorder %s24, 0
    %p161 = por %p159, %p160
    %s163 = sadd.s32 %s162, 1
    %p166 = scmp.eq.s32.totalorder %s18, 7
    %p167 = scmp.ne.s32.totalorder %s162, %s164
    %p168 = scmp.eq.s32.totalorder %s18, 0
    %p169 = por %p167, %p168
    %p170 = scmp.ne.s32.totalorder %s162, %s164
    %p171 = scmp.eq.s32.totalorder %s23, 7
    %p172 = por %p170, %p171
    %p173 = scmp.ne.s32.totalorder %s164, %s165
    %p174 = scmp.eq.s32.totalorder %s23, 0
    %p175 = por %p173, %p174
    %p176 = scmp.ne.s32.totalorder %s164, %s165
    %p177 = scmp.eq.s32.totalorder %s24, 7
    %p178 = por %p176, %p177
    %p180 = scmp.ne.s32.totalorder %s165, %s179
    %p181 = scmp.eq.s32.totalorder %s24, 0
    %p182 = por %p180, %p181
    %s184 = sadd.s32 %s183, 1
    %p187 = scmp.eq.s32.totalorder %s18, 7
    %p188 = scmp.ne.s32.totalorder %s183, %s185
    %p189 = scmp.eq.s32.totalorder %s18, 0
    %p190 = por %p188, %p189
    %p191 = scmp.ne.s32.totalorder %s183, %s185
    %p192 = scmp.eq.s32.totalorder %s23, 7
    %p193 = por %p191, %p192
    %p194 = scmp.ne.s32.totalorder %s185, %s186
    %p195 = scmp.eq.s32.totalorder %s23, 0
    %p196 = por %p194, %p195
    %p197 = scmp.ne.s32.totalorder %s185, %s186
    %p198 = scmp.eq.s32.totalorder %s24, 7
    %p199 = por %p197, %p198
    %p201 = scmp.ne.s32.totalorder %s186, %s200
    %p202 = scmp.eq.s32.totalorder %s24, 0
    %p203 = por %p201, %p202
    %s205 = sadd.s32 %s204, 1
    %p208 = scmp.eq.s32.totalorder %s18, 7
    %p209 = scmp.ne.s32.totalorder %s204, %s206
    %p210 = scmp.eq.s32.totalorder %s18, 0
    %p211 = por %p209, %p210
    %p212 = scmp.ne.s32.totalorder %s204, %s206
    %p213 = scmp.eq.s32.totalorder %s23, 7
    %p214 = por %p212, %p213
    %p215 = scmp.ne.s32.totalorder %s206, %s207
    %p216 = scmp.eq.s32.totalorder %s23, 0
    %p217 = por %p215, %p216
    %p218 = scmp.ne.s32.totalorder %s206, %s207
    %p219 = scmp.eq.s32.totalorder %s24, 7
    %p220 = por %p218, %p219
    %p222 = scmp.ne.s32.totalorder %s207, %s221
    %p223 = scmp.eq.s32.totalorder %s24, 0
    %p224 = por %p222, %p223
    %s226 = sadd.s32 %s225, 1
    %p229 = scmp.eq.s32.totalorder %s18, 7
    %p230 = scmp.ne.s32.totalorder %s225, %s227
    %p231 = scmp.eq.s32.totalorder %s18, 0
    %p232 = por %p230, %p231
    %p233 = scmp.ne.s32.totalorder %s225, %s227
    %p234 = scmp.eq.s32.totalorder %s23, 7
    %p235 = por %p233, %p234
    %p236 = scmp.ne.s32.totalorder %s227, %s228
    %p237 = scmp.eq.s32.totalorder %s23, 0
    %p238 = por %p236, %p237
    %p239 = scmp.ne.s32.totalorder %s227, %s228
    %p240 = scmp.eq.s32.totalorder %s24, 7
    %p241 = por %p239, %p240
    %p243 = scmp.ne.s32.totalorder %s228, %s242
    %p244 = scmp.eq.s32.totalorder %s24, 0
    %p245 = por %p243, %p244
    %s247 = sadd.s32 %s246, 1
    %p250 = scmp.eq.s32.totalorder %s18, 7
    %p251 = scmp.ne.s32.totalorder %s246, %s248
    %p252 = scmp.eq.s32.totalorder %s18, 0
    %p253 = por %p251, %p252
    %p254 = scmp.ne.s32.totalorder %s246, %s248
    %p255 = scmp.eq.s32.totalorder %s23, 7
    %p256 = por %p254, %p255
    %p257 = scmp.ne.s32.totalorder %s248, %s249
    %p258 = scmp.eq.s32.totalorder %s23, 0
    %p259 = por %p257, %p258
    %p260 = scmp.ne.s32.totalorder %s248, %s249
    %p261 = scmp.eq.s32.totalorder %s24, 7
    %p262 = por %p260, %p261
    %p264 = scmp.ne.s32.totalorder %s249, %s263
    %p265 = scmp.eq.s32.totalorder %s24, 0
    %p266 = por %p264, %p265
    %s268 = sadd.s32 %s267, 1
    %p271 = scmp.eq.s32.totalorder %s18, 7
    %p272 = scmp.ne.s32.totalorder %s267, %s269
    %p273 = scmp.eq.s32.totalorder %s18, 0
    %p274 = por %p272, %p273
    %p275 = scmp.ne.s32.totalorder %s267, %s269
    %p276 = scmp.eq.s32.totalorder %s23, 7
    %p277 = por %p275, %p276
    %p278 = scmp.ne.s32.totalorder %s269, %s270
    %p279 = scmp.eq.s32.totalorder %s23, 0
    %p280 = por %p278, %p279
    %p281 = scmp.ne.s32.totalorder %s269, %s270
    %p282 = scmp.eq.s32.totalorder %s24, 7
    %p283 = por %p281, %p282
    %p285 = scmp.ne.s32.totalorder %s270, %s284
    %p286 = scmp.eq.s32.totalorder %s24, 0
    %p287 = por %p285, %p286
    %s288 = ssub.s32 %s18, %s25
    %p289 = scmp.eq.s32.totalorder %s288, 0
    %s291 = sadd.s32 %s290, 1
    %s292 = scalar_select %p289, %s290, %s291
    %p295 = pneg %p289
    %p296 = scmp.eq.s32.totalorder %s18, 7
    %p297 = por %p295, %p296
    %p298 = scmp.ne.s32.totalorder %s290, %s293
    %p299 = scmp.eq.s32.totalorder %s18, 0
    %p300 = por %p298, %p299
    %p301 = scmp.ne.s32.totalorder %s290, %s293
    %p302 = scmp.eq.s32.totalorder %s23, 7
    %p303 = por %p301, %p302
    %p304 = scmp.ne.s32.totalorder %s293, %s294
    %p305 = scmp.eq.s32.totalorder %s23, 0
    %p306 = por %p304, %p305
    %p307 = scmp.ne.s32.totalorder %s293, %s294
    %p308 = scmp.eq.s32.totalorder %s24, 7
    %p309 = por %p307, %p308
    %p311 = scmp.ne.s32.totalorder %s294, %s310
    %p312 = scmp.eq.s32.totalorder %s24, 0
    %p313 = por %p311, %p312
    %p314 = scmp.le.s32.totalorder 1, %s18
    %p315 = scmp.lt.s32.totalorder %s18, 9
    %p316 = pnand %p314, %p315
    %p317 = pneg %p316
    // Predicated region
    $region9: #{cg_forward.10} parent=5 // pred_check
      _
    $region10: #{cg_forward.10} parent=5 // pred_check_branch
      %319 = sbr.rel (%p316) target = $region12
    $region11: #{cg_forward.10} parent=5 // pred_region
      %s320 = ssub.s32 %s18, 1
      // Predicated region
      $region13: #{cg_forward.10} parent=11 // pred_check
        %p321 = pneg %p91
      $region14: #{cg_forward.10} parent=11 // pred_check_branch
        %323 = sbr.rel (%p321) target = $region16
      $region15: #{cg_forward.10} parent=11 // pred_region
        _
      $region16: #{cg_forward.10} parent=11 // pred_fallthru
        _
      // Predicated region
      $region17: #{cg_forward.10} parent=11 // pred_check
        %p324 = pneg %p112
      $region18: #{cg_forward.10} parent=11 // pred_check_branch
        %326 = sbr.rel (%p324) target = $region20
      $region19: #{cg_forward.10} parent=11 // pred_region
        _
      $region20: #{cg_forward.10} parent=11 // pred_fallthru
        _
      // Predicated region
      $region21: #{cg_forward.10} parent=11 // pred_check
        %p327 = pneg %p133
      $region22: #{cg_forward.10} parent=11 // pred_check_branch
        %329 = sbr.rel (%p327) target = $region24
      $region23: #{cg_forward.10} parent=11 // pred_region
        _
      $region24: #{cg_forward.10} parent=11 // pred_fallthru
        _
      // Predicated region
      $region25: #{cg_forward.10} parent=11 // pred_check
        %p330 = pneg %p154
      $region26: #{cg_forward.10} parent=11 // pred_check_branch
        %332 = sbr.rel (%p330) target = $region28
      $region27: #{cg_forward.10} parent=11 // pred_region
        _
      $region28: #{cg_forward.10} parent=11 // pred_fallthru
        _
      // Predicated region
      $region29: #{cg_forward.10} parent=11 // pred_check
        %p333 = pneg %p175
      $region30: #{cg_forward.10} parent=11 // pred_check_branch
        %335 = sbr.rel (%p333) target = $region32
      $region31: #{cg_forward.10} parent=11 // pred_region
        _
      $region32: #{cg_forward.10} parent=11 // pred_fallthru
        _
      // Predicated region
      $region33: #{cg_forward.10} parent=11 // pred_check
        %p336 = pneg %p196
      $region34: #{cg_forward.10} parent=11 // pred_check_branch
        %338 = sbr.rel (%p336) target = $region36
      $region35: #{cg_forward.10} parent=11 // pred_region
        _
      $region36: #{cg_forward.10} parent=11 // pred_fallthru
        _
      // Predicated region
      $region37: #{cg_forward.10} parent=11 // pred_check
        %p339 = pneg %p217
      $region38: #{cg_forward.10} parent=11 // pred_check_branch
        %341 = sbr.rel (%p339) target = $region40
      $region39: #{cg_forward.10} parent=11 // pred_region
        _
      $region40: #{cg_forward.10} parent=11 // pred_fallthru
        _
      // Predicated region
      $region41: #{cg_forward.10} parent=11 // pred_check
        %p342 = pneg %p238
      $region42: #{cg_forward.10} parent=11 // pred_check_branch
        %344 = sbr.rel (%p342) target = $region44
      $region43: #{cg_forward.10} parent=11 // pred_region
        _
      $region44: #{cg_forward.10} parent=11 // pred_fallthru
        _
      // Predicated region
      $region45: #{cg_forward.10} parent=11 // pred_check
        %p345 = pneg %p259
      $region46: #{cg_forward.10} parent=11 // pred_check_branch
        %347 = sbr.rel (%p345) target = $region48
      $region47: #{cg_forward.10} parent=11 // pred_region
        _
      $region48: #{cg_forward.10} parent=11 // pred_fallthru
        _
      // Predicated region
      $region49: #{cg_forward.10} parent=11 // pred_check
        %p348 = pneg %p280
      $region50: #{cg_forward.10} parent=11 // pred_check_branch
        %350 = sbr.rel (%p348) target = $region52
      $region51: #{cg_forward.10} parent=11 // pred_region
        _
      $region52: #{cg_forward.10} parent=11 // pred_fallthru
        _
    $region12: #{cg_forward.10} parent=5 // pred_fallthru
      _
    %p351 = scmp.lt.s32.totalorder %s18, 8
    // Predicated region
    $region53: #{cg_forward.10} parent=5 // pred_check
      %p352 = pneg %p351
    $region54: #{cg_forward.10} parent=5 // pred_check_branch
      %354 = sbr.rel (%p352) target = $region56
    $region55: #{cg_forward.10} parent=5 // pred_region
      // Predicated region
      $region57: #{cg_forward.10} parent=55 // pred_check
        %p355 = pneg %p38
      $region58: #{cg_forward.10} parent=55 // pred_check_branch
        %357 = sbr.rel (%p355) target = $region60
      $region59: #{cg_forward.10} parent=55 // pred_region
        %s358 = smul.u32 4, %s18
        %p359 = scmp.lt.s32.totalorder %s358, 31
        %s360 = scalar_select %p359, %s358, 31
        %s361 = smul.addr %s360, 4
        %s362 = scalar_lea.vmem %s0, %s361
        %s363 = smul.u32 4, %s18
      $region60: #{cg_forward.10} parent=55 // pred_fallthru
        _
      // Predicated region
      $region61: #{cg_forward.10} parent=55 // pred_check
        %p364 = pneg %p64
      $region62: #{cg_forward.10} parent=55 // pred_check_branch
        %366 = sbr.rel (%p364) target = $region64
      $region63: #{cg_forward.10} parent=55 // pred_region
        %s367 = smul.u32 4, %s18
        %p368 = scmp.lt.s32.totalorder %s367, 31
        %s369 = scalar_select %p368, %s367, 31
        %s370 = smul.addr %s369, 4
        %s371 = scalar_lea.vmem %s1, %s370
        %s372 = smul.u32 4, %s18
      $region64: #{cg_forward.10} parent=55 // pred_fallthru
        _
    $region56: #{cg_forward.10} parent=5 // pred_fallthru
      _
    %p373 = scmp.le.s32.totalorder 1, %s18
    %p374 = scmp.lt.s32.totalorder %s18, 9
    %p375 = pnand %p373, %p374
    %p376 = pneg %p375
    // Predicated region
    $region65: #{cg_forward.10} parent=5 // pred_check
      _
    $region66: #{cg_forward.10} parent=5 // pred_check_branch
      %378 = sbr.rel (%p375) target = $region68
    $region67: #{cg_forward.10} parent=5 // pred_region
      %s379 = ssub.s32 %s18, 1
      %s380 = smul.u32 4, %s23
      %p381 = scmp.lt.s32.totalorder %s380, 31
      %s382 = scalar_select %p381, %s380, 31
      %s383 = smul.addr %s382, 4
      %s384 = scalar_lea.vmem %s0, %s383
      %p385 = pneg %p44
      %p386 = pneg %p41
      %s387 = smul.u32 4, %s23
      %p388 = scmp.lt.s32.totalorder %s387, 31
      %s389 = scalar_select %p388, %s387, 31
      %s390 = smul.addr %s389, 4
      %s391 = scalar_lea.vmem %s1, %s390
      %p392 = pneg %p70
      %p393 = pneg %p67
      %p394 = pneg %p91
      %p395 = pneg %p88
      %p396 = pneg %p112
      %p397 = pneg %p109
      %p398 = pneg %p133
      %p399 = pneg %p130
      %p400 = pneg %p154
      %p401 = pneg %p151
      %p402 = pneg %p175
      %p403 = pneg %p172
      %p404 = pneg %p196
      %p405 = pneg %p193
      %p406 = pneg %p217
      %p407 = pneg %p214
      %p408 = pneg %p238
      %p409 = pneg %p235
      %p410 = pneg %p259
      %p411 = pneg %p256
      %p412 = pneg %p280
      %p413 = pneg %p277
      %p414 = pneg %p306
      %p415 = pneg %p303
      %s416 = smul.u32 4, %s23
      %p417 = scmp.lt.s32.totalorder %s416, 31
      %s418 = scalar_select %p417, %s416, 31
      %s419 = smul.addr %s418, 4
      %s420 = scalar_lea.vmem %s12, %s419
      %s421 = smul.u32 4, %s23
      %p422 = scmp.lt.s32.totalorder %s421, 31
      %s423 = scalar_select %p422, %s421, 31
      %s424 = smul.addr %s423, 4
      %s425 = scalar_lea.vmem %s0, %s424
      %s426 = smul.u32 4, %s23
      %s427 = smul.u32 4, %s23
      %p428 = scmp.lt.s32.totalorder %s427, 31
      %s429 = scalar_select %p428, %s427, 31
      %s430 = smul.addr %s429, 4
      %s431 = scalar_lea.vmem %s1, %s430
      %s432 = smul.u32 4, %s23
      %s433 = smul.u32 4, %s23
      %p434 = scmp.lt.s32.totalorder %s433, 31
      %s435 = scalar_select %p434, %s433, 31
      %s436 = smul.addr %s435, 4
      %s437 = scalar_lea.vmem %s12, %s436
      %s438 = smul.u32 4, %s23
      %v440 = vld [vmem:[%s425] sm:$0xf]
      %v441 = vld [vmem:[%s425 + $0x4] sm:$0xf]
      %v442 = vld [vmem:[%s425 + $0x8] sm:$0xf]
      %v443 = vld [vmem:[%s425 + $0xc] sm:$0xf]
      %v444 = vunpack.c.l.bf16 %v440
      %v445 = vunpack.c.l.bf16 %v441
      %v446 = vunpack.c.l.bf16 %v442
      %v447 = vunpack.c.l.bf16 %v443
      %v448 = vld [vmem:[%s2] sm:$0x1]
      %v449 = vld [vmem:[%s3] sm:$0x1]
      %vm450 = vcmask 261120
      %v451 = vsel %vm450, %v444, 0.0
      %452 = vadd.xlane.f32.xlu0 %v451
      %v453 = vpop.xlane.xlu0 %452
      %v454 = vsel %vm450, %v445, 0.0
      %455 = vadd.xlane.f32.xlu0 %v454
      %v456 = vpop.xlane.xlu0 %455
      %v457 = vsel %vm450, %v446, 0.0
      %458 = vadd.xlane.f32.xlu0 %v457
      %v459 = vpop.xlane.xlu0 %458
      %v460 = vsel %vm450, %v447, 0.0
      %461 = vadd.xlane.f32.xlu0 %v460
      %v462 = vpop.xlane.xlu0 %461
      %v463 = vrcp.pop 32.0
      %v464 = vmul.f32 32.0, %v463
      %v465 = vsub.f32 1.0, %v464
      %v466 = vmul.f32 %v463, %v465
      %v467 = vadd.f32 %v463, %v466
      %vm468 = vweird.f32 %v463
      %v469 = vsel %vm468, %v463, %v467
      %v470 = vmul.f32 %v453, %v469
      %v471 = vmul.f32 %v456, %v469
      %v472 = vmul.f32 %v459, %v469
      %v473 = vmul.f32 %v462, %v469
      %v474 = vsub.f32 %v444, %v470
      %v475 = vsub.f32 %v445, %v471
      %v476 = vsub.f32 %v446, %v472
      %v477 = vsub.f32 %v447, %v473
      %v478 = vmul.f32 %v474, %v474
      %v479 = vmul.f32 %v475, %v475
      %v480 = vmul.f32 %v476, %v476
      %v481 = vmul.f32 %v477, %v477
      %v482 = vsel %vm450, %v478, 0.0
      %483 = vadd.xlane.f32.xlu0 %v482
      %v484 = vpop.xlane.xlu0 %483
      %v485 = vsel %vm450, %v479, 0.0
      %486 = vadd.xlane.f32.xlu0 %v485
      %v487 = vpop.xlane.xlu0 %486
      %v488 = vsel %vm450, %v480, 0.0
      %489 = vadd.xlane.f32.xlu0 %v488
      %v490 = vpop.xlane.xlu0 %489
      %v491 = vsel %vm450, %v481, 0.0
      %492 = vadd.xlane.f32.xlu0 %v491
      %v493 = vpop.xlane.xlu0 %492
      %v494 = vmul.f32 %v484, %v469
      %v495 = vmul.f32 %v487, %v469
      %v496 = vmul.f32 %v490, %v469
      %v497 = vmul.f32 %v493, %v469
      %v498 = vadd.f32 %v494, 1e-05
      %v499 = vadd.f32 %v495, 1e-05
      %v500 = vadd.f32 %v496, 1e-05
      %v501 = vadd.f32 %v497, 1e-05
      %v502 = vrsqrt.pop %v498
      %v503 = vmul.f32 %v502, %v498
      %v504 = vmul.f32 %v503, %v502
      %v505 = vmul.f32 0.5, %v504
      %v506 = vsub.f32 1.5, %v505
      %v507 = vmul.f32 %v502, %v506
      %vm508 = vweird.f32 %v498
      %vm509 = vweird.f32 %v502
      %vm510 = vmor %vm508, %vm509
      %v511 = vsel %vm510, %v502, %v507
      %v512 = vrsqrt.pop %v499
      %v513 = vmul.f32 %v512, %v499
      %v514 = vmul.f32 %v513, %v512
      %v515 = vmul.f32 0.5, %v514
      %v516 = vsub.f32 1.5, %v515
      %v517 = vmul.f32 %v512, %v516
      %vm518 = vweird.f32 %v499
      %vm519 = vweird.f32 %v512
      %vm520 = vmor %vm518, %vm519
      %v521 = vsel %vm520, %v512, %v517
      %v522 = vrsqrt.pop %v500
      %v523 = vmul.f32 %v522, %v500
      %v524 = vmul.f32 %v523, %v522
      %v525 = vmul.f32 0.5, %v524
      %v526 = vsub.f32 1.5, %v525
      %v527 = vmul.f32 %v522, %v526
      %vm528 = vweird.f32 %v500
      %vm529 = vweird.f32 %v522
      %vm530 = vmor %vm528, %vm529
      %v531 = vsel %vm530, %v522, %v527
      %v532 = vrsqrt.pop %v501
      %v533 = vmul.f32 %v532, %v501
      %v534 = vmul.f32 %v533, %v532
      %v535 = vmul.f32 0.5, %v534
      %v536 = vsub.f32 1.5, %v535
      %v537 = vmul.f32 %v532, %v536
      %vm538 = vweird.f32 %v501
      %vm539 = vweird.f32 %v532
      %vm540 = vmor %vm538, %vm539
      %v541 = vsel %vm540, %v532, %v537
      %v542 = vmul.f32 %v474, %v511
      %v543 = vmul.f32 %v475, %v521
      %v544 = vmul.f32 %v476, %v531
      %v545 = vmul.f32 %v477, %v541
      %v547 = vperm.slane %v448, 0
      %v549 = vmul.f32 %v542, %v547
      %v550 = vmul.f32 %v543, %v547
      %v551 = vmul.f32 %v544, %v547
      %v552 = vmul.f32 %v545, %v547
      %v554 = vperm.slane %v449, 0
      %v556 = vadd.f32 %v549, %v554
      %v557 = vadd.f32 %v550, %v554
      %v558 = vadd.f32 %v551, %v554
      %v559 = vadd.f32 %v552, %v554
      %v560 = vpack.c.bf16 %v557, %v556
      %v561 = vpack.c.bf16 %v559, %v558
      %v562 = vld [vmem:[%s4] sm:$0xff]
      %v563 = vld [vmem:[%s4 + $0x8] sm:$0xff]
      %v564 = vld [vmem:[%s4 + $0x10] sm:$0xff]
      %v565 = vld [vmem:[%s4 + $0x18] sm:$0xff]
      %v566 = vld [vmem:[%s4 + $0x20] sm:$0xff]
      %v567 = vld [vmem:[%s4 + $0x28] sm:$0xff]
      %v568 = vld [vmem:[%s4 + $0x30] sm:$0xff]
      %v569 = vld [vmem:[%s4 + $0x38] sm:$0xff]
      %v578 = vunpack.c.l.b16 %v562
      %v579 = vunpack.c.h.b16 %v562
      %v580 = vunpack.c.l.b16 %v563
      %v581 = vunpack.c.h.b16 %v563
      %v582 = vunpack.c.l.b16 %v564
      %v583 = vunpack.c.h.b16 %v564
      %v584 = vunpack.c.l.b16 %v565
      %v585 = vunpack.c.h.b16 %v565
      %v586 = vunpack.c.l.b16 %v566
      %v587 = vunpack.c.h.b16 %v566
      %v588 = vunpack.c.l.b16 %v567
      %v589 = vunpack.c.h.b16 %v567
      %v590 = vunpack.c.l.b16 %v568
      %v591 = vunpack.c.h.b16 %v568
      %v592 = vunpack.c.l.b16 %v569
      %v593 = vunpack.c.h.b16 %v569
      %v594 = vpack.c.b16 %v582, %v578
      %v595 = vpack.c.b16 %v583, %v579
      %v596 = vpack.c.b16 %v584, %v580
      %v597 = vpack.c.b16 %v585, %v581
      %v598 = vpack.c.b16 %v590, %v586
      %v599 = vpack.c.b16 %v591, %v587
      %v600 = vpack.c.b16 %v592, %v588
      %v601 = vpack.c.b16 %v593, %v589
      %v611 = vsel %vm450, %v560, 0
      %v614 = vsel %vm450, %v561, 0
      %616 = vmatpush.bf16.msra.mxu0 0
      %617 = vmatpush.bf16.msra.mxu0 0
      %618 = vmatpush.bf16.msra.mxu0 0
      %619 = vmatpush.bf16.msra.mxu0 0
      %620 = vmatpush.bf16.msra.mxu0 0
      %621 = vmatpush.bf16.msra.mxu0 0
      %622 = vmatpush.bf16.msra.mxu0 %v598
      %623 = vmatpush.bf16.msra.mxu0 %v594
      %624 = vmatmul.bf16.gmra.mxu0 %v611
      %v625 = vpop.f32.mrf.mxu0
      %v626 = vadd.f32 0.0, %v625
      %v627 = vpop.f32.mrf.mxu0
      %v628 = vadd.f32 0.0, %v627
      %629 = vmatmul.bf16.gmra.mxu0 %v614
      %v630 = vpop.f32.mrf.mxu0
      %v631 = vadd.f32 0.0, %v630
      %v632 = vpop.f32.mrf.mxu0
      %v633 = vadd.f32 0.0, %v632
      %634 = vdwg.mxu0
      %635 = vmatpush.bf16.msra.mxu0 0
      %636 = vmatpush.bf16.msra.mxu0 0
      %637 = vmatpush.bf16.msra.mxu0 0
      %638 = vmatpush.bf16.msra.mxu0 0
      %639 = vmatpush.bf16.msra.mxu0 0
      %640 = vmatpush.bf16.msra.mxu0 0
      %641 = vmatpush.bf16.msra.mxu0 %v599
      %642 = vmatpush.bf16.msra.mxu0 %v595
      %643 = vmatmul.bf16.gmra.mxu0 %v611
      %v644 = vpop.f32.mrf.mxu0
      %v645 = vadd.f32 0.0, %v644
      %v646 = vpop.f32.mrf.mxu0
      %v647 = vadd.f32 0.0, %v646
      %648 = vmatmul.bf16.gmra.mxu0 %v614
      %v649 = vpop.f32.mrf.mxu0
      %v650 = vadd.f32 0.0, %v649
      %v651 = vpop.f32.mrf.mxu0
      %v652 = vadd.f32 0.0, %v651
      %653 = vdwg.mxu0
      %654 = vmatpush.bf16.msra.mxu0 0
      %655 = vmatpush.bf16.msra.mxu0 0
      %656 = vmatpush.bf16.msra.mxu0 0
      %657 = vmatpush.bf16.msra.mxu0 0
      %658 = vmatpush.bf16.msra.mxu0 0
      %659 = vmatpush.bf16.msra.mxu0 0
      %660 = vmatpush.bf16.msra.mxu0 %v600
      %661 = vmatpush.bf16.msra.mxu0 %v596
      %662 = vmatmul.bf16.gmra.mxu0 %v611
      %v663 = vpop.f32.mrf.mxu0
      %v664 = vadd.f32 0.0, %v663
      %v665 = vpop.f32.mrf.mxu0
      %v666 = vadd.f32 0.0, %v665
      %667 = vmatmul.bf16.gmra.mxu0 %v614
      %v668 = vpop.f32.mrf.mxu0
      %v669 = vadd.f32 0.0, %v668
      %v670 = vpop.f32.mrf.mxu0
      %v671 = vadd.f32 0.0, %v670
      %672 = vdwg.mxu0
      %673 = vmatpush.bf16.msra.mxu0 0
      %674 = vmatpush.bf16.msra.mxu0 0
      %675 = vmatpush.bf16.msra.mxu0 0
      %676 = vmatpush.bf16.msra.mxu0 0
      %677 = vmatpush.bf16.msra.mxu0 0
      %678 = vmatpush.bf16.msra.mxu0 0
      %679 = vmatpush.bf16.msra.mxu0 %v601
      %680 = vmatpush.bf16.msra.mxu0 %v597
      %681 = vmatmul.bf16.gmra.mxu0 %v611
      %v682 = vpop.f32.mrf.mxu0
      %v683 = vadd.f32 0.0, %v682
      %v684 = vpop.f32.mrf.mxu0
      %v685 = vadd.f32 0.0, %v684
      %686 = vmatmul.bf16.gmra.mxu0 %v614
      %v687 = vpop.f32.mrf.mxu0
      %v688 = vadd.f32 0.0, %v687
      %v689 = vpop.f32.mrf.mxu0
      %v690 = vadd.f32 0.0, %v689
      %691 = vdwg.mxu0
      %v692 = vpack.c.bf16 %v626, %v626
      %v693 = vpack.c.bf16 %v628, %v628
      %v694 = vpack.c.bf16 %v631, %v631
      %v695 = vpack.c.bf16 %v633, %v633
      %v696 = vpack.c.bf16 %v645, %v645
      %v697 = vpack.c.bf16 %v647, %v647
      %v698 = vpack.c.bf16 %v650, %v650
      %v699 = vpack.c.bf16 %v652, %v652
      %vm700 = vcmask 523264
      %v702 = vsel %vm700, %v692, 0
      %v705 = vsel %vm700, %v696, 0
      %707 = vmatpush.bf16.xpose.msra.mxu0 0
      %708 = vmatpush.bf16.xpose.msra.mxu0 0
      %709 = vmatpush.bf16.xpose.msra.mxu0 0
      %710 = vmatpush.bf16.xpose.msra.mxu0 0
      %711 = vmatpush.bf16.xpose.msra.mxu0 0
      %712 = vmatpush.bf16.xpose.msra.mxu0 0
      %713 = vmatpush.bf16.xpose.msra.mxu0 0
      %714 = vmatpush.bf16.xpose.msra.mxu0 %v705
      %715 = vmatmul.bf16.gmra.mxu0 %v702
      %v716 = vpop.f32.mrf.mxu0
      %v717 = vadd.f32 0.0, %v716
      %v718 = vpop.f32.mrf.mxu0
      %719 = vdwg.mxu0
      %v721 = vsel %vm700, %v693, 0
      %v724 = vsel %vm700, %v697, 0
      %726 = vmatpush.bf16.xpose.msra.mxu0 0
      %727 = vmatpush.bf16.xpose.msra.mxu0 0
      %728 = vmatpush.bf16.xpose.msra.mxu0 0
      %729 = vmatpush.bf16.xpose.msra.mxu0 0
      %730 = vmatpush.bf16.xpose.msra.mxu0 0
      %731 = vmatpush.bf16.xpose.msra.mxu0 0
      %732 = vmatpush.bf16.xpose.msra.mxu0 0
      %733 = vmatpush.bf16.xpose.msra.mxu0 %v724
      %734 = vmatmul.bf16.gmra.mxu0 %v721
      %v735 = vpop.f32.mrf.mxu0
      %v736 = vadd.f32 0.0, %v735
      %v737 = vpop.f32.mrf.mxu0
      %738 = vdwg.mxu0
      %v740 = vsel %vm700, %v694, 0
      %v743 = vsel %vm700, %v698, 0
      %745 = vmatpush.bf16.xpose.msra.mxu0 0
      %746 = vmatpush.bf16.xpose.msra.mxu0 0
      %747 = vmatpush.bf16.xpose.msra.mxu0 0
      %748 = vmatpush.bf16.xpose.msra.mxu0 0
      %749 = vmatpush.bf16.xpose.msra.mxu0 0
      %750 = vmatpush.bf16.xpose.msra.mxu0 0
      %751 = vmatpush.bf16.xpose.msra.mxu0 0
      %752 = vmatpush.bf16.xpose.msra.mxu0 %v743
      %753 = vmatmul.bf16.gmra.mxu0 %v740
      %v754 = vpop.f32.mrf.mxu0
      %v755 = vadd.f32 0.0, %v754
      %v756 = vpop.f32.mrf.mxu0
      %757 = vdwg.mxu0
      %v759 = vsel %vm700, %v695, 0
      %v762 = vsel %vm700, %v699, 0
      %764 = vmatpush.bf16.xpose.msra.mxu0 0
      %765 = vmatpush.bf16.xpose.msra.mxu0 0
      %766 = vmatpush.bf16.xpose.msra.mxu0 0
      %767 = vmatpush.bf16.xpose.msra.mxu0 0
      %768 = vmatpush.bf16.xpose.msra.mxu0 0
      %769 = vmatpush.bf16.xpose.msra.mxu0 0
      %770 = vmatpush.bf16.xpose.msra.mxu0 0
      %771 = vmatpush.bf16.xpose.msra.mxu0 %v762
      %772 = vmatmul.bf16.gmra.mxu0 %v759
      %v773 = vpop.f32.mrf.mxu0
      %v774 = vadd.f32 0.0, %v773
      %v775 = vpop.f32.mrf.mxu0
      %776 = vdwg.mxu0
      %vm777 = vcmask 64512
      %v778 = vsel %vm777, %v717, -inf
      %779 = vmax.xlane.f32.xlu0 %v778
      %v780 = vpop.xlane.xlu0 %779
      %v781 = vsel %vm777, %v736, -inf
      %782 = vmax.xlane.f32.xlu0 %v781
      %v783 = vpop.xlane.xlu0 %782
      %v784 = vsel %vm777, %v755, -inf
      %785 = vmax.xlane.f32.xlu0 %v784
      %v786 = vpop.xlane.xlu0 %785
      %v787 = vsel %vm777, %v774, -inf
      %788 = vmax.xlane.f32.xlu0 %v787
      %v789 = vpop.xlane.xlu0 %788
      %v790 = vsub.f32 %v717, %v780
      %v791 = vsub.f32 %v736, %v783
      %v792 = vsub.f32 %v755, %v786
      %v793 = vsub.f32 %v774, %v789
      %v794 = vmul.f32 %v790, 1.442695
      %v795 = vpow.pop %v794
      %v796 = vmul.f32 %v791, 1.442695
      %v797 = vpow.pop %v796
      %v798 = vmul.f32 %v792, 1.442695
      %v799 = vpow.pop %v798
      %v800 = vmul.f32 %v793, 1.442695
      %v801 = vpow.pop %v800
      %v802 = vsel %vm777, %v795, 0.0
      %803 = vadd.xlane.f32.xlu0 %v802
      %v804 = vpop.xlane.xlu0 %803
      %v805 = vsel %vm777, %v797, 0.0
      %806 = vadd.xlane.f32.xlu0 %v805
      %v807 = vpop.xlane.xlu0 %806
      %v808 = vsel %vm777, %v799, 0.0
      %809 = vadd.xlane.f32.xlu0 %v808
      %v810 = vpop.xlane.xlu0 %809
      %v811 = vsel %vm777, %v801, 0.0
      %812 = vadd.xlane.f32.xlu0 %v811
      %v813 = vpop.xlane.xlu0 %812
      %v814 = vrcp.pop %v804
      %v815 = vrcp.pop %v807
      %v816 = vrcp.pop %v810
      %v817 = vrcp.pop %v813
      %v818 = vmul.f32 %v795, %v814
      %v819 = vmul.f32 %v797, %v815
      %v820 = vmul.f32 %v799, %v816
      %v821 = vmul.f32 %v801, %v817
      %v822 = vpack.c.bf16 %v818, %v818
      %v823 = vpack.c.bf16 %v819, %v819
      %v824 = vpack.c.bf16 %v820, %v820
      %v825 = vpack.c.bf16 %v821, %v821
      %v826 = vpack.c.bf16 %v664, %v664
      %v827 = vpack.c.bf16 %v666, %v666
      %v828 = vpack.c.bf16 %v669, %v669
      %v829 = vpack.c.bf16 %v671, %v671
      %v831 = vsel %vm777, %v822, 0
      %vm833 = vcmask 1043456
      %v835 = vsel %vm833, %v826, 0
      %837 = vmatpush.bf16.msra.mxu0 0
      %838 = vmatpush.bf16.msra.mxu0 0
      %839 = vmatpush.bf16.msra.mxu0 0
      %840 = vmatpush.bf16.msra.mxu0 0
      %841 = vmatpush.bf16.msra.mxu0 0
      %842 = vmatpush.bf16.msra.mxu0 0
      %843 = vmatpush.bf16.msra.mxu0 0
      %844 = vmatpush.bf16.msra.mxu0 %v835
      %845 = vmatmul.bf16.gmra.mxu0 %v831
      %v846 = vpop.f32.mrf.mxu0
      %v847 = vadd.f32 0.0, %v846
      %v848 = vpop.f32.mrf.mxu0
      %849 = vdwg.mxu0
      %v851 = vsel %vm777, %v823, 0
      %v854 = vsel %vm833, %v827, 0
      %856 = vmatpush.bf16.msra.mxu0 0
      %857 = vmatpush.bf16.msra.mxu0 0
      %858 = vmatpush.bf16.msra.mxu0 0
      %859 = vmatpush.bf16.msra.mxu0 0
      %860 = vmatpush.bf16.msra.mxu0 0
      %861 = vmatpush.bf16.msra.mxu0 0
      %862 = vmatpush.bf16.msra.mxu0 0
      %863 = vmatpush.bf16.msra.mxu0 %v854
      %864 = vmatmul.bf16.gmra.mxu0 %v851
      %v865 = vpop.f32.mrf.mxu0
      %v866 = vadd.f32 0.0, %v865
      %v867 = vpop.f32.mrf.mxu0
      %868 = vdwg.mxu0
      %v870 = vsel %vm777, %v824, 0
      %v873 = vsel %vm833, %v828, 0
      %875 = vmatpush.bf16.msra.mxu0 0
      %876 = vmatpush.bf16.msra.mxu0 0
      %877 = vmatpush.bf16.msra.mxu0 0
      %878 = vmatpush.bf16.msra.mxu0 0
      %879 = vmatpush.bf16.msra.mxu0 0
      %880 = vmatpush.bf16.msra.mxu0 0
      %881 = vmatpush.bf16.msra.mxu0 0
      %882 = vmatpush.bf16.msra.mxu0 %v873
      %883 = vmatmul.bf16.gmra.mxu0 %v870
      %v884 = vpop.f32.mrf.mxu0
      %v885 = vadd.f32 0.0, %v884
      %v886 = vpop.f32.mrf.mxu0
      %887 = vdwg.mxu0
      %v889 = vsel %vm777, %v825, 0
      %v892 = vsel %vm833, %v829, 0
      %894 = vmatpush.bf16.msra.mxu0 0
      %895 = vmatpush.bf16.msra.mxu0 0
      %896 = vmatpush.bf16.msra.mxu0 0
      %897 = vmatpush.bf16.msra.mxu0 0
      %898 = vmatpush.bf16.msra.mxu0 0
      %899 = vmatpush.bf16.msra.mxu0 0
      %900 = vmatpush.bf16.msra.mxu0 0
      %901 = vmatpush.bf16.msra.mxu0 %v892
      %902 = vmatmul.bf16.gmra.mxu0 %v889
      %v903 = vpop.f32.mrf.mxu0
      %v904 = vadd.f32 0.0, %v903
      %v905 = vpop.f32.mrf.mxu0
      %906 = vdwg.mxu0
      %v908 = vunpack.c.l.b16 %v692
      %v909 = vpack.c.b16 %v908, %v908
      %910 = vrot.lane.b32.xlu0 %v909, 64
      %v911 = vpop.permute.xlu0 %910
      %v913 = vunpack.c.l.b16 %v696
      %v914 = vpack.c.b16 %v913, %v913
      %915 = vrot.lane.b32.xlu0 %v914, 64
      %v916 = vpop.permute.xlu0 %915
      %v918 = vsel %vm700, %v911, 0
      %v921 = vsel %vm700, %v916, 0
      %923 = vmatpush.bf16.xpose.msra.mxu0 0
      %924 = vmatpush.bf16.xpose.msra.mxu0 0
      %925 = vmatpush.bf16.xpose.msra.mxu0 0
      %926 = vmatpush.bf16.xpose.msra.mxu0 0
      %927 = vmatpush.bf16.xpose.msra.mxu0 0
      %928 = vmatpush.bf16.xpose.msra.mxu0 0
      %929 = vmatpush.bf16.xpose.msra.mxu0 0
      %930 = vmatpush.bf16.xpose.msra.mxu0 %v921
      %931 = vmatmul.bf16.gmra.mxu0 %v918
      %v932 = vpop.f32.mrf.mxu0
      %v933 = vadd.f32 0.0, %v932
      %v934 = vpop.f32.mrf.mxu0
      %935 = vdwg.mxu0
      %v937 = vunpack.c.l.b16 %v693
      %v938 = vpack.c.b16 %v937, %v937
      %939 = vrot.lane.b32.xlu0 %v938, 64
      %v940 = vpop.permute.xlu0 %939
      %v942 = vunpack.c.l.b16 %v697
      %v943 = vpack.c.b16 %v942, %v942
      %944 = vrot.lane.b32.xlu0 %v943, 64
      %v945 = vpop.permute.xlu0 %944
      %v947 = vsel %vm700, %v940, 0
      %v950 = vsel %vm700, %v945, 0
      %952 = vmatpush.bf16.xpose.msra.mxu0 0
      %953 = vmatpush.bf16.xpose.msra.mxu0 0
      %954 = vmatpush.bf16.xpose.msra.mxu0 0
      %955 = vmatpush.bf16.xpose.msra.mxu0 0
      %956 = vmatpush.bf16.xpose.msra.mxu0 0
      %957 = vmatpush.bf16.xpose.msra.mxu0 0
      %958 = vmatpush.bf16.xpose.msra.mxu0 0
      %959 = vmatpush.bf16.xpose.msra.mxu0 %v950
      %960 = vmatmul.bf16.gmra.mxu0 %v947
      %v961 = vpop.f32.mrf.mxu0
      %v962 = vadd.f32 0.0, %v961
      %v963 = vpop.f32.mrf.mxu0
      %964 = vdwg.mxu0
      %v966 = vunpack.c.l.b16 %v694
      %v967 = vpack.c.b16 %v966, %v966
      %968 = vrot.lane.b32.xlu0 %v967, 64
      %v969 = vpop.permute.xlu0 %968
      %v971 = vunpack.c.l.b16 %v698
      %v972 = vpack.c.b16 %v971, %v971
      %973 = vrot.lane.b32.xlu0 %v972, 64
      %v974 = vpop.permute.xlu0 %973
      %v976 = vsel %vm700, %v969, 0
      %v979 = vsel %vm700, %v974, 0
      %981 = vmatpush.bf16.xpose.msra.mxu0 0
      %982 = vmatpush.bf16.xpose.msra.mxu0 0
      %983 = vmatpush.bf16.xpose.msra.mxu0 0
      %984 = vmatpush.bf16.xpose.msra.mxu0 0
      %985 = vmatpush.bf16.xpose.msra.mxu0 0
      %986 = vmatpush.bf16.xpose.msra.mxu0 0
      %987 = vmatpush.bf16.xpose.msra.mxu0 0
      %988 = vmatpush.bf16.xpose.msra.mxu0 %v979
      %989 = vmatmul.bf16.gmra.mxu0 %v976
      %v990 = vpop.f32.mrf.mxu0
      %v991 = vadd.f32 0.0, %v990
      %v992 = vpop.f32.mrf.mxu0
      %993 = vdwg.mxu0
      %v995 = vunpack.c.l.b16 %v695
      %v996 = vpack.c.b16 %v995, %v995
      %997 = vrot.lane.b32.xlu0 %v996, 64
      %v998 = vpop.permute.xlu0 %997
      %v1000 = vunpack.c.l.b16 %v699
      %v1001 = vpack.c.b16 %v1000, %v1000
      %1002 = vrot.lane.b32.xlu0 %v1001, 64
      %v1003 = vpop.permute.xlu0 %1002
      %v1005 = vsel %vm700, %v998, 0
      %v1008 = vsel %vm700, %v1003, 0
      %1010 = vmatpush.bf16.xpose.msra.mxu0 0
      %1011 = vmatpush.bf16.xpose.msra.mxu0 0
      %1012 = vmatpush.bf16.xpose.msra.mxu0 0
      %1013 = vmatpush.bf16.xpose.msra.mxu0 0
      %1014 = vmatpush.bf16.xpose.msra.mxu0 0
      %1015 = vmatpush.bf16.xpose.msra.mxu0 0
      %1016 = vmatpush.bf16.xpose.msra.mxu0 0
      %1017 = vmatpush.bf16.xpose.msra.mxu0 %v1008
      %1018 = vmatmul.bf16.gmra.mxu0 %v1005
      %v1019 = vpop.f32.mrf.mxu0
      %v1020 = vadd.f32 0.0, %v1019
      %v1021 = vpop.f32.mrf.mxu0
      %1022 = vdwg.mxu0
      %v1023 = vsel %vm777, %v933, -inf
      %1024 = vmax.xlane.f32.xlu0 %v1023
      %v1025 = vpop.xlane.xlu0 %1024
      %v1026 = vsel %vm777, %v962, -inf
      %1027 = vmax.xlane.f32.xlu0 %v1026
      %v1028 = vpop.xlane.xlu0 %1027
      %v1029 = vsel %vm777, %v991, -inf
      %1030 = vmax.xlane.f32.xlu0 %v1029
      %v1031 = vpop.xlane.xlu0 %1030
      %v1032 = vsel %vm777, %v1020, -inf
      %1033 = vmax.xlane.f32.xlu0 %v1032
      %v1034 = vpop.xlane.xlu0 %1033
      %v1035 = vsub.f32 %v933, %v1025
      %v1036 = vsub.f32 %v962, %v1028
      %v1037 = vsub.f32 %v991, %v1031
      %v1038 = vsub.f32 %v1020, %v1034
      %v1039 = vmul.f32 %v1035, 1.442695
      %v1040 = vpow.pop %v1039
      %v1041 = vmul.f32 %v1036, 1.442695
      %v1042 = vpow.pop %v1041
      %v1043 = vmul.f32 %v1037, 1.442695
      %v1044 = vpow.pop %v1043
      %v1045 = vmul.f32 %v1038, 1.442695
      %v1046 = vpow.pop %v1045
      %v1047 = vsel %vm777, %v1040, 0.0
      %1048 = vadd.xlane.f32.xlu0 %v1047
      %v1049 = vpop.xlane.xlu0 %1048
      %v1050 = vsel %vm777, %v1042, 0.0
      %1051 = vadd.xlane.f32.xlu0 %v1050
      %v1052 = vpop.xlane.xlu0 %1051
      %v1053 = vsel %vm777, %v1044, 0.0
      %1054 = vadd.xlane.f32.xlu0 %v1053
      %v1055 = vpop.xlane.xlu0 %1054
      %v1056 = vsel %vm777, %v1046, 0.0
      %1057 = vadd.xlane.f32.xlu0 %v1056
      %v1058 = vpop.xlane.xlu0 %1057
      %v1059 = vrcp.pop %v1049
      %v1060 = vrcp.pop %v1052
      %v1061 = vrcp.pop %v1055
      %v1062 = vrcp.pop %v1058
      %v1063 = vmul.f32 %v1040, %v1059
      %v1064 = vmul.f32 %v1042, %v1060
      %v1065 = vmul.f32 %v1044, %v1061
      %v1066 = vmul.f32 %v1046, %v1062
      %v1067 = vpack.c.bf16 %v1063, %v1063
      %v1068 = vpack.c.bf16 %v1064, %v1064
      %v1069 = vpack.c.bf16 %v1065, %v1065
      %v1070 = vpack.c.bf16 %v1066, %v1066
      %v1072 = vunpack.c.l.b16 %v826
      %v1073 = vpack.c.b16 %v1072, %v1072
      %1074 = vrot.lane.b32.xlu0 %v1073, 64
      %v1075 = vpop.permute.xlu0 %1074
      %v1077 = vsel %vm777, %v1067, 0
      %v1080 = vsel %vm833, %v1075, 0
      %1082 = vmatpush.bf16.msra.mxu0 0
      %1083 = vmatpush.bf16.msra.mxu0 0
      %1084 = vmatpush.bf16.msra.mxu0 0
      %1085 = vmatpush.bf16.msra.mxu0 0
      %1086 = vmatpush.bf16.msra.mxu0 0
      %1087 = vmatpush.bf16.msra.mxu0 0
      %1088 = vmatpush.bf16.msra.mxu0 0
      %1089 = vmatpush.bf16.msra.mxu0 %v1080
      %1090 = vmatmul.bf16.gmra.mxu0 %v1077
      %v1091 = vpop.f32.mrf.mxu0
      %v1092 = vadd.f32 0.0, %v1091
      %v1093 = vpop.f32.mrf.mxu0
      %1094 = vdwg.mxu0
      %v1096 = vunpack.c.l.b16 %v827
      %v1097 = vpack.c.b16 %v1096, %v1096
      %1098 = vrot.lane.b32.xlu0 %v1097, 64
      %v1099 = vpop.permute.xlu0 %1098
      %v1101 = vsel %vm777, %v1068, 0
      %v1104 = vsel %vm833, %v1099, 0
      %1106 = vmatpush.bf16.msra.mxu0 0
      %1107 = vmatpush.bf16.msra.mxu0 0
      %1108 = vmatpush.bf16.msra.mxu0 0
      %1109 = vmatpush.bf16.msra.mxu0 0
      %1110 = vmatpush.bf16.msra.mxu0 0
      %1111 = vmatpush.bf16.msra.mxu0 0
      %1112 = vmatpush.bf16.msra.mxu0 0
      %1113 = vmatpush.bf16.msra.mxu0 %v1104
      %1114 = vmatmul.bf16.gmra.mxu0 %v1101
      %v1115 = vpop.f32.mrf.mxu0
      %v1116 = vadd.f32 0.0, %v1115
      %v1117 = vpop.f32.mrf.mxu0
      %1118 = vdwg.mxu0
      %v1120 = vunpack.c.l.b16 %v828
      %v1121 = vpack.c.b16 %v1120, %v1120
      %1122 = vrot.lane.b32.xlu0 %v1121, 64
      %v1123 = vpop.permute.xlu0 %1122
      %v1125 = vsel %vm777, %v1069, 0
      %v1128 = vsel %vm833, %v1123, 0
      %1130 = vmatpush.bf16.msra.mxu0 0
      %1131 = vmatpush.bf16.msra.mxu0 0
      %1132 = vmatpush.bf16.msra.mxu0 0
      %1133 = vmatpush.bf16.msra.mxu0 0
      %1134 = vmatpush.bf16.msra.mxu0 0
      %1135 = vmatpush.bf16.msra.mxu0 0
      %1136 = vmatpush.bf16.msra.mxu0 0
      %1137 = vmatpush.bf16.msra.mxu0 %v1128
      %1138 = vmatmul.bf16.gmra.mxu0 %v1125
      %v1139 = vpop.f32.mrf.mxu0
      %v1140 = vadd.f32 0.0, %v1139
      %v1141 = vpop.f32.mrf.mxu0
      %1142 = vdwg.mxu0
      %v1144 = vunpack.c.l.b16 %v829
      %v1145 = vpack.c.b16 %v1144, %v1144
      %1146 = vrot.lane.b32.xlu0 %v1145, 64
      %v1147 = vpop.permute.xlu0 %1146
      %v1149 = vsel %vm777, %v1070, 0
      %v1152 = vsel %vm833, %v1147, 0
      %1154 = vmatpush.bf16.msra.mxu0 0
      %1155 = vmatpush.bf16.msra.mxu0 0
      %1156 = vmatpush.bf16.msra.mxu0 0
      %1157 = vmatpush.bf16.msra.mxu0 0
      %1158 = vmatpush.bf16.msra.mxu0 0
      %1159 = vmatpush.bf16.msra.mxu0 0
      %1160 = vmatpush.bf16.msra.mxu0 0
      %1161 = vmatpush.bf16.msra.mxu0 %v1152
      %1162 = vmatmul.bf16.gmra.mxu0 %v1149
      %v1163 = vpop.f32.mrf.mxu0
      %v1164 = vadd.f32 0.0, %v1163
      %v1165 = vpop.f32.mrf.mxu0
      %1166 = vdwg.mxu0
      %1171 = vrot.lane.b32.xlu0 %v1092, 64
      %v1172 = vpop.permute.xlu0 %1171
      %1173 = vrot.lane.b32.xlu0 %v1116, 64
      %v1174 = vpop.permute.xlu0 %1173
      %1175 = vrot.lane.b32.xlu0 %v1140, 64
      %v1176 = vpop.permute.xlu0 %1175
      %1177 = vrot.lane.b32.xlu0 %v1164, 64
      %v1178 = vpop.permute.xlu0 %1177
      %v1183 = vsel %vm700, %v847, %v1172
      %v1184 = vsel %vm700, %v866, %v1174
      %v1185 = vsel %vm700, %v885, %v1176
      %v1186 = vsel %vm700, %v904, %v1178
      %v1187 = vld [vmem:[%s5] sm:$0x1]
      %v1189 = vperm.slane %v1187, 0
      %v1191 = vadd.f32 %v683, %v1189
      %v1192 = vadd.f32 %v685, %v1189
      %v1193 = vadd.f32 %v688, %v1189
      %v1194 = vadd.f32 %v690, %v1189
      %v1195 = vxor.u32 %v1191, 2147483648
      %v1196 = vxor.u32 %v1192, 2147483648
      %v1197 = vxor.u32 %v1193, 2147483648
      %v1198 = vxor.u32 %v1194, 2147483648
      %v1199 = vmul.f32 %v1195, 1.442695
      %v1200 = vpow.pop %v1199
      %v1201 = vmul.f32 %v1196, 1.442695
      %v1202 = vpow.pop %v1201
      %v1203 = vmul.f32 %v1197, 1.442695
      %v1204 = vpow.pop %v1203
      %v1205 = vmul.f32 %v1198, 1.442695
      %v1206 = vpow.pop %v1205
      %v1207 = vadd.f32 %v1200, 1.0
      %v1208 = vadd.f32 %v1202, 1.0
      %v1209 = vadd.f32 %v1204, 1.0
      %v1210 = vadd.f32 %v1206, 1.0
      %v1211 = vrcp.pop %v1207
      %v1212 = vmul.f32 %v1207, %v1211
      %v1213 = vsub.f32 1.0, %v1212
      %v1214 = vmul.f32 %v1211, %v1213
      %v1215 = vadd.f32 %v1211, %v1214
      %vm1216 = vweird.f32 %v1207
      %vm1217 = vweird.f32 %v1211
      %vm1218 = vmor %vm1216, %vm1217
      %v1219 = vsel %vm1218, %v1211, %v1215
      %v1220 = vand.u32 2147483647, %v1207
      %vm1221 = vcmp.eq.f32.partialorder %v1220, 8.507059e+37
      %v1222 = vand.u32 %v1207, 2147483648
      %v1223 = vor.u32 1.1754944e-38, %v1222
      %v1224 = vsel %vm1221, %v1223, %v1219
      %v1225 = vmul.f32 1.0, %v1224
      %v1226 = vrcp.pop %v1208
      %v1227 = vmul.f32 %v1208, %v1226
      %v1228 = vsub.f32 1.0, %v1227
      %v1229 = vmul.f32 %v1226, %v1228
      %v1230 = vadd.f32 %v1226, %v1229
      %vm1231 = vweird.f32 %v1208
      %vm1232 = vweird.f32 %v1226
      %vm1233 = vmor %vm1231, %vm1232
      %v1234 = vsel %vm1233, %v1226, %v1230
      %v1235 = vand.u32 2147483647, %v1208
      %vm1236 = vcmp.eq.f32.partialorder %v1235, 8.507059e+37
      %v1237 = vand.u32 %v1208, 2147483648
      %v1238 = vor.u32 1.1754944e-38, %v1237
      %v1239 = vsel %vm1236, %v1238, %v1234
      %v1240 = vmul.f32 1.0, %v1239
      %v1241 = vrcp.pop %v1209
      %v1242 = vmul.f32 %v1209, %v1241
      %v1243 = vsub.f32 1.0, %v1242
      %v1244 = vmul.f32 %v1241, %v1243
      %v1245 = vadd.f32 %v1241, %v1244
      %vm1246 = vweird.f32 %v1209
      %vm1247 = vweird.f32 %v1241
      %vm1248 = vmor %vm1246, %vm1247
      %v1249 = vsel %vm1248, %v1241, %v1245
      %v1250 = vand.u32 2147483647, %v1209
      %vm1251 = vcmp.eq.f32.partialorder %v1250, 8.507059e+37
      %v1252 = vand.u32 %v1209, 2147483648
      %v1253 = vor.u32 1.1754944e-38, %v1252
      %v1254 = vsel %vm1251, %v1253, %v1249
      %v1255 = vmul.f32 1.0, %v1254
      %v1256 = vrcp.pop %v1210
      %v1257 = vmul.f32 %v1210, %v1256
      %v1258 = vsub.f32 1.0, %v1257
      %v1259 = vmul.f32 %v1256, %v1258
      %v1260 = vadd.f32 %v1256, %v1259
      %vm1261 = vweird.f32 %v1210
      %vm1262 = vweird.f32 %v1256
      %vm1263 = vmor %vm1261, %vm1262
      %v1264 = vsel %vm1263, %v1256, %v1260
      %v1265 = vand.u32 2147483647, %v1210
      %vm1266 = vcmp.eq.f32.partialorder %v1265, 8.507059e+37
      %v1267 = vand.u32 %v1210, 2147483648
      %v1268 = vor.u32 1.1754944e-38, %v1267
      %v1269 = vsel %vm1266, %v1268, %v1264
      %v1270 = vmul.f32 1.0, %v1269
      %v1271 = vmul.f32 %v1183, %v1225
      %v1272 = vmul.f32 %v1184, %v1240
      %v1273 = vmul.f32 %v1185, %v1255
      %v1274 = vmul.f32 %v1186, %v1270
      %v1275 = vpack.c.bf16 %v1272, %v1271
      %v1276 = vpack.c.bf16 %v1274, %v1273
      %v1277 = vld [vmem:[%s6] sm:$0xf]
      %v1278 = vld [vmem:[%s6 + $0x4] sm:$0xf]
      %v1279 = vld [vmem:[%s6 + $0x8] sm:$0xf]
      %v1280 = vld [vmem:[%s6 + $0xc] sm:$0xf]
      %v1281 = vld [vmem:[%s6 + $0x10] sm:$0xf]
      %v1282 = vld [vmem:[%s6 + $0x14] sm:$0xf]
      %v1283 = vld [vmem:[%s6 + $0x18] sm:$0xf]
      %v1284 = vld [vmem:[%s6 + $0x1c] sm:$0xf]
      %v1285 = vld [vmem:[%s6 + $0x20] sm:$0xf]
      %v1286 = vld [vmem:[%s6 + $0x24] sm:$0xf]
      %v1287 = vld [vmem:[%s6 + $0x28] sm:$0xf]
      %v1288 = vld [vmem:[%s6 + $0x2c] sm:$0xf]
      %v1289 = vld [vmem:[%s6 + $0x30] sm:$0xf]
      %v1290 = vld [vmem:[%s6 + $0x34] sm:$0xf]
      %v1291 = vld [vmem:[%s6 + $0x38] sm:$0xf]
      %v1292 = vld [vmem:[%s6 + $0x3c] sm:$0xf]
      %v1293 = vld [vmem:[%s7] sm:$0x1]
      %v1295 = vperm.slane %v1293, 0
      %v1313 = vunpack.c.l.b16 %v1277
      %v1314 = vunpack.c.l.b16 %v1278
      %v1315 = vunpack.c.l.b16 %v1279
      %v1316 = vunpack.c.l.b16 %v1280
      %v1317 = vunpack.c.l.b16 %v1281
      %v1318 = vunpack.c.l.b16 %v1282
      %v1319 = vunpack.c.l.b16 %v1283
      %v1320 = vunpack.c.l.b16 %v1284
      %v1321 = vunpack.c.l.b16 %v1285
      %v1322 = vunpack.c.l.b16 %v1286
      %v1323 = vunpack.c.l.b16 %v1287
      %v1324 = vunpack.c.l.b16 %v1288
      %v1325 = vunpack.c.l.b16 %v1289
      %v1326 = vunpack.c.l.b16 %v1290
      %v1327 = vunpack.c.l.b16 %v1291
      %v1328 = vunpack.c.l.b16 %v1292
      %v1329 = vpack.c.b16 %v1314, %v1313
      %v1330 = vpack.c.b16 %v1316, %v1315
      %v1331 = vpack.c.b16 %v1318, %v1317
      %v1332 = vpack.c.b16 %v1320, %v1319
      %v1333 = vpack.c.b16 %v1322, %v1321
      %v1334 = vpack.c.b16 %v1324, %v1323
      %v1335 = vpack.c.b16 %v1326, %v1325
      %v1336 = vpack.c.b16 %v1328, %v1327
      %1345 = vmatpush.bf16.msra.mxu0 %v1336
      %1346 = vmatpush.bf16.msra.mxu0 %v1335
      %1347 = vmatpush.bf16.msra.mxu0 %v1334
      %1348 = vmatpush.bf16.msra.mxu0 %v1333
      %1349 = vmatpush.bf16.msra.mxu0 %v1332
      %1350 = vmatpush.bf16.msra.mxu0 %v1331
      %1351 = vmatpush.bf16.msra.mxu0 %v1330
      %1352 = vmatpush.bf16.msra.mxu0 %v1329
      %1353 = vmatmul.bf16.gmra.mxu0 %v1275
      %v1354 = vpop.f32.mrf.mxu0
      %v1355 = vadd.f32 %v1295, %v1354
      %v1356 = vpop.f32.mrf.mxu0
      %v1357 = vadd.f32 %v1295, %v1356
      %1358 = vmatmul.bf16.gmra.mxu0 %v1276
      %v1359 = vpop.f32.mrf.mxu0
      %v1360 = vadd.f32 %v1295, %v1359
      %v1361 = vpop.f32.mrf.mxu0
      %v1362 = vadd.f32 %v1295, %v1361
      %1363 = vdwg.mxu0
      %v1364 = vadd.f32 %v556, %v1355
      %v1365 = vadd.f32 %v557, %v1357
      %v1366 = vadd.f32 %v558, %v1360
      %v1367 = vadd.f32 %v559, %v1362
      %v1368 = vld [vmem:[%s8] sm:$0x1]
      %v1369 = vld [vmem:[%s9] sm:$0x1]
      %v1370 = vsel %vm450, %v1364, 0.0
      %1371 = vadd.xlane.f32.xlu0 %v1370
      %v1372 = vpop.xlane.xlu0 %1371
      %v1373 = vsel %vm450, %v1365, 0.0
      %1374 = vadd.xlane.f32.xlu0 %v1373
      %v1375 = vpop.xlane.xlu0 %1374
      %v1376 = vsel %vm450, %v1366, 0.0
      %1377 = vadd.xlane.f32.xlu0 %v1376
      %v1378 = vpop.xlane.xlu0 %1377
      %v1379 = vsel %vm450, %v1367, 0.0
      %1380 = vadd.xlane.f32.xlu0 %v1379
      %v1381 = vpop.xlane.xlu0 %1380
      %v1382 = vmul.f32 %v1372, %v469
      %v1383 = vmul.f32 %v1375, %v469
      %v1384 = vmul.f32 %v1378, %v469
      %v1385 = vmul.f32 %v1381, %v469
      %v1386 = vsub.f32 %v1364, %v1382
      %v1387 = vsub.f32 %v1365, %v1383
      %v1388 = vsub.f32 %v1366, %v1384
      %v1389 = vsub.f32 %v1367, %v1385
      %v1390 = vmul.f32 %v1386, %v1386
      %v1391 = vmul.f32 %v1387, %v1387
      %v1392 = vmul.f32 %v1388, %v1388
      %v1393 = vmul.f32 %v1389, %v1389
      %v1394 = vsel %vm450, %v1390, 0.0
      %1395 = vadd.xlane.f32.xlu0 %v1394
      %v1396 = vpop.xlane.xlu0 %1395
      %v1397 = vsel %vm450, %v1391, 0.0
      %1398 = vadd.xlane.f32.xlu0 %v1397
      %v1399 = vpop.xlane.xlu0 %1398
      %v1400 = vsel %vm450, %v1392, 0.0
      %1401 = vadd.xlane.f32.xlu0 %v1400
      %v1402 = vpop.xlane.xlu0 %1401
      %v1403 = vsel %vm450, %v1393, 0.0
      %1404 = vadd.xlane.f32.xlu0 %v1403
      %v1405 = vpop.xlane.xlu0 %1404
      %v1406 = vmul.f32 %v1396, %v469
      %v1407 = vmul.f32 %v1399, %v469
      %v1408 = vmul.f32 %v1402, %v469
      %v1409 = vmul.f32 %v1405, %v469
      %v1410 = vadd.f32 %v1406, 1e-05
      %v1411 = vadd.f32 %v1407, 1e-05
      %v1412 = vadd.f32 %v1408, 1e-05
      %v1413 = vadd.f32 %v1409, 1e-05
      %v1414 = vrsqrt.pop %v1410
      %v1415 = vmul.f32 %v1414, %v1410
      %v1416 = vmul.f32 %v1415, %v1414
      %v1417 = vmul.f32 0.5, %v1416
      %v1418 = vsub.f32 1.5, %v1417
      %v1419 = vmul.f32 %v1414, %v1418
      %vm1420 = vweird.f32 %v1410
      %vm1421 = vweird.f32 %v1414
      %vm1422 = vmor %vm1420, %vm1421
      %v1423 = vsel %vm1422, %v1414, %v1419
      %v1424 = vrsqrt.pop %v1411
      %v1425 = vmul.f32 %v1424, %v1411
      %v1426 = vmul.f32 %v1425, %v1424
      %v1427 = vmul.f32 0.5, %v1426
      %v1428 = vsub.f32 1.5, %v1427
      %v1429 = vmul.f32 %v1424, %v1428
      %vm1430 = vweird.f32 %v1411
      %vm1431 = vweird.f32 %v1424
      %vm1432 = vmor %vm1430, %vm1431
      %v1433 = vsel %vm1432, %v1424, %v1429
      %v1434 = vrsqrt.pop %v1412
      %v1435 = vmul.f32 %v1434, %v1412
      %v1436 = vmul.f32 %v1435, %v1434
      %v1437 = vmul.f32 0.5, %v1436
      %v1438 = vsub.f32 1.5, %v1437
      %v1439 = vmul.f32 %v1434, %v1438
      %vm1440 = vweird.f32 %v1412
      %vm1441 = vweird.f32 %v1434
      %vm1442 = vmor %vm1440, %vm1441
      %v1443 = vsel %vm1442, %v1434, %v1439
      %v1444 = vrsqrt.pop %v1413
      %v1445 = vmul.f32 %v1444, %v1413
      %v1446 = vmul.f32 %v1445, %v1444
      %v1447 = vmul.f32 0.5, %v1446
      %v1448 = vsub.f32 1.5, %v1447
      %v1449 = vmul.f32 %v1444, %v1448
      %vm1450 = vweird.f32 %v1413
      %vm1451 = vweird.f32 %v1444
      %vm1452 = vmor %vm1450, %vm1451
      %v1453 = vsel %vm1452, %v1444, %v1449
      %v1454 = vmul.f32 %v1386, %v1423
      %v1455 = vmul.f32 %v1387, %v1433
      %v1456 = vmul.f32 %v1388, %v1443
      %v1457 = vmul.f32 %v1389, %v1453
      %v1459 = vperm.slane %v1368, 0
      %v1461 = vmul.f32 %v1454, %v1459
      %v1462 = vmul.f32 %v1455, %v1459
      %v1463 = vmul.f32 %v1456, %v1459
      %v1464 = vmul.f32 %v1457, %v1459
      %v1466 = vperm.slane %v1369, 0
      %v1468 = vadd.f32 %v1461, %v1466
      %v1469 = vadd.f32 %v1462, %v1466
      %v1470 = vadd.f32 %v1463, %v1466
      %v1471 = vadd.f32 %v1464, %v1466
      %v1472 = vld [vmem:[%s431] sm:$0xf]
      %v1473 = vld [vmem:[%s431 + $0x4] sm:$0xf]
      %v1474 = vld [vmem:[%s431 + $0x8] sm:$0xf]
      %v1475 = vld [vmem:[%s431 + $0xc] sm:$0xf]
      %v1476 = vunpack.c.l.bf16 %v1472
      %v1477 = vunpack.c.l.bf16 %v1473
      %v1478 = vunpack.c.l.bf16 %v1474
      %v1479 = vunpack.c.l.bf16 %v1475
      %v1480 = vadd.f32 %v1468, %v1476
      %v1481 = vadd.f32 %v1469, %v1477
      %v1482 = vadd.f32 %v1470, %v1478
      %v1483 = vadd.f32 %v1471, %v1479
      %v1484 = vld [vmem:[%s10] sm:$0x1]
      %v1485 = vld [vmem:[%s11] sm:$0x1]
      %v1486 = vsel %vm450, %v1480, 0.0
      %1487 = vadd.xlane.f32.xlu0 %v1486
      %v1488 = vpop.xlane.xlu0 %1487
      %v1489 = vsel %vm450, %v1481, 0.0
      %1490 = vadd.xlane.f32.xlu0 %v1489
      %v1491 = vpop.xlane.xlu0 %1490
      %v1492 = vsel %vm450, %v1482, 0.0
      %1493 = vadd.xlane.f32.xlu0 %v1492
      %v1494 = vpop.xlane.xlu0 %1493
      %v1495 = vsel %vm450, %v1483, 0.0
      %1496 = vadd.xlane.f32.xlu0 %v1495
      %v1497 = vpop.xlane.xlu0 %1496
      %v1498 = vmul.f32 %v1488, %v469
      %v1499 = vmul.f32 %v1491, %v469
      %v1500 = vmul.f32 %v1494, %v469
      %v1501 = vmul.f32 %v1497, %v469
      %v1502 = vsub.f32 %v1480, %v1498
      %v1503 = vsub.f32 %v1481, %v1499
      %v1504 = vsub.f32 %v1482, %v1500
      %v1505 = vsub.f32 %v1483, %v1501
      %v1506 = vmul.f32 %v1502, %v1502
      %v1507 = vmul.f32 %v1503, %v1503
      %v1508 = vmul.f32 %v1504, %v1504
      %v1509 = vmul.f32 %v1505, %v1505
      %v1510 = vsel %vm450, %v1506, 0.0
      %1511 = vadd.xlane.f32.xlu0 %v1510
      %v1512 = vpop.xlane.xlu0 %1511
      %v1513 = vsel %vm450, %v1507, 0.0
      %1514 = vadd.xlane.f32.xlu0 %v1513
      %v1515 = vpop.xlane.xlu0 %1514
      %v1516 = vsel %vm450, %v1508, 0.0
      %1517 = vadd.xlane.f32.xlu0 %v1516
      %v1518 = vpop.xlane.xlu0 %1517
      %v1519 = vsel %vm450, %v1509, 0.0
      %1520 = vadd.xlane.f32.xlu0 %v1519
      %v1521 = vpop.xlane.xlu0 %1520
      %v1522 = vmul.f32 %v1512, %v469
      %v1523 = vmul.f32 %v1515, %v469
      %v1524 = vmul.f32 %v1518, %v469
      %v1525 = vmul.f32 %v1521, %v469
      %v1526 = vadd.f32 %v1522, 1e-05
      %v1527 = vadd.f32 %v1523, 1e-05
      %v1528 = vadd.f32 %v1524, 1e-05
      %v1529 = vadd.f32 %v1525, 1e-05
      %v1530 = vrsqrt.pop %v1526
      %v1531 = vmul.f32 %v1530, %v1526
      %v1532 = vmul.f32 %v1531, %v1530
      %v1533 = vmul.f32 0.5, %v1532
      %v1534 = vsub.f32 1.5, %v1533
      %v1535 = vmul.f32 %v1530, %v1534
      %vm1536 = vweird.f32 %v1526
      %vm1537 = vweird.f32 %v1530
      %vm1538 = vmor %vm1536, %vm1537
      %v1539 = vsel %vm1538, %v1530, %v1535
      %v1540 = vrsqrt.pop %v1527
      %v1541 = vmul.f32 %v1540, %v1527
      %v1542 = vmul.f32 %v1541, %v1540
      %v1543 = vmul.f32 0.5, %v1542
      %v1544 = vsub.f32 1.5, %v1543
      %v1545 = vmul.f32 %v1540, %v1544
      %vm1546 = vweird.f32 %v1527
      %vm1547 = vweird.f32 %v1540
      %vm1548 = vmor %vm1546, %vm1547
      %v1549 = vsel %vm1548, %v1540, %v1545
      %v1550 = vrsqrt.pop %v1528
      %v1551 = vmul.f32 %v1550, %v1528
      %v1552 = vmul.f32 %v1551, %v1550
      %v1553 = vmul.f32 0.5, %v1552
      %v1554 = vsub.f32 1.5, %v1553
      %v1555 = vmul.f32 %v1550, %v1554
      %vm1556 = vweird.f32 %v1528
      %vm1557 = vweird.f32 %v1550
      %vm1558 = vmor %vm1556, %vm1557
      %v1559 = vsel %vm1558, %v1550, %v1555
      %v1560 = vrsqrt.pop %v1529
      %v1561 = vmul.f32 %v1560, %v1529
      %v1562 = vmul.f32 %v1561, %v1560
      %v1563 = vmul.f32 0.5, %v1562
      %v1564 = vsub.f32 1.5, %v1563
      %v1565 = vmul.f32 %v1560, %v1564
      %vm1566 = vweird.f32 %v1529
      %vm1567 = vweird.f32 %v1560
      %vm1568 = vmor %vm1566, %vm1567
      %v1569 = vsel %vm1568, %v1560, %v1565
      %v1570 = vmul.f32 %v1502, %v1539
      %v1571 = vmul.f32 %v1503, %v1549
      %v1572 = vmul.f32 %v1504, %v1559
      %v1573 = vmul.f32 %v1505, %v1569
      %v1575 = vperm.slane %v1484, 0
      %v1577 = vmul.f32 %v1570, %v1575
      %v1578 = vmul.f32 %v1571, %v1575
      %v1579 = vmul.f32 %v1572, %v1575
      %v1580 = vmul.f32 %v1573, %v1575
      %v1582 = vperm.slane %v1485, 0
      %v1584 = vadd.f32 %v1577, %v1582
      %v1585 = vadd.f32 %v1578, %v1582
      %v1586 = vadd.f32 %v1579, %v1582
      %v1587 = vadd.f32 %v1580, %v1582
      %v1588 = vpack.c.bf16 %v1584, %v1584
      %v1589 = vpack.c.bf16 %v1585, %v1585
      %v1590 = vpack.c.bf16 %v1586, %v1586
      %v1591 = vpack.c.bf16 %v1587, %v1587
      %vm1592 = vcmask 257024
      %1593 = vst.msk [vmem:[%s437] sm:$0xf] %vm1592, %v1588
      %1594 = vst.msk [vmem:[%s437 + $0x4] sm:$0xf] %vm1592, %v1589
      %1595 = vst.msk [vmem:[%s437 + $0x8] sm:$0xf] %vm1592, %v1590
      %1596 = vst.msk [vmem:[%s437 + $0xc] sm:$0xf] %vm1592, %v1591
      %s1597 = smul.u32 4, %s23
      %p1598 = scmp.lt.s32.totalorder %s1597, 31
      %s1599 = scalar_select %p1598, %s1597, 31
      %s1600 = smul.addr %s1599, 4
      %s1601 = scalar_lea.vmem %s12, %s1600
      // Predicated region
      $region69: #{cg_forward.10} parent=67 // pred_check
        %p1602 = pneg %p303
      $region70: #{cg_forward.10} parent=67 // pred_check_branch
        %1604 = sbr.rel (%p1602) target = $region72
      $region71: #{cg_forward.10} parent=67 // pred_region
        %s1605 = smul.u32 4, %s23
      $region72: #{cg_forward.10} parent=67 // pred_fallthru
        _
    $region68: #{cg_forward.10} parent=5 // pred_fallthru
      _
    %p1606 = scmp.le.s32.totalorder 2, %s18
    // Predicated region
    $region73: #{cg_forward.10} parent=5 // pred_check
      %p1607 = pneg %p1606
    $region74: #{cg_forward.10} parent=5 // pred_check_branch
      %1609 = sbr.rel (%p1607) target = $region76
    $region75: #{cg_forward.10} parent=5 // pred_region
      %s1610 = ssub.s32 %s18, 2
      // Predicated region
      $region77: #{cg_forward.10} parent=75 // pred_check
        %p1611 = pneg %p309
      $region78: #{cg_forward.10} parent=75 // pred_check_branch
        %1613 = sbr.rel (%p1611) target = $region80
      $region79: #{cg_forward.10} parent=75 // pred_region
        %s1614 = smul.u32 4, %s24
        %p1615 = scmp.lt.s32.totalorder %s1614, 31
        %s1616 = scalar_select %p1615, %s1614, 31
        %s1617 = smul.addr %s1616, 4
        %s1618 = scalar_lea.vmem %s12, %s1617
      $region80: #{cg_forward.10} parent=75 // pred_fallthru
        _
    $region76: #{cg_forward.10} parent=5 // pred_fallthru
      _
  $region6: #{cg_forward.10} parent=0 // loop_footer
    %s22 = sadd.s32 1, %s18
  $region7: #{cg_forward.10} parent=0 // loop_footer_branch
    %17 = sbr.rel target = $region3
  $region8: #{cg_forward.10} parent=0 // loop_exit
    _

// kernel: cg_forward.9
$region0: #{cg_forward.9}
  #allocation0 [shape = 'u32[]', space=smem, size = 0x4, offset = 0x4, fixed_abs, tag = 'smem constant byte address 0x4 - core index']
  #allocation1 [shape = 'u32[72,128]{1,0:T(1,128)}', space=vmem, size = 0x9000, scoped, tag = 'internal scratch']
  %s0 = inlined_call_operand.vmem [shape: bf16[256,32], index: 0, kind: input, shape index: {}]
  %s1 = inlined_call_operand.vmem [shape: f32[1,32], index: 1, kind: input, shape index: {}]
  %s2 = inlined_call_operand.vmem [shape: f32[1,32], index: 2, kind: input, shape index: {}]
  %s3 = inlined_call_operand.vmem [shape: f32[32,128], index: 3, kind: input, shape index: {}]
  %s4 = inlined_call_operand.vmem [shape: bf16[32,128], index: 4, kind: input, shape index: {}]
  %s5 = inlined_call_operand.vmem [shape: f32[1,128], index: 5, kind: input, shape index: {}]
  %s6 = inlined_call_operand.vmem [shape: bf16[128,32], index: 6, kind: input, shape index: {}]
  %s7 = inlined_call_operand.vmem [shape: f32[1,32], index: 7, kind: input, shape index: {}]
  %s8 = inlined_call_operand.vmem [shape: f32[1,32], index: 8, kind: input, shape index: {}]
  %s9 = inlined_call_operand.vmem [shape: f32[1,32], index: 9, kind: input, shape index: {}]
  %s10 = inlined_call_operand.vmem [shape: bf16[256,32], index: 10, kind: output, shape index: {}]
  %s11 = sld [smem:[#allocation0]]
  $region73: #{cg_forward.9} parent=0
    _
  %s13 = ssub.s32 1, %s11
  %s14 = scalar_select 0, %s13, %s11
  loop: start=0, step=1, limit=10
  $region2: #{cg_forward.9} parent=0 // loop_pre_header
    _
  $region3: #{cg_forward.9} parent=0 // loop_header
    %s16 = sphi 0, %s20
    %p17 = scmp.ge.s32.totalorder %s16, 10
    %s26 = sphi 0, %s28
    %s29 = sphi 0, %s26
    %s30 = sphi 0, %s29
    %s46 = sphi 0, %s30
    %s50 = sphi 0, %s50
    %s52 = sphi 0, %s50
    %s53 = sphi 0, %s52
    %s67 = sphi 0, %s53
    %s71 = sphi 0, %s71
    %s73 = sphi 0, %s71
    %s74 = sphi 0, %s73
    %s88 = sphi 0, %s74
    %s92 = sphi 0, %s92
    %s94 = sphi 0, %s92
    %s95 = sphi 0, %s94
    %s109 = sphi 0, %s95
    %s113 = sphi 0, %s113
    %s115 = sphi 0, %s113
    %s116 = sphi 0, %s115
    %s130 = sphi 0, %s116
    %s134 = sphi 0, %s134
    %s136 = sphi 0, %s134
    %s137 = sphi 0, %s136
    %s151 = sphi 0, %s137
    %s155 = sphi 0, %s155
    %s157 = sphi 0, %s155
    %s158 = sphi 0, %s157
    %s172 = sphi 0, %s158
    %s176 = sphi 0, %s176
    %s178 = sphi 0, %s176
    %s179 = sphi 0, %s178
    %s193 = sphi 0, %s179
    %s197 = sphi 0, %s197
    %s199 = sphi 0, %s197
    %s200 = sphi 0, %s199
    %s214 = sphi 0, %s200
    %s218 = sphi 0, %s218
    %s220 = sphi 0, %s218
    %s221 = sphi 0, %s220
    %s235 = sphi 0, %s221
    %s241 = sphi 0, %s243
    %s244 = sphi 0, %s241
    %s245 = sphi 0, %s244
    %s261 = sphi 0, %s245
  $region4: #{cg_forward.9} parent=0 // loop_header_branch
    %19 = sbr.rel (%p17) target = $region8
  $region5: #{cg_forward.9} parent=0 // loop_body
    %s21 = ssub.s32 %s16, 1
    %s22 = ssub.s32 %s16, 2
    %s23 = sadd.s32 %s16, 1
    %s24 = ssub.s32 %s16, %s23
    %p25 = scmp.eq.s32.totalorder %s24, 0
    %s27 = sadd.s32 %s26, 1
    %s28 = scalar_select %p25, %s26, %s27
    %p31 = pneg %p25
    %p32 = scmp.eq.s32.totalorder %s16, 7
    %p33 = por %p31, %p32
    %p34 = scmp.ne.s32.totalorder %s26, %s29
    %p35 = scmp.eq.s32.totalorder %s16, 0
    %p36 = por %p34, %p35
    %p37 = scmp.ne.s32.totalorder %s26, %s29
    %p38 = scmp.eq.s32.totalorder %s21, 7
    %p39 = por %p37, %p38
    %p40 = scmp.ne.s32.totalorder %s29, %s30
    %p41 = scmp.eq.s32.totalorder %s21, 0
    %p42 = por %p40, %p41
    %p43 = scmp.ne.s32.totalorder %s29, %s30
    %p44 = scmp.eq.s32.totalorder %s22, 7
    %p45 = por %p43, %p44
    %p47 = scmp.ne.s32.totalorder %s30, %s46
    %p48 = scmp.eq.s32.totalorder %s22, 0
    %p49 = por %p47, %p48
    %s51 = sadd.s32 %s50, 1
    %p54 = scmp.eq.s32.totalorder %s16, 7
    %p55 = scmp.ne.s32.totalorder %s50, %s52
    %p56 = scmp.eq.s32.totalorder %s16, 0
    %p57 = por %p55, %p56
    %p58 = scmp.ne.s32.totalorder %s50, %s52
    %p59 = scmp.eq.s32.totalorder %s21, 7
    %p60 = por %p58, %p59
    %p61 = scmp.ne.s32.totalorder %s52, %s53
    %p62 = scmp.eq.s32.totalorder %s21, 0
    %p63 = por %p61, %p62
    %p64 = scmp.ne.s32.totalorder %s52, %s53
    %p65 = scmp.eq.s32.totalorder %s22, 7
    %p66 = por %p64, %p65
    %p68 = scmp.ne.s32.totalorder %s53, %s67
    %p69 = scmp.eq.s32.totalorder %s22, 0
    %p70 = por %p68, %p69
    %s72 = sadd.s32 %s71, 1
    %p75 = scmp.eq.s32.totalorder %s16, 7
    %p76 = scmp.ne.s32.totalorder %s71, %s73
    %p77 = scmp.eq.s32.totalorder %s16, 0
    %p78 = por %p76, %p77
    %p79 = scmp.ne.s32.totalorder %s71, %s73
    %p80 = scmp.eq.s32.totalorder %s21, 7
    %p81 = por %p79, %p80
    %p82 = scmp.ne.s32.totalorder %s73, %s74
    %p83 = scmp.eq.s32.totalorder %s21, 0
    %p84 = por %p82, %p83
    %p85 = scmp.ne.s32.totalorder %s73, %s74
    %p86 = scmp.eq.s32.totalorder %s22, 7
    %p87 = por %p85, %p86
    %p89 = scmp.ne.s32.totalorder %s74, %s88
    %p90 = scmp.eq.s32.totalorder %s22, 0
    %p91 = por %p89, %p90
    %s93 = sadd.s32 %s92, 1
    %p96 = scmp.eq.s32.totalorder %s16, 7
    %p97 = scmp.ne.s32.totalorder %s92, %s94
    %p98 = scmp.eq.s32.totalorder %s16, 0
    %p99 = por %p97, %p98
    %p100 = scmp.ne.s32.totalorder %s92, %s94
    %p101 = scmp.eq.s32.totalorder %s21, 7
    %p102 = por %p100, %p101
    %p103 = scmp.ne.s32.totalorder %s94, %s95
    %p104 = scmp.eq.s32.totalorder %s21, 0
    %p105 = por %p103, %p104
    %p106 = scmp.ne.s32.totalorder %s94, %s95
    %p107 = scmp.eq.s32.totalorder %s22, 7
    %p108 = por %p106, %p107
    %p110 = scmp.ne.s32.totalorder %s95, %s109
    %p111 = scmp.eq.s32.totalorder %s22, 0
    %p112 = por %p110, %p111
    %s114 = sadd.s32 %s113, 1
    %p117 = scmp.eq.s32.totalorder %s16, 7
    %p118 = scmp.ne.s32.totalorder %s113, %s115
    %p119 = scmp.eq.s32.totalorder %s16, 0
    %p120 = por %p118, %p119
    %p121 = scmp.ne.s32.totalorder %s113, %s115
    %p122 = scmp.eq.s32.totalorder %s21, 7
    %p123 = por %p121, %p122
    %p124 = scmp.ne.s32.totalorder %s115, %s116
    %p125 = scmp.eq.s32.totalorder %s21, 0
    %p126 = por %p124, %p125
    %p127 = scmp.ne.s32.totalorder %s115, %s116
    %p128 = scmp.eq.s32.totalorder %s22, 7
    %p129 = por %p127, %p128
    %p131 = scmp.ne.s32.totalorder %s116, %s130
    %p132 = scmp.eq.s32.totalorder %s22, 0
    %p133 = por %p131, %p132
    %s135 = sadd.s32 %s134, 1
    %p138 = scmp.eq.s32.totalorder %s16, 7
    %p139 = scmp.ne.s32.totalorder %s134, %s136
    %p140 = scmp.eq.s32.totalorder %s16, 0
    %p141 = por %p139, %p140
    %p142 = scmp.ne.s32.totalorder %s134, %s136
    %p143 = scmp.eq.s32.totalorder %s21, 7
    %p144 = por %p142, %p143
    %p145 = scmp.ne.s32.totalorder %s136, %s137
    %p146 = scmp.eq.s32.totalorder %s21, 0
    %p147 = por %p145, %p146
    %p148 = scmp.ne.s32.totalorder %s136, %s137
    %p149 = scmp.eq.s32.totalorder %s22, 7
    %p150 = por %p148, %p149
    %p152 = scmp.ne.s32.totalorder %s137, %s151
    %p153 = scmp.eq.s32.totalorder %s22, 0
    %p154 = por %p152, %p153
    %s156 = sadd.s32 %s155, 1
    %p159 = scmp.eq.s32.totalorder %s16, 7
    %p160 = scmp.ne.s32.totalorder %s155, %s157
    %p161 = scmp.eq.s32.totalorder %s16, 0
    %p162 = por %p160, %p161
    %p163 = scmp.ne.s32.totalorder %s155, %s157
    %p164 = scmp.eq.s32.totalorder %s21, 7
    %p165 = por %p163, %p164
    %p166 = scmp.ne.s32.totalorder %s157, %s158
    %p167 = scmp.eq.s32.totalorder %s21, 0
    %p168 = por %p166, %p167
    %p169 = scmp.ne.s32.totalorder %s157, %s158
    %p170 = scmp.eq.s32.totalorder %s22, 7
    %p171 = por %p169, %p170
    %p173 = scmp.ne.s32.totalorder %s158, %s172
    %p174 = scmp.eq.s32.totalorder %s22, 0
    %p175 = por %p173, %p174
    %s177 = sadd.s32 %s176, 1
    %p180 = scmp.eq.s32.totalorder %s16, 7
    %p181 = scmp.ne.s32.totalorder %s176, %s178
    %p182 = scmp.eq.s32.totalorder %s16, 0
    %p183 = por %p181, %p182
    %p184 = scmp.ne.s32.totalorder %s176, %s178
    %p185 = scmp.eq.s32.totalorder %s21, 7
    %p186 = por %p184, %p185
    %p187 = scmp.ne.s32.totalorder %s178, %s179
    %p188 = scmp.eq.s32.totalorder %s21, 0
    %p189 = por %p187, %p188
    %p190 = scmp.ne.s32.totalorder %s178, %s179
    %p191 = scmp.eq.s32.totalorder %s22, 7
    %p192 = por %p190, %p191
    %p194 = scmp.ne.s32.totalorder %s179, %s193
    %p195 = scmp.eq.s32.totalorder %s22, 0
    %p196 = por %p194, %p195
    %s198 = sadd.s32 %s197, 1
    %p201 = scmp.eq.s32.totalorder %s16, 7
    %p202 = scmp.ne.s32.totalorder %s197, %s199
    %p203 = scmp.eq.s32.totalorder %s16, 0
    %p204 = por %p202, %p203
    %p205 = scmp.ne.s32.totalorder %s197, %s199
    %p206 = scmp.eq.s32.totalorder %s21, 7
    %p207 = por %p205, %p206
    %p208 = scmp.ne.s32.totalorder %s199, %s200
    %p209 = scmp.eq.s32.totalorder %s21, 0
    %p210 = por %p208, %p209
    %p211 = scmp.ne.s32.totalorder %s199, %s200
    %p212 = scmp.eq.s32.totalorder %s22, 7
    %p213 = por %p211, %p212
    %p215 = scmp.ne.s32.totalorder %s200, %s214
    %p216 = scmp.eq.s32.totalorder %s22, 0
    %p217 = por %p215, %p216
    %s219 = sadd.s32 %s218, 1
    %p222 = scmp.eq.s32.totalorder %s16, 7
    %p223 = scmp.ne.s32.totalorder %s218, %s220
    %p224 = scmp.eq.s32.totalorder %s16, 0
    %p225 = por %p223, %p224
    %p226 = scmp.ne.s32.totalorder %s218, %s220
    %p227 = scmp.eq.s32.totalorder %s21, 7
    %p228 = por %p226, %p227
    %p229 = scmp.ne.s32.totalorder %s220, %s221
    %p230 = scmp.eq.s32.totalorder %s21, 0
    %p231 = por %p229, %p230
    %p232 = scmp.ne.s32.totalorder %s220, %s221
    %p233 = scmp.eq.s32.totalorder %s22, 7
    %p234 = por %p232, %p233
    %p236 = scmp.ne.s32.totalorder %s221, %s235
    %p237 = scmp.eq.s32.totalorder %s22, 0
    %p238 = por %p236, %p237
    %s239 = ssub.s32 %s16, %s23
    %p240 = scmp.eq.s32.totalorder %s239, 0
    %s242 = sadd.s32 %s241, 1
    %s243 = scalar_select %p240, %s241, %s242
    %p246 = pneg %p240
    %p247 = scmp.eq.s32.totalorder %s16, 7
    %p248 = por %p246, %p247
    %p249 = scmp.ne.s32.totalorder %s241, %s244
    %p250 = scmp.eq.s32.totalorder %s16, 0
    %p251 = por %p249, %p250
    %p252 = scmp.ne.s32.totalorder %s241, %s244
    %p253 = scmp.eq.s32.totalorder %s21, 7
    %p254 = por %p252, %p253
    %p255 = scmp.ne.s32.totalorder %s244, %s245
    %p256 = scmp.eq.s32.totalorder %s21, 0
    %p257 = por %p255, %p256
    %p258 = scmp.ne.s32.totalorder %s244, %s245
    %p259 = scmp.eq.s32.totalorder %s22, 7
    %p260 = por %p258, %p259
    %p262 = scmp.ne.s32.totalorder %s245, %s261
    %p263 = scmp.eq.s32.totalorder %s22, 0
    %p264 = por %p262, %p263
    %p265 = scmp.le.s32.totalorder 1, %s16
    %p266 = scmp.lt.s32.totalorder %s16, 9
    %p267 = pnand %p265, %p266
    %p268 = pneg %p267
    // Predicated region
    $region9: #{cg_forward.9} parent=5 // pred_check
      _
    $region10: #{cg_forward.9} parent=5 // pred_check_branch
      %270 = sbr.rel (%p267) target = $region12
    $region11: #{cg_forward.9} parent=5 // pred_region
      %s271 = ssub.s32 %s16, 1
      // Predicated region
      $region13: #{cg_forward.9} parent=11 // pred_check
        %p272 = pneg %p63
      $region14: #{cg_forward.9} parent=11 // pred_check_branch
        %274 = sbr.rel (%p272) target = $region16
      $region15: #{cg_forward.9} parent=11 // pred_region
        _
      $region16: #{cg_forward.9} parent=11 // pred_fallthru
        _
      // Predicated region
      $region17: #{cg_forward.9} parent=11 // pred_check
        %p275 = pneg %p84
      $region18: #{cg_forward.9} parent=11 // pred_check_branch
        %277 = sbr.rel (%p275) target = $region20
      $region19: #{cg_forward.9} parent=11 // pred_region
        _
      $region20: #{cg_forward.9} parent=11 // pred_fallthru
        _
      // Predicated region
      $region21: #{cg_forward.9} parent=11 // pred_check
        %p278 = pneg %p105
      $region22: #{cg_forward.9} parent=11 // pred_check_branch
        %280 = sbr.rel (%p278) target = $region24
      $region23: #{cg_forward.9} parent=11 // pred_region
        _
      $region24: #{cg_forward.9} parent=11 // pred_fallthru
        _
      // Predicated region
      $region25: #{cg_forward.9} parent=11 // pred_check
        %p281 = pneg %p126
      $region26: #{cg_forward.9} parent=11 // pred_check_branch
        %283 = sbr.rel (%p281) target = $region28
      $region27: #{cg_forward.9} parent=11 // pred_region
        _
      $region28: #{cg_forward.9} parent=11 // pred_fallthru
        _
      // Predicated region
      $region29: #{cg_forward.9} parent=11 // pred_check
        %p284 = pneg %p147
      $region30: #{cg_forward.9} parent=11 // pred_check_branch
        %286 = sbr.rel (%p284) target = $region32
      $region31: #{cg_forward.9} parent=11 // pred_region
        _
      $region32: #{cg_forward.9} parent=11 // pred_fallthru
        _
      // Predicated region
      $region33: #{cg_forward.9} parent=11 // pred_check
        %p287 = pneg %p168
      $region34: #{cg_forward.9} parent=11 // pred_check_branch
        %289 = sbr.rel (%p287) target = $region36
      $region35: #{cg_forward.9} parent=11 // pred_region
        _
      $region36: #{cg_forward.9} parent=11 // pred_fallthru
        _
      // Predicated region
      $region37: #{cg_forward.9} parent=11 // pred_check
        %p290 = pneg %p189
      $region38: #{cg_forward.9} parent=11 // pred_check_branch
        %292 = sbr.rel (%p290) target = $region40
      $region39: #{cg_forward.9} parent=11 // pred_region
        _
      $region40: #{cg_forward.9} parent=11 // pred_fallthru
        _
      // Predicated region
      $region41: #{cg_forward.9} parent=11 // pred_check
        %p293 = pneg %p210
      $region42: #{cg_forward.9} parent=11 // pred_check_branch
        %295 = sbr.rel (%p293) target = $region44
      $region43: #{cg_forward.9} parent=11 // pred_region
        _
      $region44: #{cg_forward.9} parent=11 // pred_fallthru
        _
      // Predicated region
      $region45: #{cg_forward.9} parent=11 // pred_check
        %p296 = pneg %p231
      $region46: #{cg_forward.9} parent=11 // pred_check_branch
        %298 = sbr.rel (%p296) target = $region48
      $region47: #{cg_forward.9} parent=11 // pred_region
        _
      $region48: #{cg_forward.9} parent=11 // pred_fallthru
        _
    $region12: #{cg_forward.9} parent=5 // pred_fallthru
      _
    %p299 = scmp.lt.s32.totalorder %s16, 8
    // Predicated region
    $region49: #{cg_forward.9} parent=5 // pred_check
      %p300 = pneg %p299
    $region50: #{cg_forward.9} parent=5 // pred_check_branch
      %302 = sbr.rel (%p300) target = $region52
    $region51: #{cg_forward.9} parent=5 // pred_region
      // Predicated region
      $region53: #{cg_forward.9} parent=51 // pred_check
        %p303 = pneg %p36
      $region54: #{cg_forward.9} parent=51 // pred_check_branch
        %305 = sbr.rel (%p303) target = $region56
      $region55: #{cg_forward.9} parent=51 // pred_region
        %s306 = smul.u32 4, %s16
        %p307 = scmp.lt.s32.totalorder %s306, 31
        %s308 = scalar_select %p307, %s306, 31
        %s309 = smul.addr %s308, 4
        %s310 = scalar_lea.vmem %s0, %s309
        %s311 = smul.u32 4, %s16
      $region56: #{cg_forward.9} parent=51 // pred_fallthru
        _
    $region52: #{cg_forward.9} parent=5 // pred_fallthru
      _
    %p312 = scmp.le.s32.totalorder 1, %s16
    %p313 = scmp.lt.s32.totalorder %s16, 9
    %p314 = pnand %p312, %p313
    %p315 = pneg %p314
    // Predicated region
    $region57: #{cg_forward.9} parent=5 // pred_check
      _
    $region58: #{cg_forward.9} parent=5 // pred_check_branch
      %317 = sbr.rel (%p314) target = $region60
    $region59: #{cg_forward.9} parent=5 // pred_region
      %s318 = ssub.s32 %s16, 1
      %s319 = smul.u32 4, %s21
      %p320 = scmp.lt.s32.totalorder %s319, 31
      %s321 = scalar_select %p320, %s319, 31
      %s322 = smul.addr %s321, 4
      %s323 = scalar_lea.vmem %s0, %s322
      %p324 = pneg %p42
      %p325 = pneg %p39
      %p326 = pneg %p63
      %p327 = pneg %p60
      %p328 = pneg %p84
      %p329 = pneg %p81
      %p330 = pneg %p105
      %p331 = pneg %p102
      %p332 = pneg %p126
      %p333 = pneg %p123
      %p334 = pneg %p147
      %p335 = pneg %p144
      %p336 = pneg %p168
      %p337 = pneg %p165
      %p338 = pneg %p189
      %p339 = pneg %p186
      %p340 = pneg %p210
      %p341 = pneg %p207
      %p342 = pneg %p231
      %p343 = pneg %p228
      %p344 = pneg %p257
      %p345 = pneg %p254
      %s346 = smul.u32 4, %s21
      %p347 = scmp.lt.s32.totalorder %s346, 31
      %s348 = scalar_select %p347, %s346, 31
      %s349 = smul.addr %s348, 4
      %s350 = scalar_lea.vmem %s10, %s349
      %s351 = smul.u32 4, %s21
      %p352 = scmp.lt.s32.totalorder %s351, 31
      %s353 = scalar_select %p352, %s351, 31
      %s354 = smul.addr %s353, 4
      %s355 = scalar_lea.vmem %s0, %s354
      %s356 = smul.u32 4, %s21
      %s357 = smul.u32 4, %s21
      %p358 = scmp.lt.s32.totalorder %s357, 31
      %s359 = scalar_select %p358, %s357, 31
      %s360 = smul.addr %s359, 4
      %s361 = scalar_lea.vmem %s10, %s360
      %s362 = smul.u32 4, %s21
      %v364 = vld [vmem:[%s355] sm:$0xf]
      %v365 = vld [vmem:[%s355 + $0x4] sm:$0xf]
      %v366 = vld [vmem:[%s355 + $0x8] sm:$0xf]
      %v367 = vld [vmem:[%s355 + $0xc] sm:$0xf]
      %v368 = vunpack.c.l.bf16 %v364
      %v369 = vunpack.c.l.bf16 %v365
      %v370 = vunpack.c.l.bf16 %v366
      %v371 = vunpack.c.l.bf16 %v367
      %v372 = vld [vmem:[%s1] sm:$0x1]
      %v373 = vld [vmem:[%s2] sm:$0x1]
      %vm374 = vcmask 261120
      %v375 = vsel %vm374, %v368, 0.0
      %376 = vadd.xlane.f32.xlu0 %v375
      %v377 = vpop.xlane.xlu0 %376
      %v378 = vsel %vm374, %v369, 0.0
      %379 = vadd.xlane.f32.xlu0 %v378
      %v380 = vpop.xlane.xlu0 %379
      %v381 = vsel %vm374, %v370, 0.0
      %382 = vadd.xlane.f32.xlu0 %v381
      %v383 = vpop.xlane.xlu0 %382
      %v384 = vsel %vm374, %v371, 0.0
      %385 = vadd.xlane.f32.xlu0 %v384
      %v386 = vpop.xlane.xlu0 %385
      %v387 = vrcp.pop 32.0
      %v388 = vmul.f32 32.0, %v387
      %v389 = vsub.f32 1.0, %v388
      %v390 = vmul.f32 %v387, %v389
      %v391 = vadd.f32 %v387, %v390
      %vm392 = vweird.f32 %v387
      %v393 = vsel %vm392, %v387, %v391
      %v394 = vmul.f32 %v377, %v393
      %v395 = vmul.f32 %v380, %v393
      %v396 = vmul.f32 %v383, %v393
      %v397 = vmul.f32 %v386, %v393
      %v398 = vsub.f32 %v368, %v394
      %v399 = vsub.f32 %v369, %v395
      %v400 = vsub.f32 %v370, %v396
      %v401 = vsub.f32 %v371, %v397
      %v402 = vmul.f32 %v398, %v398
      %v403 = vmul.f32 %v399, %v399
      %v404 = vmul.f32 %v400, %v400
      %v405 = vmul.f32 %v401, %v401
      %v406 = vsel %vm374, %v402, 0.0
      %407 = vadd.xlane.f32.xlu0 %v406
      %v408 = vpop.xlane.xlu0 %407
      %v409 = vsel %vm374, %v403, 0.0
      %410 = vadd.xlane.f32.xlu0 %v409
      %v411 = vpop.xlane.xlu0 %410
      %v412 = vsel %vm374, %v404, 0.0
      %413 = vadd.xlane.f32.xlu0 %v412
      %v414 = vpop.xlane.xlu0 %413
      %v415 = vsel %vm374, %v405, 0.0
      %416 = vadd.xlane.f32.xlu0 %v415
      %v417 = vpop.xlane.xlu0 %416
      %v418 = vmul.f32 %v408, %v393
      %v419 = vmul.f32 %v411, %v393
      %v420 = vmul.f32 %v414, %v393
      %v421 = vmul.f32 %v417, %v393
      %v422 = vadd.f32 %v418, 1e-05
      %v423 = vadd.f32 %v419, 1e-05
      %v424 = vadd.f32 %v420, 1e-05
      %v425 = vadd.f32 %v421, 1e-05
      %v426 = vrsqrt.pop %v422
      %v427 = vmul.f32 %v426, %v422
      %v428 = vmul.f32 %v427, %v426
      %v429 = vmul.f32 0.5, %v428
      %v430 = vsub.f32 1.5, %v429
      %v431 = vmul.f32 %v426, %v430
      %vm432 = vweird.f32 %v422
      %vm433 = vweird.f32 %v426
      %vm434 = vmor %vm432, %vm433
      %v435 = vsel %vm434, %v426, %v431
      %v436 = vrsqrt.pop %v423
      %v437 = vmul.f32 %v436, %v423
      %v438 = vmul.f32 %v437, %v436
      %v439 = vmul.f32 0.5, %v438
      %v440 = vsub.f32 1.5, %v439
      %v441 = vmul.f32 %v436, %v440
      %vm442 = vweird.f32 %v423
      %vm443 = vweird.f32 %v436
      %vm444 = vmor %vm442, %vm443
      %v445 = vsel %vm444, %v436, %v441
      %v446 = vrsqrt.pop %v424
      %v447 = vmul.f32 %v446, %v424
      %v448 = vmul.f32 %v447, %v446
      %v449 = vmul.f32 0.5, %v448
      %v450 = vsub.f32 1.5, %v449
      %v451 = vmul.f32 %v446, %v450
      %vm452 = vweird.f32 %v424
      %vm453 = vweird.f32 %v446
      %vm454 = vmor %vm452, %vm453
      %v455 = vsel %vm454, %v446, %v451
      %v456 = vrsqrt.pop %v425
      %v457 = vmul.f32 %v456, %v425
      %v458 = vmul.f32 %v457, %v456
      %v459 = vmul.f32 0.5, %v458
      %v460 = vsub.f32 1.5, %v459
      %v461 = vmul.f32 %v456, %v460
      %vm462 = vweird.f32 %v425
      %vm463 = vweird.f32 %v456
      %vm464 = vmor %vm462, %vm463
      %v465 = vsel %vm464, %v456, %v461
      %v466 = vmul.f32 %v398, %v435
      %v467 = vmul.f32 %v399, %v445
      %v468 = vmul.f32 %v400, %v455
      %v469 = vmul.f32 %v401, %v465
      %v471 = vperm.slane %v372, 0
      %v473 = vmul.f32 %v466, %v471
      %v474 = vmul.f32 %v467, %v471
      %v475 = vmul.f32 %v468, %v471
      %v476 = vmul.f32 %v469, %v471
      %v478 = vperm.slane %v373, 0
      %v480 = vadd.f32 %v473, %v478
      %v481 = vadd.f32 %v474, %v478
      %v482 = vadd.f32 %v475, %v478
      %v483 = vadd.f32 %v476, %v478
      %v484 = vsel %vm374, %v480, 0.0
      %v485 = vsel %vm374, %v481, 0.0
      %v486 = vadd.f32 %v484, %v485
      %v487 = vrot.slane %v486, 4
      %v488 = vadd.f32 %v486, %v487
      %v489 = vrot.slane %v488, 2
      %v490 = vadd.f32 %v488, %v489
      %v491 = vrot.slane %v490, 1
      %v492 = vadd.f32 %v490, %v491
      %v493 = vrcp.pop 16.0
      %v494 = vmul.f32 16.0, %v493
      %v495 = vsub.f32 1.0, %v494
      %v496 = vmul.f32 %v493, %v495
      %v497 = vadd.f32 %v493, %v496
      %vm498 = vweird.f32 %v493
      %v499 = vsel %vm498, %v493, %v497
      %v500 = vmul.f32 %v492, %v499
      %v501 = vsel %vm374, %v482, 0.0
      %v502 = vsel %vm374, %v483, 0.0
      %v503 = vadd.f32 %v501, %v502
      %v504 = vrot.slane %v503, 4
      %v505 = vadd.f32 %v503, %v504
      %v506 = vrot.slane %v505, 2
      %v507 = vadd.f32 %v505, %v506
      %v508 = vrot.slane %v507, 1
      %v509 = vadd.f32 %v507, %v508
      %v510 = vmul.f32 %v509, %v499
      %vm511 = vcmask 1040384
      %v512 = vsel %vm511, %v500, %v510
      %v513 = vld [vmem:[%s3] sm:$0xff]
      %v514 = vld [vmem:[%s3 + $0x8] sm:$0xff]
      %v515 = vld [vmem:[%s3 + $0x10] sm:$0xff]
      %v516 = vld [vmem:[%s3 + $0x18] sm:$0xff]
      %v518 = vsel %vm374, %v512, 0
      %520 = vmatpush.msra.mxu0 0.0
      %521 = vmatpush.msra.mxu0 0.0
      %522 = vmatpush.msra.mxu0 0.0
      %523 = vmatpush.msra.mxu0 0.0
      %524 = vmatpush.msra.mxu0 0.0
      %525 = vmatpush.msra.mxu0 0.0
      %526 = vmatpush.msra.mxu0 0.0
      %527 = vmatpush.msra.mxu0 0.0
      %528 = vmatpush.msra.mxu0 0.0
      %529 = vmatpush.msra.mxu0 0.0
      %530 = vmatpush.msra.mxu0 0.0
      %531 = vmatpush.msra.mxu0 0.0
      %532 = vmatpush.msra.mxu0 %v516
      %533 = vmatpush.msra.mxu0 %v515
      %534 = vmatpush.msra.mxu0 %v514
      %535 = vmatpush.msra.mxu0 %v513
      %536 = vmatmul.f32.gmra.mxu0 %v518
      %v537 = vpop.f32.mrf.mxu0
      %v538 = vadd.f32 0.0, %v537
      %539 = vdwg.mxu0
      %v540 = vperm.slane %v538, 0
      %v541 = vperm.slane %v538, 1
      %v542 = vpack.c.bf16 %v481, %v480
      %v543 = vpack.c.bf16 %v483, %v482
      %v544 = vld [vmem:[%s4] sm:$0xf]
      %v545 = vld [vmem:[%s4 + $0x4] sm:$0xf]
      %v546 = vld [vmem:[%s4 + $0x8] sm:$0xf]
      %v547 = vld [vmem:[%s4 + $0xc] sm:$0xf]
      %v548 = vld [vmem:[%s5] sm:$0x1]
      %v550 = vperm.slane %v548, 0
      %v556 = vunpack.c.l.b16 %v544
      %v557 = vunpack.c.l.b16 %v545
      %v558 = vunpack.c.l.b16 %v546
      %v559 = vunpack.c.l.b16 %v547
      %v560 = vpack.c.b16 %v557, %v556
      %v561 = vpack.c.b16 %v559, %v558
      %v565 = vsel %vm374, %v542, 0
      %v568 = vsel %vm374, %v543, 0
      %570 = vmatpush.bf16.msra.mxu0 0
      %571 = vmatpush.bf16.msra.mxu0 0
      %572 = vmatpush.bf16.msra.mxu0 0
      %573 = vmatpush.bf16.msra.mxu0 0
      %574 = vmatpush.bf16.msra.mxu0 0
      %575 = vmatpush.bf16.msra.mxu0 0
      %576 = vmatpush.bf16.msra.mxu0 %v561
      %577 = vmatpush.bf16.msra.mxu0 %v560
      %578 = vmatmul.bf16.gmra.mxu0 %v565
      %v579 = vpop.f32.mrf.mxu0
      %v580 = vadd.f32 %v550, %v579
      %v581 = vpop.f32.mrf.mxu0
      %v582 = vadd.f32 %v550, %v581
      %583 = vmatmul.bf16.gmra.mxu0 %v568
      %v584 = vpop.f32.mrf.mxu0
      %v585 = vadd.f32 %v550, %v584
      %v586 = vpop.f32.mrf.mxu0
      %v587 = vadd.f32 %v550, %v586
      %588 = vdwg.mxu0
      %v589 = vxor.u32 %v580, 2147483648
      %v590 = vxor.u32 %v582, 2147483648
      %v591 = vxor.u32 %v585, 2147483648
      %v592 = vxor.u32 %v587, 2147483648
      %v593 = vmul.f32 %v589, 1.442695
      %v594 = vpow.pop %v593
      %v595 = vmul.f32 %v590, 1.442695
      %v596 = vpow.pop %v595
      %v597 = vmul.f32 %v591, 1.442695
      %v598 = vpow.pop %v597
      %v599 = vmul.f32 %v592, 1.442695
      %v600 = vpow.pop %v599
      %v601 = vadd.f32 %v594, 1.0
      %v602 = vadd.f32 %v596, 1.0
      %v603 = vadd.f32 %v598, 1.0
      %v604 = vadd.f32 %v600, 1.0
      %v605 = vrcp.pop %v601
      %v606 = vmul.f32 %v601, %v605
      %v607 = vsub.f32 1.0, %v606
      %v608 = vmul.f32 %v605, %v607
      %v609 = vadd.f32 %v605, %v608
      %vm610 = vweird.f32 %v601
      %vm611 = vweird.f32 %v605
      %vm612 = vmor %vm610, %vm611
      %v613 = vsel %vm612, %v605, %v609
      %v614 = vand.u32 2147483647, %v601
      %vm615 = vcmp.eq.f32.partialorder %v614, 8.507059e+37
      %v616 = vand.u32 %v601, 2147483648
      %v617 = vor.u32 1.1754944e-38, %v616
      %v618 = vsel %vm615, %v617, %v613
      %v619 = vmul.f32 1.0, %v618
      %v620 = vrcp.pop %v602
      %v621 = vmul.f32 %v602, %v620
      %v622 = vsub.f32 1.0, %v621
      %v623 = vmul.f32 %v620, %v622
      %v624 = vadd.f32 %v620, %v623
      %vm625 = vweird.f32 %v602
      %vm626 = vweird.f32 %v620
      %vm627 = vmor %vm625, %vm626
      %v628 = vsel %vm627, %v620, %v624
      %v629 = vand.u32 2147483647, %v602
      %vm630 = vcmp.eq.f32.partialorder %v629, 8.507059e+37
      %v631 = vand.u32 %v602, 2147483648
      %v632 = vor.u32 1.1754944e-38, %v631
      %v633 = vsel %vm630, %v632, %v628
      %v634 = vmul.f32 1.0, %v633
      %v635 = vrcp.pop %v603
      %v636 = vmul.f32 %v603, %v635
      %v637 = vsub.f32 1.0, %v636
      %v638 = vmul.f32 %v635, %v637
      %v639 = vadd.f32 %v635, %v638
      %vm640 = vweird.f32 %v603
      %vm641 = vweird.f32 %v635
      %vm642 = vmor %vm640, %vm641
      %v643 = vsel %vm642, %v635, %v639
      %v644 = vand.u32 2147483647, %v603
      %vm645 = vcmp.eq.f32.partialorder %v644, 8.507059e+37
      %v646 = vand.u32 %v603, 2147483648
      %v647 = vor.u32 1.1754944e-38, %v646
      %v648 = vsel %vm645, %v647, %v643
      %v649 = vmul.f32 1.0, %v648
      %v650 = vrcp.pop %v604
      %v651 = vmul.f32 %v604, %v650
      %v652 = vsub.f32 1.0, %v651
      %v653 = vmul.f32 %v650, %v652
      %v654 = vadd.f32 %v650, %v653
      %vm655 = vweird.f32 %v604
      %vm656 = vweird.f32 %v650
      %vm657 = vmor %vm655, %vm656
      %v658 = vsel %vm657, %v650, %v654
      %v659 = vand.u32 2147483647, %v604
      %vm660 = vcmp.eq.f32.partialorder %v659, 8.507059e+37
      %v661 = vand.u32 %v604, 2147483648
      %v662 = vor.u32 1.1754944e-38, %v661
      %v663 = vsel %vm660, %v662, %v658
      %v664 = vmul.f32 1.0, %v663
      %v665 = vmul.f32 %v540, %v619
      %v666 = vmul.f32 %v540, %v634
      %v667 = vmul.f32 %v541, %v649
      %v668 = vmul.f32 %v541, %v664
      %v669 = vpack.c.bf16 %v666, %v665
      %v670 = vpack.c.bf16 %v668, %v667
      %v671 = vld [vmem:[%s6] sm:$0xf]
      %v672 = vld [vmem:[%s6 + $0x4] sm:$0xf]
      %v673 = vld [vmem:[%s6 + $0x8] sm:$0xf]
      %v674 = vld [vmem:[%s6 + $0xc] sm:$0xf]
      %v675 = vld [vmem:[%s6 + $0x10] sm:$0xf]
      %v676 = vld [vmem:[%s6 + $0x14] sm:$0xf]
      %v677 = vld [vmem:[%s6 + $0x18] sm:$0xf]
      %v678 = vld [vmem:[%s6 + $0x1c] sm:$0xf]
      %v679 = vld [vmem:[%s6 + $0x20] sm:$0xf]
      %v680 = vld [vmem:[%s6 + $0x24] sm:$0xf]
      %v681 = vld [vmem:[%s6 + $0x28] sm:$0xf]
      %v682 = vld [vmem:[%s6 + $0x2c] sm:$0xf]
      %v683 = vld [vmem:[%s6 + $0x30] sm:$0xf]
      %v684 = vld [vmem:[%s6 + $0x34] sm:$0xf]
      %v685 = vld [vmem:[%s6 + $0x38] sm:$0xf]
      %v686 = vld [vmem:[%s6 + $0x3c] sm:$0xf]
      %v687 = vld [vmem:[%s7] sm:$0x1]
      %v689 = vperm.slane %v687, 0
      %v707 = vunpack.c.l.b16 %v671
      %v708 = vunpack.c.l.b16 %v672
      %v709 = vunpack.c.l.b16 %v673
      %v710 = vunpack.c.l.b16 %v674
      %v711 = vunpack.c.l.b16 %v675
      %v712 = vunpack.c.l.b16 %v676
      %v713 = vunpack.c.l.b16 %v677
      %v714 = vunpack.c.l.b16 %v678
      %v715 = vunpack.c.l.b16 %v679
      %v716 = vunpack.c.l.b16 %v680
      %v717 = vunpack.c.l.b16 %v681
      %v718 = vunpack.c.l.b16 %v682
      %v719 = vunpack.c.l.b16 %v683
      %v720 = vunpack.c.l.b16 %v684
      %v721 = vunpack.c.l.b16 %v685
      %v722 = vunpack.c.l.b16 %v686
      %v723 = vpack.c.b16 %v708, %v707
      %v724 = vpack.c.b16 %v710, %v709
      %v725 = vpack.c.b16 %v712, %v711
      %v726 = vpack.c.b16 %v714, %v713
      %v727 = vpack.c.b16 %v716, %v715
      %v728 = vpack.c.b16 %v718, %v717
      %v729 = vpack.c.b16 %v720, %v719
      %v730 = vpack.c.b16 %v722, %v721
      %739 = vmatpush.bf16.msra.mxu0 %v730
      %740 = vmatpush.bf16.msra.mxu0 %v729
      %741 = vmatpush.bf16.msra.mxu0 %v728
      %742 = vmatpush.bf16.msra.mxu0 %v727
      %743 = vmatpush.bf16.msra.mxu0 %v726
      %744 = vmatpush.bf16.msra.mxu0 %v725
      %745 = vmatpush.bf16.msra.mxu0 %v724
      %746 = vmatpush.bf16.msra.mxu0 %v723
      %747 = vmatmul.bf16.gmra.mxu0 %v669
      %v748 = vpop.f32.mrf.mxu0
      %v749 = vadd.f32 %v689, %v748
      %v750 = vpop.f32.mrf.mxu0
      %v751 = vadd.f32 %v689, %v750
      %752 = vmatmul.bf16.gmra.mxu0 %v670
      %v753 = vpop.f32.mrf.mxu0
      %v754 = vadd.f32 %v689, %v753
      %v755 = vpop.f32.mrf.mxu0
      %v756 = vadd.f32 %v689, %v755
      %757 = vdwg.mxu0
      %v758 = vadd.f32 %v480, %v749
      %v759 = vadd.f32 %v481, %v751
      %v760 = vadd.f32 %v482, %v754
      %v761 = vadd.f32 %v483, %v756
      %v762 = vld [vmem:[%s8] sm:$0x1]
      %v763 = vld [vmem:[%s9] sm:$0x1]
      %v764 = vsel %vm374, %v758, 0.0
      %765 = vadd.xlane.f32.xlu0 %v764
      %v766 = vpop.xlane.xlu0 %765
      %v767 = vsel %vm374, %v759, 0.0
      %768 = vadd.xlane.f32.xlu0 %v767
      %v769 = vpop.xlane.xlu0 %768
      %v770 = vsel %vm374, %v760, 0.0
      %771 = vadd.xlane.f32.xlu0 %v770
      %v772 = vpop.xlane.xlu0 %771
      %v773 = vsel %vm374, %v761, 0.0
      %774 = vadd.xlane.f32.xlu0 %v773
      %v775 = vpop.xlane.xlu0 %774
      %v776 = vmul.f32 %v766, %v393
      %v777 = vmul.f32 %v769, %v393
      %v778 = vmul.f32 %v772, %v393
      %v779 = vmul.f32 %v775, %v393
      %v780 = vsub.f32 %v758, %v776
      %v781 = vsub.f32 %v759, %v777
      %v782 = vsub.f32 %v760, %v778
      %v783 = vsub.f32 %v761, %v779
      %v784 = vmul.f32 %v780, %v780
      %v785 = vmul.f32 %v781, %v781
      %v786 = vmul.f32 %v782, %v782
      %v787 = vmul.f32 %v783, %v783
      %v788 = vsel %vm374, %v784, 0.0
      %789 = vadd.xlane.f32.xlu0 %v788
      %v790 = vpop.xlane.xlu0 %789
      %v791 = vsel %vm374, %v785, 0.0
      %792 = vadd.xlane.f32.xlu0 %v791
      %v793 = vpop.xlane.xlu0 %792
      %v794 = vsel %vm374, %v786, 0.0
      %795 = vadd.xlane.f32.xlu0 %v794
      %v796 = vpop.xlane.xlu0 %795
      %v797 = vsel %vm374, %v787, 0.0
      %798 = vadd.xlane.f32.xlu0 %v797
      %v799 = vpop.xlane.xlu0 %798
      %v800 = vmul.f32 %v790, %v393
      %v801 = vmul.f32 %v793, %v393
      %v802 = vmul.f32 %v796, %v393
      %v803 = vmul.f32 %v799, %v393
      %v804 = vadd.f32 %v800, 1e-05
      %v805 = vadd.f32 %v801, 1e-05
      %v806 = vadd.f32 %v802, 1e-05
      %v807 = vadd.f32 %v803, 1e-05
      %v808 = vrsqrt.pop %v804
      %v809 = vmul.f32 %v808, %v804
      %v810 = vmul.f32 %v809, %v808
      %v811 = vmul.f32 0.5, %v810
      %v812 = vsub.f32 1.5, %v811
      %v813 = vmul.f32 %v808, %v812
      %vm814 = vweird.f32 %v804
      %vm815 = vweird.f32 %v808
      %vm816 = vmor %vm814, %vm815
      %v817 = vsel %vm816, %v808, %v813
      %v818 = vrsqrt.pop %v805
      %v819 = vmul.f32 %v818, %v805
      %v820 = vmul.f32 %v819, %v818
      %v821 = vmul.f32 0.5, %v820
      %v822 = vsub.f32 1.5, %v821
      %v823 = vmul.f32 %v818, %v822
      %vm824 = vweird.f32 %v805
      %vm825 = vweird.f32 %v818
      %vm826 = vmor %vm824, %vm825
      %v827 = vsel %vm826, %v818, %v823
      %v828 = vrsqrt.pop %v806
      %v829 = vmul.f32 %v828, %v806
      %v830 = vmul.f32 %v829, %v828
      %v831 = vmul.f32 0.5, %v830
      %v832 = vsub.f32 1.5, %v831
      %v833 = vmul.f32 %v828, %v832
      %vm834 = vweird.f32 %v806
      %vm835 = vweird.f32 %v828
      %vm836 = vmor %vm834, %vm835
      %v837 = vsel %vm836, %v828, %v833
      %v838 = vrsqrt.pop %v807
      %v839 = vmul.f32 %v838, %v807
      %v840 = vmul.f32 %v839, %v838
      %v841 = vmul.f32 0.5, %v840
      %v842 = vsub.f32 1.5, %v841
      %v843 = vmul.f32 %v838, %v842
      %vm844 = vweird.f32 %v807
      %vm845 = vweird.f32 %v838
      %vm846 = vmor %vm844, %vm845
      %v847 = vsel %vm846, %v838, %v843
      %v848 = vmul.f32 %v780, %v817
      %v849 = vmul.f32 %v781, %v827
      %v850 = vmul.f32 %v782, %v837
      %v851 = vmul.f32 %v783, %v847
      %v853 = vperm.slane %v762, 0
      %v855 = vmul.f32 %v848, %v853
      %v856 = vmul.f32 %v849, %v853
      %v857 = vmul.f32 %v850, %v853
      %v858 = vmul.f32 %v851, %v853
      %v860 = vperm.slane %v763, 0
      %v862 = vadd.f32 %v855, %v860
      %v863 = vadd.f32 %v856, %v860
      %v864 = vadd.f32 %v857, %v860
      %v865 = vadd.f32 %v858, %v860
      %v866 = vpack.c.bf16 %v862, %v862
      %v867 = vpack.c.bf16 %v863, %v863
      %v868 = vpack.c.bf16 %v864, %v864
      %v869 = vpack.c.bf16 %v865, %v865
      %vm870 = vcmask 257024
      %871 = vst.msk [vmem:[%s361] sm:$0xf] %vm870, %v866
      %872 = vst.msk [vmem:[%s361 + $0x4] sm:$0xf] %vm870, %v867
      %873 = vst.msk [vmem:[%s361 + $0x8] sm:$0xf] %vm870, %v868
      %874 = vst.msk [vmem:[%s361 + $0xc] sm:$0xf] %vm870, %v869
      %s875 = smul.u32 4, %s21
      %p876 = scmp.lt.s32.totalorder %s875, 31
      %s877 = scalar_select %p876, %s875, 31
      %s878 = smul.addr %s877, 4
      %s879 = scalar_lea.vmem %s10, %s878
      // Predicated region
      $region61: #{cg_forward.9} parent=59 // pred_check
        %p880 = pneg %p254
      $region62: #{cg_forward.9} parent=59 // pred_check_branch
        %882 = sbr.rel (%p880) target = $region64
      $region63: #{cg_forward.9} parent=59 // pred_region
        %s883 = smul.u32 4, %s21
      $region64: #{cg_forward.9} parent=59 // pred_fallthru
        _
    $region60: #{cg_forward.9} parent=5 // pred_fallthru
      _
    %p884 = scmp.le.s32.totalorder 2, %s16
    // Predicated region
    $region65: #{cg_forward.9} parent=5 // pred_check
      %p885 = pneg %p884
    $region66: #{cg_forward.9} parent=5 // pred_check_branch
      %887 = sbr.rel (%p885) target = $region68
    $region67: #{cg_forward.9} parent=5 // pred_region
      %s888 = ssub.s32 %s16, 2
      // Predicated region
      $region69: #{cg_forward.9} parent=67 // pred_check
        %p889 = pneg %p260
      $region70: #{cg_forward.9} parent=67 // pred_check_branch
        %891 = sbr.rel (%p889) target = $region72
      $region71: #{cg_forward.9} parent=67 // pred_region
        %s892 = smul.u32 4, %s22
        %p893 = scmp.lt.s32.totalorder %s892, 31
        %s894 = scalar_select %p893, %s892, 31
        %s895 = smul.addr %s894, 4
        %s896 = scalar_lea.vmem %s10, %s895
      $region72: #{cg_forward.9} parent=67 // pred_fallthru
        _
    $region68: #{cg_forward.9} parent=5 // pred_fallthru
      _
  $region6: #{cg_forward.9} parent=0 // loop_footer
    %s20 = sadd.s32 1, %s16
  $region7: #{cg_forward.9} parent=0 // loop_footer_branch
    %15 = sbr.rel target = $region3
  $region8: #{cg_forward.9} parent=0 // loop_exit
    _

// kernel: cg_forward.15
$region0: #{cg_forward.15}
  #allocation0 [shape = 'u32[]', space=smem, size = 0x4, offset = 0x4, fixed_abs, tag = 'smem constant byte address 0x4 - core index']
  #allocation1 [shape = 'u32[72,128]{1,0:T(1,128)}', space=vmem, size = 0x9000, scoped, tag = 'internal scratch']
  #allocation2 [shape = 'f32[32,1]{1,0:T(8,128)}', space=vmem, size = 0x4000, scoped, tag = 'scratch operand']
  #allocation3 [shape = 'f32[32,1]{1,0:T(8,128)}', space=vmem, size = 0x4000, scoped, tag = 'scratch operand']
  #allocation4 [shape = 'f32[32,32]{1,0:T(8,128)}', space=vmem, size = 0x4000, scoped, tag = 'scratch operand']
  %s0 = inlined_call_operand.vmem [shape: f32[32,1], index: 0, kind: input, shape index: {}]
  %s1 = inlined_call_operand.vmem [shape: f32[1,32], index: 1, kind: input, shape index: {}]
  %s2 = inlined_call_operand.vmem [shape: s8[32,32], index: 2, kind: input, shape index: {}]
  %s3 = inlined_call_operand.vmem [shape: bf16[32,32], index: 3, kind: input, shape index: {}]
  %s4 = inlined_call_operand.vmem [shape: bf16[32,32], index: 4, kind: input, shape index: {}]
  %s5 = inlined_call_operand.vmem [shape: f32[1,32], index: 5, kind: input, shape index: {}]
  %s6 = inlined_call_operand.vmem [shape: f32[1,32], index: 6, kind: input, shape index: {}]
  %s7 = inlined_call_operand.vmem [shape: f32[1,32], index: 7, kind: input, shape index: {}]
  %s8 = inlined_call_operand.vmem [shape: bf16[32,32], index: 8, kind: output, shape index: {}]
  %s9 = sld [smem:[#allocation0]]
  $region50: #{cg_forward.15} parent=0
    _
  %s11 = ssub.s32 1, %s9
  %s12 = scalar_select 0, %s11, %s9
  // Predicated region
  $region2: #{cg_forward.15} parent=0 // pred_check
    _
  $region3: #{cg_forward.15} parent=0 // pred_check_branch
    %14 = sbr.rel (0) target = $region5
  $region4: #{cg_forward.15} parent=0 // pred_region
    _
  $region5: #{cg_forward.15} parent=0 // pred_fallthru
    _
  // Predicated region
  $region6: #{cg_forward.15} parent=0 // pred_check
    _
  $region7: #{cg_forward.15} parent=0 // pred_check_branch
    %16 = sbr.rel (0) target = $region9
  $region8: #{cg_forward.15} parent=0 // pred_region
    _
  $region9: #{cg_forward.15} parent=0 // pred_fallthru
    _
  // Predicated region
  $region10: #{cg_forward.15} parent=0 // pred_check
    _
  $region11: #{cg_forward.15} parent=0 // pred_check_branch
    %18 = sbr.rel (0) target = $region13
  $region12: #{cg_forward.15} parent=0 // pred_region
    _
  $region13: #{cg_forward.15} parent=0 // pred_fallthru
    _
  // Predicated region
  $region14: #{cg_forward.15} parent=0 // pred_check
    _
  $region15: #{cg_forward.15} parent=0 // pred_check_branch
    %20 = sbr.rel (0) target = $region17
  $region16: #{cg_forward.15} parent=0 // pred_region
    _
  $region17: #{cg_forward.15} parent=0 // pred_fallthru
    _
  // Predicated region
  $region18: #{cg_forward.15} parent=0 // pred_check
    _
  $region19: #{cg_forward.15} parent=0 // pred_check_branch
    %22 = sbr.rel (0) target = $region21
  $region20: #{cg_forward.15} parent=0 // pred_region
    _
  $region21: #{cg_forward.15} parent=0 // pred_fallthru
    _
  // Predicated region
  $region22: #{cg_forward.15} parent=0 // pred_check
    _
  $region23: #{cg_forward.15} parent=0 // pred_check_branch
    %24 = sbr.rel (0) target = $region25
  $region24: #{cg_forward.15} parent=0 // pred_region
    _
  $region25: #{cg_forward.15} parent=0 // pred_fallthru
    _
  // Predicated region
  $region26: #{cg_forward.15} parent=0 // pred_check
    _
  $region27: #{cg_forward.15} parent=0 // pred_check_branch
    %26 = sbr.rel (0) target = $region29
  $region28: #{cg_forward.15} parent=0 // pred_region
    _
  $region29: #{cg_forward.15} parent=0 // pred_fallthru
    _
  // Predicated region
  $region30: #{cg_forward.15} parent=0 // pred_check
    _
  $region31: #{cg_forward.15} parent=0 // pred_check_branch
    %28 = sbr.rel (0) target = $region33
  $region32: #{cg_forward.15} parent=0 // pred_region
    _
  $region33: #{cg_forward.15} parent=0 // pred_fallthru
    _
  %p32 = scmp.eq.s32.totalorder 0, 0
  // Predicated region
  $region34: #{cg_forward.15} parent=0 // pred_check
    %p33 = pneg %p32
  $region35: #{cg_forward.15} parent=0 // pred_check_branch
    %35 = sbr.rel (%p33) target = $region37
  $region36: #{cg_forward.15} parent=0 // pred_region
    %vm36 = vcmask 7168
    %37 = vst.msk [vmem:[#allocation2] sm:$0xff] %vm36, -1e+30
    %38 = vst.msk [vmem:[#allocation2 + $0x8] sm:$0xff] %vm36, -1e+30
    %39 = vst.msk [vmem:[#allocation2 + $0x10] sm:$0xff] %vm36, -1e+30
    %40 = vst.msk [vmem:[#allocation2 + $0x18] sm:$0xff] %vm36, -1e+30
    %41 = vst.msk [vmem:[#allocation3] sm:$0xff] %vm36, 0.0
    %42 = vst.msk [vmem:[#allocation3 + $0x8] sm:$0xff] %vm36, 0.0
    %43 = vst.msk [vmem:[#allocation3 + $0x10] sm:$0xff] %vm36, 0.0
    %44 = vst.msk [vmem:[#allocation3 + $0x18] sm:$0xff] %vm36, 0.0
    %vm45 = vcmask 261120
    %46 = vst.msk [vmem:[#allocation4] sm:$0xff] %vm45, 0.0
    %47 = vst.msk [vmem:[#allocation4 + $0x8] sm:$0xff] %vm45, 0.0
    %48 = vst.msk [vmem:[#allocation4 + $0x10] sm:$0xff] %vm45, 0.0
    %49 = vst.msk [vmem:[#allocation4 + $0x18] sm:$0xff] %vm45, 0.0
  $region37: #{cg_forward.15} parent=0 // pred_fallthru
    _
  %v50 = vld [vmem:[%s0] sm:$0xff]
  %v51 = vld [vmem:[%s0 + $0x8] sm:$0xff]
  %v52 = vld [vmem:[%s0 + $0x10] sm:$0xff]
  %v53 = vld [vmem:[%s0 + $0x18] sm:$0xff]
  %v54 = vld [vmem:[%s1] sm:$0x1]
  %56 = vset.pattern.permute.xlu0 0
  %57 = vperm.xlu0 %56, %v50
  %v58 = vpop.permute.xlu0 %57
  %61 = vset.pattern.permute.xlu0 0
  %62 = vperm.xlu0 %61, %v51
  %v63 = vpop.permute.xlu0 %62
  %66 = vset.pattern.permute.xlu0 0
  %67 = vperm.xlu0 %66, %v52
  %v68 = vpop.permute.xlu0 %67
  %71 = vset.pattern.permute.xlu0 0
  %72 = vperm.xlu0 %71, %v53
  %v73 = vpop.permute.xlu0 %72
  %v76 = vperm.slane %v54, 0
  %v78 = vadd.f32 %v58, %v76
  %v79 = vadd.f32 %v63, %v76
  %v80 = vadd.f32 %v68, %v76
  %v81 = vadd.f32 %v73, %v76
  %vm82 = vcmp.gt.f32.partialorder %v78, 0.0
  %vm83 = vcmp.gt.f32.partialorder %v79, 0.0
  %vm84 = vcmp.gt.f32.partialorder %v80, 0.0
  %vm85 = vcmp.gt.f32.partialorder %v81, 0.0
  %v86 = vmul.f32 %v78, 0.2
  %v87 = vmul.f32 %v79, 0.2
  %v88 = vmul.f32 %v80, 0.2
  %v89 = vmul.f32 %v81, 0.2
  %v90 = vsel %vm82, %v78, %v86
  %v91 = vsel %vm83, %v79, %v87
  %v92 = vsel %vm84, %v80, %v88
  %v93 = vsel %vm85, %v81, %v89
  %v94 = vld [vmem:[%s2] sm:$0xff]
  %vm95 = vnez %v94
  %v96 = vsel %vm95, 16843009, 0
  %v97 = vunpack.c.0.s8 %v96
  %v98 = vunpack.c.1.s8 %v96
  %v99 = vunpack.c.2.s8 %v96
  %v100 = vunpack.c.3.s8 %v96
  %v101 = vpack.c.b16 %v97, %v97
  %v102 = vpack.c.b8 %v101, %v101
  %v103 = vpack.c.b16 %v98, %v98
  %v104 = vpack.c.b8 %v103, %v103
  %v105 = vpack.c.b16 %v99, %v99
  %v106 = vpack.c.b8 %v105, %v105
  %v107 = vpack.c.b16 %v100, %v100
  %v108 = vpack.c.b8 %v107, %v107
  %vm109 = vnez %v102
  %vm110 = vnez %v104
  %vm111 = vnez %v106
  %vm112 = vnez %v108
  %v113 = vsel %vm109, 16843009, 0
  %v114 = vsel %vm110, 16843009, 0
  %v115 = vsel %vm111, 16843009, 0
  %v116 = vsel %vm112, 16843009, 0
  %v117 = vunpack.c.0.s8 %v113
  %v118 = vunpack.c.0.s8 %v114
  %v119 = vunpack.c.0.s8 %v115
  %v120 = vunpack.c.0.s8 %v116
  %vm121 = vcmp.ne.s32.totalorder %v117, 0
  %vm122 = vcmp.ne.s32.totalorder %v118, 0
  %vm123 = vcmp.ne.s32.totalorder %v119, 0
  %vm124 = vcmp.ne.s32.totalorder %v120, 0
  %v125 = vsel %vm121, %v90, -1e+30
  %v126 = vsel %vm122, %v91, -1e+30
  %v127 = vsel %vm123, %v92, -1e+30
  %v128 = vsel %vm124, %v93, -1e+30
  %v129 = vld [vmem:[#allocation2] sm:$0xff]
  %v130 = vld [vmem:[#allocation2 + $0x8] sm:$0xff]
  %v131 = vld [vmem:[#allocation2 + $0x10] sm:$0xff]
  %v132 = vld [vmem:[#allocation2 + $0x18] sm:$0xff]
  %vm133 = vcmask 261120
  %v134 = vsel %vm133, %v125, -inf
  %135 = vmax.xlane.f32.xlu0 %v134
  %v136 = vpop.xlane.xlu0 %135
  %v137 = vsel %vm133, %v126, -inf
  %138 = vmax.xlane.f32.xlu0 %v137
  %v139 = vpop.xlane.xlu0 %138
  %v140 = vsel %vm133, %v127, -inf
  %141 = vmax.xlane.f32.xlu0 %v140
  %v142 = vpop.xlane.xlu0 %141
  %v143 = vsel %vm133, %v128, -inf
  %144 = vmax.xlane.f32.xlu0 %v143
  %v145 = vpop.xlane.xlu0 %144
  %v146 = vmax.f32 %v129, %v136
  %v147 = vmax.f32 %v130, %v139
  %v148 = vmax.f32 %v131, %v142
  %v149 = vmax.f32 %v132, %v145
  %v150 = vsub.f32 %v129, %v146
  %v151 = vsub.f32 %v130, %v147
  %v152 = vsub.f32 %v131, %v148
  %v153 = vsub.f32 %v132, %v149
  %v154 = vmul.f32 %v150, 1.442695
  %v155 = vpow.pop %v154
  %v156 = vmul.f32 %v151, 1.442695
  %v157 = vpow.pop %v156
  %v158 = vmul.f32 %v152, 1.442695
  %v159 = vpow.pop %v158
  %v160 = vmul.f32 %v153, 1.442695
  %v161 = vpow.pop %v160
  %163 = vset.pattern.permute.xlu0 0
  %164 = vperm.xlu0 %163, %v146
  %v165 = vpop.permute.xlu0 %164
  %168 = vset.pattern.permute.xlu0 0
  %169 = vperm.xlu0 %168, %v147
  %v170 = vpop.permute.xlu0 %169
  %173 = vset.pattern.permute.xlu0 0
  %174 = vperm.xlu0 %173, %v148
  %v175 = vpop.permute.xlu0 %174
  %178 = vset.pattern.permute.xlu0 0
  %179 = vperm.xlu0 %178, %v149
  %v180 = vpop.permute.xlu0 %179
  %v182 = vsub.f32 %v125, %v165
  %v183 = vsub.f32 %v126, %v170
  %v184 = vsub.f32 %v127, %v175
  %v185 = vsub.f32 %v128, %v180
  %v186 = vmul.f32 %v182, 1.442695
  %v187 = vpow.pop %v186
  %v188 = vmul.f32 %v183, 1.442695
  %v189 = vpow.pop %v188
  %v190 = vmul.f32 %v184, 1.442695
  %v191 = vpow.pop %v190
  %v192 = vmul.f32 %v185, 1.442695
  %v193 = vpow.pop %v192
  %v194 = vsel %vm121, 1, 0
  %v195 = vsel %vm122, 1, 0
  %v196 = vsel %vm123, 1, 0
  %v197 = vsel %vm124, 1, 0
  %v198 = vcvt.s32.f32 %v194
  %v199 = vcvt.s32.f32 %v195
  %v200 = vcvt.s32.f32 %v196
  %v201 = vcvt.s32.f32 %v197
  %v202 = vmul.f32 %v187, %v198
  %v203 = vmul.f32 %v189, %v199
  %v204 = vmul.f32 %v191, %v200
  %v205 = vmul.f32 %v193, %v201
  %v206 = vld [vmem:[#allocation3] sm:$0xff]
  %v207 = vld [vmem:[#allocation3 + $0x8] sm:$0xff]
  %v208 = vld [vmem:[#allocation3 + $0x10] sm:$0xff]
  %v209 = vld [vmem:[#allocation3 + $0x18] sm:$0xff]
  %v210 = vmul.f32 %v155, %v206
  %v211 = vmul.f32 %v157, %v207
  %v212 = vmul.f32 %v159, %v208
  %v213 = vmul.f32 %v161, %v209
  %v214 = vsel %vm133, %v202, 0.0
  %215 = vadd.xlane.f32.xlu0 %v214
  %v216 = vpop.xlane.xlu0 %215
  %v217 = vsel %vm133, %v203, 0.0
  %218 = vadd.xlane.f32.xlu0 %v217
  %v219 = vpop.xlane.xlu0 %218
  %v220 = vsel %vm133, %v204, 0.0
  %221 = vadd.xlane.f32.xlu0 %v220
  %v222 = vpop.xlane.xlu0 %221
  %v223 = vsel %vm133, %v205, 0.0
  %224 = vadd.xlane.f32.xlu0 %v223
  %v225 = vpop.xlane.xlu0 %224
  %v226 = vadd.f32 %v210, %v216
  %v227 = vadd.f32 %v211, %v219
  %v228 = vadd.f32 %v212, %v222
  %v229 = vadd.f32 %v213, %v225
  %vm230 = vcmask 7168
  %231 = vst.msk [vmem:[#allocation3] sm:$0xff] %vm230, %v226
  %232 = vst.msk [vmem:[#allocation3 + $0x8] sm:$0xff] %vm230, %v227
  %233 = vst.msk [vmem:[#allocation3 + $0x10] sm:$0xff] %vm230, %v228
  %234 = vst.msk [vmem:[#allocation3 + $0x18] sm:$0xff] %vm230, %v229
  %v235 = vld [vmem:[#allocation4] sm:$0xff]
  %v236 = vld [vmem:[#allocation4 + $0x8] sm:$0xff]
  %v237 = vld [vmem:[#allocation4 + $0x10] sm:$0xff]
  %v238 = vld [vmem:[#allocation4 + $0x18] sm:$0xff]
  %240 = vset.pattern.permute.xlu0 0
  %241 = vperm.xlu0 %240, %v155
  %v242 = vpop.permute.xlu0 %241
  %245 = vset.pattern.permute.xlu0 0
  %246 = vperm.xlu0 %245, %v157
  %v247 = vpop.permute.xlu0 %246
  %250 = vset.pattern.permute.xlu0 0
  %251 = vperm.xlu0 %250, %v159
  %v252 = vpop.permute.xlu0 %251
  %255 = vset.pattern.permute.xlu0 0
  %256 = vperm.xlu0 %255, %v161
  %v257 = vpop.permute.xlu0 %256
  %v259 = vmul.f32 %v242, %v235
  %v260 = vmul.f32 %v247, %v236
  %v261 = vmul.f32 %v252, %v237
  %v262 = vmul.f32 %v257, %v238
  %v263 = vpack.c.bf16 %v203, %v202
  %v264 = vpack.c.bf16 %v205, %v204
  %v265 = vld [vmem:[%s3] sm:$0xf]
  %v266 = vld [vmem:[%s3 + $0x4] sm:$0xf]
  %v267 = vld [vmem:[%s3 + $0x8] sm:$0xf]
  %v268 = vld [vmem:[%s3 + $0xc] sm:$0xf]
  %v273 = vunpack.c.l.b16 %v265
  %v274 = vunpack.c.l.b16 %v266
  %v275 = vunpack.c.l.b16 %v267
  %v276 = vunpack.c.l.b16 %v268
  %v277 = vpack.c.b16 %v274, %v273
  %v278 = vpack.c.b16 %v276, %v275
  %v282 = vsel %vm133, %v263, 0
  %v285 = vsel %vm133, %v264, 0
  %287 = vmatpush.bf16.msra.mxu0 0
  %288 = vmatpush.bf16.msra.mxu0 0
  %289 = vmatpush.bf16.msra.mxu0 0
  %290 = vmatpush.bf16.msra.mxu0 0
  %291 = vmatpush.bf16.msra.mxu0 0
  %292 = vmatpush.bf16.msra.mxu0 0
  %293 = vmatpush.bf16.msra.mxu0 %v278
  %294 = vmatpush.bf16.msra.mxu0 %v277
  %295 = vmatmul.bf16.gmra.mxu0 %v282
  %v296 = vpop.f32.mrf.mxu0
  %v297 = vadd.f32 0.0, %v296
  %v298 = vpop.f32.mrf.mxu0
  %v299 = vadd.f32 0.0, %v298
  %300 = vmatmul.bf16.gmra.mxu0 %v285
  %v301 = vpop.f32.mrf.mxu0
  %v302 = vadd.f32 0.0, %v301
  %v303 = vpop.f32.mrf.mxu0
  %v304 = vadd.f32 0.0, %v303
  %305 = vdwg.mxu0
  %v306 = vadd.f32 %v259, %v297
  %v307 = vadd.f32 %v260, %v299
  %v308 = vadd.f32 %v261, %v302
  %v309 = vadd.f32 %v262, %v304
  %310 = vst.msk [vmem:[#allocation4] sm:$0xff] %vm133, %v306
  %311 = vst.msk [vmem:[#allocation4 + $0x8] sm:$0xff] %vm133, %v307
  %312 = vst.msk [vmem:[#allocation4 + $0x10] sm:$0xff] %vm133, %v308
  %313 = vst.msk [vmem:[#allocation4 + $0x18] sm:$0xff] %vm133, %v309
  %314 = vst.msk [vmem:[#allocation2] sm:$0xff] %vm230, %v146
  %315 = vst.msk [vmem:[#allocation2 + $0x8] sm:$0xff] %vm230, %v147
  %316 = vst.msk [vmem:[#allocation2 + $0x10] sm:$0xff] %vm230, %v148
  %317 = vst.msk [vmem:[#allocation2 + $0x18] sm:$0xff] %vm230, %v149
  // Predicated region
  $region38: #{cg_forward.15} parent=0 // pred_check
    %p318 = pneg %p32
  $region39: #{cg_forward.15} parent=0 // pred_check_branch
    %320 = sbr.rel (%p318) target = $region41
  $region40: #{cg_forward.15} parent=0 // pred_region
    %v321 = vld [vmem:[#allocation4] sm:$0xff]
    %v322 = vld [vmem:[#allocation4 + $0x8] sm:$0xff]
    %v323 = vld [vmem:[#allocation4 + $0x10] sm:$0xff]
    %v324 = vld [vmem:[#allocation4 + $0x18] sm:$0xff]
    %v325 = vld [vmem:[#allocation3] sm:$0xff]
    %v326 = vld [vmem:[#allocation3 + $0x8] sm:$0xff]
    %v327 = vld [vmem:[#allocation3 + $0x10] sm:$0xff]
    %v328 = vld [vmem:[#allocation3 + $0x18] sm:$0xff]
    %v329 = vrcp.pop %v325
    %v330 = vrcp.pop %v326
    %v331 = vrcp.pop %v327
    %v332 = vrcp.pop %v328
    %334 = vset.pattern.permute.xlu0 0
    %335 = vperm.xlu0 %334, %v329
    %v336 = vpop.permute.xlu0 %335
    %339 = vset.pattern.permute.xlu0 0
    %340 = vperm.xlu0 %339, %v330
    %v341 = vpop.permute.xlu0 %340
    %344 = vset.pattern.permute.xlu0 0
    %345 = vperm.xlu0 %344, %v331
    %v346 = vpop.permute.xlu0 %345
    %349 = vset.pattern.permute.xlu0 0
    %350 = vperm.xlu0 %349, %v332
    %v351 = vpop.permute.xlu0 %350
    %v353 = vmul.f32 %v321, %v336
    %v354 = vmul.f32 %v322, %v341
    %v355 = vmul.f32 %v323, %v346
    %v356 = vmul.f32 %v324, %v351
    %v357 = vld [vmem:[%s5] sm:$0x1]
    %v359 = vperm.slane %v357, 0
    %v361 = vadd.f32 %v353, %v359
    %v362 = vadd.f32 %v354, %v359
    %v363 = vadd.f32 %v355, %v359
    %v364 = vadd.f32 %v356, %v359
    %v365 = vld [vmem:[%s4] sm:$0xf]
    %v366 = vld [vmem:[%s4 + $0x4] sm:$0xf]
    %v367 = vld [vmem:[%s4 + $0x8] sm:$0xf]
    %v368 = vld [vmem:[%s4 + $0xc] sm:$0xf]
    %v369 = vunpack.c.l.bf16 %v365
    %v370 = vunpack.c.l.bf16 %v366
    %v371 = vunpack.c.l.bf16 %v367
    %v372 = vunpack.c.l.bf16 %v368
    %v373 = vadd.f32 %v361, %v369
    %v374 = vadd.f32 %v362, %v370
    %v375 = vadd.f32 %v363, %v371
    %v376 = vadd.f32 %v364, %v372
    %v377 = vld [vmem:[%s6] sm:$0x1]
    %v378 = vld [vmem:[%s7] sm:$0x1]
    %v379 = vsel %vm133, %v373, 0.0
    %380 = vadd.xlane.f32.xlu0 %v379
    %v381 = vpop.xlane.xlu0 %380
    %v382 = vsel %vm133, %v374, 0.0
    %383 = vadd.xlane.f32.xlu0 %v382
    %v384 = vpop.xlane.xlu0 %383
    %v385 = vsel %vm133, %v375, 0.0
    %386 = vadd.xlane.f32.xlu0 %v385
    %v387 = vpop.xlane.xlu0 %386
    %v388 = vsel %vm133, %v376, 0.0
    %389 = vadd.xlane.f32.xlu0 %v388
    %v390 = vpop.xlane.xlu0 %389
    %v391 = vrcp.pop 32.0
    %v392 = vmul.f32 32.0, %v391
    %v393 = vsub.f32 1.0, %v392
    %v394 = vmul.f32 %v391, %v393
    %v395 = vadd.f32 %v391, %v394
    %vm396 = vweird.f32 %v391
    %v397 = vsel %vm396, %v391, %v395
    %v398 = vmul.f32 %v381, %v397
    %v399 = vmul.f32 %v384, %v397
    %v400 = vmul.f32 %v387, %v397
    %v401 = vmul.f32 %v390, %v397
    %v402 = vsub.f32 %v373, %v398
    %v403 = vsub.f32 %v374, %v399
    %v404 = vsub.f32 %v375, %v400
    %v405 = vsub.f32 %v376, %v401
    %v406 = vmul.f32 %v402, %v402
    %v407 = vmul.f32 %v403, %v403
    %v408 = vmul.f32 %v404, %v404
    %v409 = vmul.f32 %v405, %v405
    %v410 = vsel %vm133, %v406, 0.0
    %411 = vadd.xlane.f32.xlu0 %v410
    %v412 = vpop.xlane.xlu0 %411
    %v413 = vsel %vm133, %v407, 0.0
    %414 = vadd.xlane.f32.xlu0 %v413
    %v415 = vpop.xlane.xlu0 %414
    %v416 = vsel %vm133, %v408, 0.0
    %417 = vadd.xlane.f32.xlu0 %v416
    %v418 = vpop.xlane.xlu0 %417
    %v419 = vsel %vm133, %v409, 0.0
    %420 = vadd.xlane.f32.xlu0 %v419
    %v421 = vpop.xlane.xlu0 %420
    %v422 = vmul.f32 %v412, %v397
    %v423 = vmul.f32 %v415, %v397
    %v424 = vmul.f32 %v418, %v397
    %v425 = vmul.f32 %v421, %v397
    %v426 = vadd.f32 %v422, 1e-05
    %v427 = vadd.f32 %v423, 1e-05
    %v428 = vadd.f32 %v424, 1e-05
    %v429 = vadd.f32 %v425, 1e-05
    %v430 = vrsqrt.pop %v426
    %v431 = vmul.f32 %v430, %v426
    %v432 = vmul.f32 %v431, %v430
    %v433 = vmul.f32 0.5, %v432
    %v434 = vsub.f32 1.5, %v433
    %v435 = vmul.f32 %v430, %v434
    %vm436 = vweird.f32 %v426
    %vm437 = vweird.f32 %v430
    %vm438 = vmor %vm436, %vm437
    %v439 = vsel %vm438, %v430, %v435
    %v440 = vrsqrt.pop %v427
    %v441 = vmul.f32 %v440, %v427
    %v442 = vmul.f32 %v441, %v440
    %v443 = vmul.f32 0.5, %v442
    %v444 = vsub.f32 1.5, %v443
    %v445 = vmul.f32 %v440, %v444
    %vm446 = vweird.f32 %v427
    %vm447 = vweird.f32 %v440
    %vm448 = vmor %vm446, %vm447
    %v449 = vsel %vm448, %v440, %v445
    %v450 = vrsqrt.pop %v428
    %v451 = vmul.f32 %v450, %v428
    %v452 = vmul.f32 %v451, %v450
    %v453 = vmul.f32 0.5, %v452
    %v454 = vsub.f32 1.5, %v453
    %v455 = vmul.f32 %v450, %v454
    %vm456 = vweird.f32 %v428
    %vm457 = vweird.f32 %v450
    %vm458 = vmor %vm456, %vm457
    %v459 = vsel %vm458, %v450, %v455
    %v460 = vrsqrt.pop %v429
    %v461 = vmul.f32 %v460, %v429
    %v462 = vmul.f32 %v461, %v460
    %v463 = vmul.f32 0.5, %v462
    %v464 = vsub.f32 1.5, %v463
    %v465 = vmul.f32 %v460, %v464
    %vm466 = vweird.f32 %v429
    %vm467 = vweird.f32 %v460
    %vm468 = vmor %vm466, %vm467
    %v469 = vsel %vm468, %v460, %v465
    %v470 = vmul.f32 %v402, %v439
    %v471 = vmul.f32 %v403, %v449
    %v472 = vmul.f32 %v404, %v459
    %v473 = vmul.f32 %v405, %v469
    %v475 = vperm.slane %v377, 0
    %v477 = vmul.f32 %v470, %v475
    %v478 = vmul.f32 %v471, %v475
    %v479 = vmul.f32 %v472, %v475
    %v480 = vmul.f32 %v473, %v475
    %v482 = vperm.slane %v378, 0
    %v484 = vadd.f32 %v477, %v482
    %v485 = vadd.f32 %v478, %v482
    %v486 = vadd.f32 %v479, %v482
    %v487 = vadd.f32 %v480, %v482
    %v488 = vpack.c.bf16 %v484, %v484
    %v489 = vpack.c.bf16 %v485, %v485
    %v490 = vpack.c.bf16 %v486, %v486
    %v491 = vpack.c.bf16 %v487, %v487
    %vm492 = vcmask 257024
    %493 = vst.msk [vmem:[%s8] sm:$0xf] %vm492, %v488
    %494 = vst.msk [vmem:[%s8 + $0x4] sm:$0xf] %vm492, %v489
    %495 = vst.msk [vmem:[%s8 + $0x8] sm:$0xf] %vm492, %v490
    %496 = vst.msk [vmem:[%s8 + $0xc] sm:$0xf] %vm492, %v491
  $region41: #{cg_forward.15} parent=0 // pred_fallthru
    _
  // Predicated region
  $region42: #{cg_forward.15} parent=0 // pred_check
    _
  $region43: #{cg_forward.15} parent=0 // pred_check_branch
    %498 = sbr.rel (0) target = $region45
  $region44: #{cg_forward.15} parent=0 // pred_region
    _
  $region45: #{cg_forward.15} parent=0 // pred_fallthru
    _
  // Predicated region
  $region46: #{cg_forward.15} parent=0 // pred_check
    _
  $region47: #{cg_forward.15} parent=0 // pred_check_branch
    %500 = sbr.rel (0) target = $region49
  $region48: #{cg_forward.15} parent=0 // pred_region
    _
  $region49: #{cg_forward.15} parent=0 // pred_fallthru
    _

</llo_original>
